<compile_context>
chip_gen: v7x
topology: tpu7x:2x2x1
jax: 0.10.0
libtpu: 0.0.40
codegen_flags: <defaults>
</compile_context>

<pallas_src>
import numpy as np
import jax
import jax.numpy as jnp
from jax.experimental import pallas as pl
from jax.experimental.pallas import tpu as pltpu

_MiB = 1024 * 1024


def mlpc_kernel(s1_ref, s2_ref, qk_ref, base_ref, mask_ref, wproj_ref, wscal_ref,
                out_ref):
    Bt, C, L, D = s1_ref.shape
    N = Bt * C

    s1 = s1_ref[...]          # (Bt, C, L, D) bf16  contexts1 word embeddings
    s2 = s2_ref[...]          # (Bt, C, L, D) bf16  contexts2 word embeddings
    qk = qk_ref[...]          # (Bt, C, 2, D) bf16  rows: [q_sense, q_mu]
    wproj = wproj_ref[...]    # (D, 3)        bf16  cols: [wf1, wf2, wc] (resident)

    # ---- attention scores: bf16 MXU inputs, f32 accumulation ----
    #   a[n, 0, l] = q . s_l    a[n, 1, l] = qm . s_l   (no softmax, as in PyTorch)
    a1 = jnp.einsum('nqd,nld->nql', qk.reshape(N, 2, D), s1.reshape(N, L, D),
                    preferred_element_type=jnp.float32).reshape(Bt, C, 2, L)
    a2 = jnp.einsum('nqd,nld->nql', qk.reshape(N, 2, D), s2.reshape(N, L, D),
                    preferred_element_type=jnp.float32).reshape(Bt, C, 2, L)
    att1, attm1 = a1[:, :, 0, :], a1[:, :, 1, :]       # (Bt, C, L)
    att2, attm2 = a2[:, :, 0, :], a2[:, :, 1, :]

    # ---- shared-RHS classifier-weight projections: one resident (D, 3) RHS,
    #      large-M non-batched matmuls (single weight push per tensor) ----
    p1 = jnp.dot(s1.reshape(N * L, D), wproj,
                 preferred_element_type=jnp.float32).reshape(Bt, C, L, 3)[:, :, :, 0]
    p2 = jnp.dot(s2.reshape(N * L, D), wproj,
                 preferred_element_type=jnp.float32).reshape(Bt, C, L, 3)[:, :, :, 1]
    cand_t = jnp.dot(qk.reshape(2 * N, D), wproj,
                     preferred_element_type=jnp.float32).reshape(Bt, C, 2, 3)[:, :, 0, 2]

    # ---- pooled-feature algebra (pooled (B, C, D) features never built) ----
    sim1 = jnp.sum(att1 * att1, axis=-1)     # q  . f1_sense   (Bt, C)
    sim2 = jnp.sum(attm1 * attm1, axis=-1)   # qm . f1_mu
    sim4 = jnp.sum(att2 * att2, axis=-1)     # q  . f2_sense
    sim5 = jnp.sum(attm2 * attm2, axis=-1)   # qm . f2_mu
    g1 = jnp.sum(att1 * p1, axis=-1)         # wf1 . f1_sense_emb
    g2 = jnp.sum(att2 * p2, axis=-1)         # wf2 . f2_sense_emb

    logits = (base_ref[...] + cand_t + g1 + g2
              + sim1 * wscal_ref[0] + sim2 * wscal_ref[1]
              + sim4 * wscal_ref[2] + sim5 * wscal_ref[3]
              + wscal_ref[4])                 # (Bt, C)

    # masked_softmax: softmax over the candidate axis, THEN multiply the mask.
    m = jnp.max(logits, axis=1, keepdims=True)
    e = jnp.exp(logits - m)
    inv = pl.reciprocal(jnp.sum(e, axis=1, keepdims=True), approx=True)
    out_ref[...] = e * inv * mask_ref[...]


def _vmem_capacity_bytes():
    """Per-core VMEM capacity; conservative v7x fallback if the query fails."""
    try:
        cap = getattr(pltpu.get_tpu_info(), "vmem_capacity_bytes", None)
        if cap:
            return int(cap)
    except Exception:
        pass
    return 64 * _MiB


def _choose_batch_block(batch, per_row_bytes, *, max_block_rows,
                        vmem_budget_bytes, min_grid_steps=4):
    """Largest batch tile Bt with batch % Bt == 0, (Bt % 8 == 0 or Bt == batch),
    double-buffered inputs under the VMEM budget, preferring >=min_grid_steps
    grid steps so the pipeline (and v7x megacore split) has work to overlap."""
    valid = sorted({batch} | {d for d in range(8, batch + 1, 8) if batch % d == 0})
    fitting = [bt for bt in valid
               if bt <= max_block_rows and 2 * bt * per_row_bytes <= vmem_budget_bytes]
    if not fitting:
        return min(valid)     # caller grows vmem_limit along with the forced block
    pipelined = [bt for bt in fitting if batch // bt >= min_grid_steps]
    return max(pipelined) if pipelined else max(fitting)


def mlpc_forward(contexts1, contexts2, base_feature, candidates, length, params,
                 *, max_block_rows=256):
    """Embedding gathers + classifier-weight split in JAX, then one gridded
    Pallas call that does attention pooling, the linear classifier and the
    masked softmax."""
    word_emb = params["word_emb"]
    sense_emb = params["sense_emb"]
    mu_emb = params["mu_emb"]
    W = params["W"]              # (feature_dim, 1)
    b = params["b"]              # (1,)

    B, C, L = contexts1.shape
    D = word_emb.shape[1]
    Fb = base_feature.shape[-1]

    # Embedding lookups (gathers) stay in plain JAX, cast to bf16 so the kernel's
    # dominant HBM traffic is half-width.
    # TODO(synk): fuse these gathers into the kernel (word_emb in pl.ANY +
    # scalar-prefetched indices + per-block DMA gather) to avoid materializing
    # the (B, C, L, D) context tensors in HBM (~2x the necessary HBM traffic).
    word_bf = word_emb.astype(jnp.bfloat16)
    s1 = jnp.take(word_bf, contexts1, axis=0)                       # (B, C, L, D) bf16
    s2 = jnp.take(word_bf, contexts2, axis=0)                       # (B, C, L, D) bf16
    q = jnp.take(sense_emb.astype(jnp.bfloat16), candidates, axis=0)  # (B, C, D)
    qm = jnp.take(mu_emb.astype(jnp.bfloat16), candidates, axis=0)    # (B, C, D)
    qk = jnp.stack([q, qm], axis=2)                                 # (B, C, 2, D) bf16

    # Split W to match torch.cat feature order:
    #   [base | cand_emb | f1_sense | sim1 | sim2 | sim4 | sim5 | f2_sense]
    w = W[:, 0]
    wb = w[0:Fb]                                        # (Fb,)  base-feature weights
    wc = w[Fb:Fb + D]                                   # (D,)   cand_emb weights
    wf1 = w[Fb + D:Fb + 2 * D]                          # (D,)   f1_sense weights
    wsim = w[Fb + 2 * D:Fb + 2 * D + 4]                 # (4,)   sim1/sim2/sim4/sim5
    wf2 = w[Fb + 2 * D + 4:Fb + 3 * D + 4]              # (D,)   f2_sense weights

    wproj = jnp.stack([wf1, wf2, wc], axis=1).astype(jnp.bfloat16)      # (D, 3) resident
    wscal = jnp.concatenate([wsim, b]).astype(jnp.float32)              # (5,) SMEM

    # Small per-(b, c) terms precomputed in f32: base-feature dot and mask.
    base_t = jnp.einsum('bcf,f->bc', base_feature.astype(jnp.float32),
                        wb.astype(jnp.float32))                         # (B, C) f32
    mask = (jnp.arange(C, dtype=jnp.int32)[None, :]
            < length.astype(jnp.int32)[:, None]).astype(jnp.float32)    # (B, C) f32

    # ---- generation-aware tiling ----
    cap = _vmem_capacity_bytes()
    if cap >= 96 * _MiB:                       # v5e / v6e: 128 MiB VMEM per core
        budget, limit = 56 * _MiB, 100 * _MiB
    else:                                      # v7x: 64 MiB per TensorCore (or unknown)
        budget, limit = 28 * _MiB, 52 * _MiB

    # Pipelined bytes per batch row: two bf16 context blocks, the bf16 (C,2,D)
    # query stack, plus (C,) f32 base/mask/output.
    per_row_bytes = C * (2 * L * D * 2 + 2 * D * 2 + 3 * 4)
    Bt = _choose_batch_block(B, per_row_bytes, max_block_rows=max_block_rows,
                             vmem_budget_bytes=budget, min_grid_steps=4)
    # Guard: if the fallback tile exceeds the generation budget, grow the limit
    # with it (clamped below physical VMEM) instead of compiling into an OOM.
    limit = int(min(cap - 8 * _MiB,
                    max(limit, 3 * Bt * per_row_bytes + 8 * _MiB)))
    grid = (B // Bt,)

    grid_spec = pltpu.PrefetchScalarGridSpec(
        num_scalar_prefetch=0,
        grid=grid,
        in_specs=[
            pl.BlockSpec((Bt, C, L, D), lambda i: (i, 0, 0, 0)),   # s1 (bf16)
            pl.BlockSpec((Bt, C, L, D), lambda i: (i, 0, 0, 0)),   # s2 (bf16)
            pl.BlockSpec((Bt, C, 2, D), lambda i: (i, 0, 0, 0)),   # qk (bf16)
            pl.BlockSpec((Bt, C), lambda i: (i, 0)),               # base . wb (f32)
            pl.BlockSpec((Bt, C), lambda i: (i, 0)),               # sequence mask (f32)
            pl.BlockSpec((D, 3), lambda i: (0, 0)),                # [wf1|wf2|wc] resident
            pl.BlockSpec(memory_space=pltpu.MemorySpace.SMEM),     # sim weights + bias
        ],
        out_specs=pl.BlockSpec((Bt, C), lambda i: (i, 0)),
    )

    return pl.pallas_call(
        mlpc_kernel,
        out_shape=jax.ShapeDtypeStruct((B, C), jnp.float32),
        grid_spec=grid_spec,
        compiler_params=pltpu.CompilerParams(
            dimension_semantics=("parallel",),     # batch blocks independent (2 TCs on v7x)
            vmem_limit_bytes=limit,
        ),
    )(s1, s2, qk, base_t, mask, wproj, wscal)


def mlpc_reference(contexts1, contexts2, base_feature, candidates, length, params):
    """Pure-JAX f32 mirror of the PyTorch forward (for correctness check)."""
    word_emb, sense_emb, mu_emb = params["word_emb"], params["sense_emb"], params["mu_emb"]
    W, b = params["W"], params["b"]
    B, C, L = contexts1.shape
    N = B * C

    s1 = jnp.take(word_emb, contexts1.reshape(N, L), axis=0)   # (N, L, D)
    s2 = jnp.take(word_emb, contexts2.reshape(N, L), axis=0)
    q = jnp.take(sense_emb, candidates.reshape(N), axis=0)     # (N, D)
    qm = jnp.take(mu_emb, candidates.reshape(N), axis=0)

    def feat(query, sents):
        att = jnp.einsum("nd,nld->nl", query, sents)
        return jnp.einsum("nl,nld->nd", att, sents)

    f1s, f1m = feat(q, s1), feat(qm, s1)
    f2s, f2m = feat(q, s2), feat(qm, s2)
    sim1 = jnp.sum(q * f1s, axis=-1, keepdims=True)
    sim2 = jnp.sum(qm * f1m, axis=-1, keepdims=True)
    sim4 = jnp.sum(q * f2s, axis=-1, keepdims=True)
    sim5 = jnp.sum(qm * f2m, axis=-1, keepdims=True)

    base = base_feature.reshape(N, -1).astype(jnp.float32)
    h = jnp.concatenate([base, q, f1s, sim1, sim2, sim4, sim5, f2s], axis=1)
    h = (h @ W + b).reshape(B, C)

    probs = jax.nn.softmax(h, axis=1)
    mask = (jnp.arange(C)[None, :] < length[:, None]).astype(jnp.float32)
    return probs * mask


if __name__ == "__main__":
    # TODO(synk): entity branch (use_entity=True) and hidden MLP layers
    # (layers_dim != []) are not exercised; module defaults are implemented.
    B, C, L = 64, 4, 8         # batch, candidates per mention, context length
    D = 128                    # word_dim == sense_dim (lane-dense multiple of 128)
    Fb = 10                    # base feature dim
    word_vocab, sense_vocab = 50, 40
    feature_dim = Fb + 3 * D + 4   # base + cand + f1_sense + 4 sims + f2_sense

    key = jax.random.PRNGKey(0)
    keys = jax.random.split(key, 10)
    params = {
        "word_emb": jax.random.normal(keys[0], (word_vocab, D), jnp.float32) * 0.1,
        "sense_emb": jax.random.normal(keys[1], (sense_vocab, D), jnp.float32) * 0.1,
        "mu_emb": jax.random.normal(keys[2], (sense_vocab, D), jnp.float32) * 0.1,
        "W": jax.random.normal(keys[3], (feature_dim, 1), jnp.float32) / np.sqrt(feature_dim),
        "b": jax.random.normal(keys[4], (1,), jnp.float32) * 0.01,
    }
    contexts1 = jax.random.randint(keys[5], (B, C, L), 0, word_vocab, jnp.int32)
    contexts2 = jax.random.randint(keys[6], (B, C, L), 0, word_vocab, jnp.int32)
    candidates = jax.random.randint(keys[7], (B, C), 0, sense_vocab, jnp.int32)
    base_feature = jax.random.normal(keys[8], (B, C, Fb), jnp.float32)
    length = jax.random.randint(keys[9], (B,), 1, C + 1, jnp.int32)  # valid cands/row

    # max_block_rows=8 -> Bt=8, grid=(8,): >=2 pipelined steps per TensorCore on v7x.
    out = mlpc_forward(contexts1, contexts2, base_feature, candidates, length,
                       params, max_block_rows=8)
    out = jax.block_until_ready(out)

    ref = mlpc_reference(contexts1, contexts2, base_feature, candidates, length, params)
    # Tolerance covers bf16 context/query inputs (f32 MXU accumulation), f32
    # reassociation from the algebraic pooling elimination, and the EUP
    # approximate reciprocal in the softmax normalization.
    np.testing.assert_allclose(np.asarray(out), np.asarray(ref), rtol=2e-2, atol=2e-3)

    print("KERNEL_OK")
</pallas_src>

<mosaic_0001>
module attributes {stable_mosaic.version = 11 : i64} {
  func.func @mlpc_kernel(%arg0: i32, %arg1: memref<8x4x8x128xbf16, #tpu.memory_space<vmem>>, %arg2: memref<8x4x8x128xbf16, #tpu.memory_space<vmem>>, %arg3: memref<8x4x2x128xbf16, #tpu.memory_space<vmem>>, %arg4: memref<8x4xf32, #tpu.memory_space<vmem>>, %arg5: memref<8x4xf32, #tpu.memory_space<vmem>>, %arg6: memref<128x3xbf16, #tpu.memory_space<vmem>>, %arg7: memref<5xf32, #tpu.memory_space<smem>>, %arg8: memref<8x4xf32, #tpu.memory_space<vmem>>) attributes {dimension_semantics = [#tpu.dimension_semantics<parallel>], iteration_bounds = array<i64: 8>, scalar_prefetch = 0 : i64, scratch_operands = 0 : i64, tpu.core_type = #tpu.core_type<tc>, window_params = [{transform_indices = @transform_0, window_bounds = array<i64: 8, 4, 8, 128>}, {transform_indices = @transform_1, window_bounds = array<i64: 8, 4, 8, 128>}, {transform_indices = @transform_2, window_bounds = array<i64: 8, 4, 2, 128>}, {transform_indices = @transform_3, window_bounds = array<i64: 8, 4>}, {transform_indices = @transform_4, window_bounds = array<i64: 8, 4>}, {pipeline_mode = #tpu.pipeline_mode<synchronous>, transform_indices = @transform_5, window_bounds = array<i64: 128, 3>}, {transform_indices = @transform_6, window_bounds = array<i64: 5>}, {transform_indices = @transform_7, window_bounds = array<i64: 8, 4>}]} {
    %c0 = arith.constant 0 : index
    %c0_0 = arith.constant 0 : index
    %c0_1 = arith.constant 0 : index
    %c0_2 = arith.constant 0 : index
    %0 = vector.load %arg1[%c0, %c0_0, %c0_1, %c0_2] : memref<8x4x8x128xbf16, #tpu.memory_space<vmem>>, vector<8x4x8x128xbf16>
    %c0_3 = arith.constant 0 : index
    %c0_4 = arith.constant 0 : index
    %c0_5 = arith.constant 0 : index
    %c0_6 = arith.constant 0 : index
    %1 = vector.load %arg2[%c0_3, %c0_4, %c0_5, %c0_6] : memref<8x4x8x128xbf16, #tpu.memory_space<vmem>>, vector<8x4x8x128xbf16>
    %c0_7 = arith.constant 0 : index
    %c0_8 = arith.constant 0 : index
    %c0_9 = arith.constant 0 : index
    %c0_10 = arith.constant 0 : index
    %2 = vector.load %arg3[%c0_7, %c0_8, %c0_9, %c0_10] : memref<8x4x2x128xbf16, #tpu.memory_space<vmem>>, vector<8x4x2x128xbf16>
    %c0_11 = arith.constant 0 : index
    %c0_12 = arith.constant 0 : index
    %3 = vector.load %arg6[%c0_11, %c0_12] : memref<128x3xbf16, #tpu.memory_space<vmem>>, vector<128x3xbf16>
    %4 = vector.shape_cast %2 : vector<8x4x2x128xbf16> to vector<32x2x128xbf16>
    %5 = vector.shape_cast %0 : vector<8x4x8x128xbf16> to vector<32x8x128xbf16>
    "tpu.trace_start"() <{level = 10 : i32, message = "nqd,nld->nql"}> : () -> ()
    %cst = arith.constant dense<0.000000e+00> : vector<32x2x8xf32>
    %6 = tpu.matmul %4, %5, %cst {dimension_numbers = #tpu.dot_dimension_numbers<[2], [2], [1], [1], [0, 0, 0, 1, 1, 1], [0], [0]>} : vector<32x2x128xbf16>, vector<32x8x128xbf16>, vector<32x2x8xf32> -> vector<32x2x8xf32>
    "tpu.trace_stop"() : () -> ()
    %7 = vector.shape_cast %6 : vector<32x2x8xf32> to vector<8x4x2x8xf32>
    %8 = vector.shape_cast %2 : vector<8x4x2x128xbf16> to vector<32x2x128xbf16>
    %9 = vector.shape_cast %1 : vector<8x4x8x128xbf16> to vector<32x8x128xbf16>
    "tpu.trace_start"() <{level = 10 : i32, message = "nqd,nld->nql"}> : () -> ()
    %cst_13 = arith.constant dense<0.000000e+00> : vector<32x2x8xf32>
    %10 = tpu.matmul %8, %9, %cst_13 {dimension_numbers = #tpu.dot_dimension_numbers<[2], [2], [1], [1], [0, 0, 0, 1, 1, 1], [0], [0]>} : vector<32x2x128xbf16>, vector<32x8x128xbf16>, vector<32x2x8xf32> -> vector<32x2x8xf32>
    "tpu.trace_stop"() : () -> ()
    %11 = vector.shape_cast %10 : vector<32x2x8xf32> to vector<8x4x2x8xf32>
    %12 = vector.extract_strided_slice %7 {offsets = [0, 0, 0, 0], sizes = [8, 4, 1, 8], strides = [1, 1, 1, 1]} : vector<8x4x2x8xf32> to vector<8x4x1x8xf32>
    %13 = vector.shape_cast %12 : vector<8x4x1x8xf32> to vector<8x4x8xf32>
    %14 = vector.extract_strided_slice %7 {offsets = [0, 0, 1, 0], sizes = [8, 4, 1, 8], strides = [1, 1, 1, 1]} : vector<8x4x2x8xf32> to vector<8x4x1x8xf32>
    %15 = vector.shape_cast %14 : vector<8x4x1x8xf32> to vector<8x4x8xf32>
    %16 = vector.extract_strided_slice %11 {offsets = [0, 0, 0, 0], sizes = [8, 4, 1, 8], strides = [1, 1, 1, 1]} : vector<8x4x2x8xf32> to vector<8x4x1x8xf32>
    %17 = vector.shape_cast %16 : vector<8x4x1x8xf32> to vector<8x4x8xf32>
    %18 = vector.extract_strided_slice %11 {offsets = [0, 0, 1, 0], sizes = [8, 4, 1, 8], strides = [1, 1, 1, 1]} : vector<8x4x2x8xf32> to vector<8x4x1x8xf32>
    %19 = vector.shape_cast %18 : vector<8x4x1x8xf32> to vector<8x4x8xf32>
    %20 = vector.shape_cast %0 : vector<8x4x8x128xbf16> to vector<256x128xbf16>
    %cst_14 = arith.constant dense<0.000000e+00> : vector<256x3xf32>
    %21 = tpu.matmul %20, %3, %cst_14 {dimension_numbers = #tpu.dot_dimension_numbers<[1], [0], [0], [1], [0, 0, 1, 1], [], []>} : vector<256x128xbf16>, vector<128x3xbf16>, vector<256x3xf32> -> vector<256x3xf32>
    %22 = vector.shape_cast %21 : vector<256x3xf32> to vector<8x4x8x3xf32>
    %23 = vector.extract_strided_slice %22 {offsets = [0, 0, 0, 0], sizes = [8, 4, 8, 1], strides = [1, 1, 1, 1]} : vector<8x4x8x3xf32> to vector<8x4x8x1xf32>
    %24 = vector.shape_cast %23 : vector<8x4x8x1xf32> to vector<8x4x8xf32>
    %25 = vector.shape_cast %1 : vector<8x4x8x128xbf16> to vector<256x128xbf16>
    %cst_15 = arith.constant dense<0.000000e+00> : vector<256x3xf32>
    %26 = tpu.matmul %25, %3, %cst_15 {dimension_numbers = #tpu.dot_dimension_numbers<[1], [0], [0], [1], [0, 0, 1, 1], [], []>} : vector<256x128xbf16>, vector<128x3xbf16>, vector<256x3xf32> -> vector<256x3xf32>
    %27 = vector.shape_cast %26 : vector<256x3xf32> to vector<8x4x8x3xf32>
    %28 = vector.extract_strided_slice %27 {offsets = [0, 0, 0, 1], sizes = [8, 4, 8, 1], strides = [1, 1, 1, 1]} : vector<8x4x8x3xf32> to vector<8x4x8x1xf32>
    %29 = vector.shape_cast %28 : vector<8x4x8x1xf32> to vector<8x4x8xf32>
    %30 = vector.shape_cast %2 : vector<8x4x2x128xbf16> to vector<64x128xbf16>
    %cst_16 = arith.constant dense<0.000000e+00> : vector<64x3xf32>
    %31 = tpu.matmul %30, %3, %cst_16 {dimension_numbers = #tpu.dot_dimension_numbers<[1], [0], [0], [1], [0, 0, 1, 1], [], []>} : vector<64x128xbf16>, vector<128x3xbf16>, vector<64x3xf32> -> vector<64x3xf32>
    %32 = vector.shape_cast %31 : vector<64x3xf32> to vector<8x4x2x3xf32>
    %33 = vector.extract_strided_slice %32 {offsets = [0, 0, 0, 2], sizes = [8, 4, 1, 1], strides = [1, 1, 1, 1]} : vector<8x4x2x3xf32> to vector<8x4x1x1xf32>
    %34 = vector.shape_cast %33 : vector<8x4x1x1xf32> to vector<8x4xf32>
    %35 = arith.mulf %13, %13 : vector<8x4x8xf32>
    %cst_17 = arith.constant dense<0.000000e+00> : vector<8x4xf32>
    %36 = vector.multi_reduction <add>, %35, %cst_17 [2] : vector<8x4x8xf32> to vector<8x4xf32>
    %37 = arith.mulf %15, %15 : vector<8x4x8xf32>
    %cst_18 = arith.constant dense<0.000000e+00> : vector<8x4xf32>
    %38 = vector.multi_reduction <add>, %37, %cst_18 [2] : vector<8x4x8xf32> to vector<8x4xf32>
    %39 = arith.mulf %17, %17 : vector<8x4x8xf32>
    %cst_19 = arith.constant dense<0.000000e+00> : vector<8x4xf32>
    %40 = vector.multi_reduction <add>, %39, %cst_19 [2] : vector<8x4x8xf32> to vector<8x4xf32>
    %41 = arith.mulf %19, %19 : vector<8x4x8xf32>
    %cst_20 = arith.constant dense<0.000000e+00> : vector<8x4xf32>
    %42 = vector.multi_reduction <add>, %41, %cst_20 [2] : vector<8x4x8xf32> to vector<8x4xf32>
    %43 = arith.mulf %13, %24 : vector<8x4x8xf32>
    %cst_21 = arith.constant dense<0.000000e+00> : vector<8x4xf32>
    %44 = vector.multi_reduction <add>, %43, %cst_21 [2] : vector<8x4x8xf32> to vector<8x4xf32>
    %45 = arith.mulf %17, %29 : vector<8x4x8xf32>
    %cst_22 = arith.constant dense<0.000000e+00> : vector<8x4xf32>
    %46 = vector.multi_reduction <add>, %45, %cst_22 [2] : vector<8x4x8xf32> to vector<8x4xf32>
    %c0_23 = arith.constant 0 : index
    %c0_24 = arith.constant 0 : index
    %47 = vector.load %arg4[%c0_23, %c0_24] : memref<8x4xf32, #tpu.memory_space<vmem>>, vector<8x4xf32>
    %48 = arith.addf %47, %34 : vector<8x4xf32>
    %49 = arith.addf %48, %44 : vector<8x4xf32>
    %50 = arith.addf %49, %46 : vector<8x4xf32>
    %c0_25 = arith.constant 0 : index
    %51 = memref.load %arg7[%c0_25] : memref<5xf32, #tpu.memory_space<smem>>
    %52 = vector.broadcast %51 : f32 to vector<8x4xf32>
    %53 = arith.mulf %36, %52 : vector<8x4xf32>
    %54 = arith.addf %50, %53 : vector<8x4xf32>
    %c1 = arith.constant 1 : index
    %55 = memref.load %arg7[%c1] : memref<5xf32, #tpu.memory_space<smem>>
    %56 = vector.broadcast %55 : f32 to vector<8x4xf32>
    %57 = arith.mulf %38, %56 : vector<8x4xf32>
    %58 = arith.addf %54, %57 : vector<8x4xf32>
    %c2 = arith.constant 2 : index
    %59 = memref.load %arg7[%c2] : memref<5xf32, #tpu.memory_space<smem>>
    %60 = vector.broadcast %59 : f32 to vector<8x4xf32>
    %61 = arith.mulf %40, %60 : vector<8x4xf32>
    %62 = arith.addf %58, %61 : vector<8x4xf32>
    %c3 = arith.constant 3 : index
    %63 = memref.load %arg7[%c3] : memref<5xf32, #tpu.memory_space<smem>>
    %64 = vector.broadcast %63 : f32 to vector<8x4xf32>
    %65 = arith.mulf %42, %64 : vector<8x4xf32>
    %66 = arith.addf %62, %65 : vector<8x4xf32>
    %c4 = arith.constant 4 : index
    %67 = memref.load %arg7[%c4] : memref<5xf32, #tpu.memory_space<smem>>
    %68 = vector.broadcast %67 : f32 to vector<8x4xf32>
    %69 = arith.addf %66, %68 : vector<8x4xf32>
    %cst_26 = arith.constant dense<0xFF800000> : vector<8xf32>
    %70 = vector.multi_reduction <maximumf>, %69, %cst_26 [1] : vector<8x4xf32> to vector<8xf32>
    %71 = vector.shape_cast %70 : vector<8xf32> to vector<8x1xf32>
    %72 = vector.broadcast %71 : vector<8x1xf32> to vector<8x4xf32>
    %73 = arith.subf %69, %72 : vector<8x4xf32>
    %74 = math.exp %73 : vector<8x4xf32>
    %cst_27 = arith.constant dense<0.000000e+00> : vector<8xf32>
    %75 = vector.multi_reduction <add>, %74, %cst_27 [1] : vector<8x4xf32> to vector<8xf32>
    %76 = vector.shape_cast %75 : vector<8xf32> to vector<8x1xf32>
    %77 = tpu.reciprocal %76 {approx = true} : vector<8x1xf32> -> vector<8x1xf32>
    %78 = vector.broadcast %77 : vector<8x1xf32> to vector<8x4xf32>
    %79 = arith.mulf %74, %78 : vector<8x4xf32>
    %c0_28 = arith.constant 0 : index
    %c0_29 = arith.constant 0 : index
    %80 = vector.load %arg5[%c0_28, %c0_29] : memref<8x4xf32, #tpu.memory_space<vmem>>, vector<8x4xf32>
    %81 = arith.mulf %79, %80 : vector<8x4xf32>
    %c0_30 = arith.constant 0 : index
    %c0_31 = arith.constant 0 : index
    %82 = vector.load %arg8[%c0_30, %c0_31] : memref<8x4xf32, #tpu.memory_space<vmem>>, vector<8x4xf32>
    tpu.vector_store %arg8[%c0_30, %c0_31], %81 {strides = array<i32>} : memref<8x4xf32, #tpu.memory_space<vmem>>, vector<8x4xf32>,
    return
  }
  func.func @transform_0(%arg0: i32) -> (i32, i32, i32, i32) {
    %c0_i32 = arith.constant 0 : i32
    %c0_i32_0 = arith.constant 0 : i32
    %c0_i32_1 = arith.constant 0 : i32
    %c0_i32_2 = arith.constant 0 : i32
    return %arg0, %c0_i32, %c0_i32_0, %c0_i32_1 : i32, i32, i32, i32
  }
  func.func @transform_1(%arg0: i32) -> (i32, i32, i32, i32) {
    %c0_i32 = arith.constant 0 : i32
    %c0_i32_0 = arith.constant 0 : i32
    %c0_i32_1 = arith.constant 0 : i32
    %c0_i32_2 = arith.constant 0 : i32
    return %arg0, %c0_i32, %c0_i32_0, %c0_i32_1 : i32, i32, i32, i32
  }
  func.func @transform_2(%arg0: i32) -> (i32, i32, i32, i32) {
    %c0_i32 = arith.constant 0 : i32
    %c0_i32_0 = arith.constant 0 : i32
    %c0_i32_1 = arith.constant 0 : i32
    %c0_i32_2 = arith.constant 0 : i32
    return %arg0, %c0_i32, %c0_i32_0, %c0_i32_1 : i32, i32, i32, i32
  }
  func.func @transform_3(%arg0: i32) -> (i32, i32) {
    %c0_i32 = arith.constant 0 : i32
    %c0_i32_0 = arith.constant 0 : i32
    return %arg0, %c0_i32 : i32, i32
  }
  func.func @transform_4(%arg0: i32) -> (i32, i32) {
    %c0_i32 = arith.constant 0 : i32
    %c0_i32_0 = arith.constant 0 : i32
    return %arg0, %c0_i32 : i32, i32
  }
  func.func @transform_5(%arg0: i32) -> (i32, i32) {
    %c0_i32 = arith.constant 0 : i32
    %c0_i32_0 = arith.constant 0 : i32
    %c0_i32_1 = arith.constant 0 : i32
    return %c0_i32, %c0_i32_0 : i32, i32
  }
  func.func @transform_6(%arg0: i32) -> i32 {
    %c0_i32 = arith.constant 0 : i32
    %c0_i32_0 = arith.constant 0 : i32
    return %c0_i32 : i32
  }
  func.func @transform_7(%arg0: i32) -> (i32, i32) {
    %c0_i32 = arith.constant 0 : i32
    %c0_i32_0 = arith.constant 0 : i32
    return %arg0, %c0_i32 : i32, i32
  }
}

</mosaic_0001>

<llo_original>
// kernel: tpu_custom_call.1
$region0: #{tpu_custom_call.1}
  #allocation0 [shape = 'u32[]', space=smem, size = 0x4, offset = 0x4, fixed_abs, tag = 'smem constant byte address 0x4 - core index']
  #allocation1 [shape = 'u32[144,128]{1,0:T(1,128)}', space=vmem, size = 0x12000, scoped, tag = 'internal scratch']
  %s0 = inlined_call_operand.hbm [shape: bf16[64,4,8,128], index: 0, kind: input, shape index: {}]
  %s1 = inlined_call_operand.hbm [shape: bf16[64,4,8,128], index: 1, kind: input, shape index: {}]
  %s2 = inlined_call_operand.hbm [shape: bf16[64,4,2,128], index: 2, kind: input, shape index: {}]
  %s3 = inlined_call_operand.vmem [shape: f32[64,4], index: 3, kind: input, shape index: {}]
  %s4 = inlined_call_operand.vmem [shape: f32[64,4], index: 4, kind: input, shape index: {}]
  %s5 = inlined_call_operand.vmem [shape: bf16[128,3], index: 5, kind: input, shape index: {}]
  %s6 = inlined_call_operand.vmem [shape: f32[5], index: 6, kind: input, shape index: {}]
  %s7 = inlined_call_operand.vmem [shape: f32[64,4], index: 7, kind: output, shape index: {}]
  %s8 = sld [smem:[#allocation0]]
  $region77: #{tpu_custom_call.1} parent=0
    _
  %s10 = ssub.s32 1, %s8
  %s11 = scalar_select 0, %s10, %s8
  $region1: #{tpu_custom_call.1} parent=0
    #allocation2 [shape = 'u8[131072]{0}', space=vmem, size = 0x20000, scoped, tag = 'input window, operand 0']
    #allocation3 [shape = 's32[2]{0}', space=sflag, size = 0x8, scoped, tag = 'scoped memory for tpu_custom_call.1']
    #allocation4 [shape = 's32[2]{0}', space=sflag, size = 0x8, scoped, tag = 'scoped memory for tpu_custom_call.1']
    #allocation5 [shape = 'u8[131072]{0}', space=vmem, size = 0x20000, scoped, tag = 'input window, operand 1']
    #allocation6 [shape = 's32[2]{0}', space=sflag, size = 0x8, scoped, tag = 'scoped memory for tpu_custom_call.1']
    #allocation7 [shape = 'u8[32768]{0}', space=vmem, size = 0x8000, scoped, tag = 'input window, operand 2']
    #allocation8 [shape = 'u8[512]{0}', space=smem, size = 0x200, scoped, tag = 'input window, operand 6, single buffered']
    %12 = vsyncpa [#allocation3], 0
    %s13 = scalar_lea.sflag [#allocation3], 1
    %14 = vsyncpa %s13, 0
    %15 = vsyncpa [#allocation6], 0
    %s16 = scalar_lea.sflag [#allocation6], 1
    %17 = vsyncpa %s16, 0
    %18 = vsyncpa [#allocation4], 0
    loop: start=0, step=1, limit=10
    $region2: #{tpu_custom_call.1} parent=1 // loop_pre_header
      _
    $region3: #{tpu_custom_call.1} parent=1 // loop_header
      %s20 = sphi 0, %s24
      %p21 = scmp.ge.s32.totalorder %s20, 10
      %s30 = sphi 0, %s32
      %s33 = sphi 0, %s30
      %s34 = sphi 0, %s33
      %s50 = sphi 0, %s34
      %s56 = sphi 0, %s58
      %s59 = sphi 0, %s56
      %s60 = sphi 0, %s59
      %s76 = sphi 0, %s60
      %s82 = sphi 0, %s84
      %s85 = sphi 0, %s82
      %s86 = sphi 0, %s85
      %s102 = sphi 0, %s86
      %s108 = sphi 0, %s110
      %s111 = sphi 0, %s108
      %s112 = sphi 0, %s111
      %s128 = sphi 0, %s112
      %s134 = sphi 0, %s136
      %s137 = sphi 0, %s134
      %s138 = sphi 0, %s137
      %s154 = sphi 0, %s138
      %s158 = sphi 0, %s158
      %s160 = sphi 0, %s158
      %s161 = sphi 0, %s160
      %s175 = sphi 0, %s161
      %s179 = sphi 0, %s179
      %s181 = sphi 0, %s179
      %s182 = sphi 0, %s181
      %s196 = sphi 0, %s182
      %s202 = sphi 0, %s204
      %s205 = sphi 0, %s202
      %s206 = sphi 0, %s205
      %s222 = sphi 0, %s206
    $region4: #{tpu_custom_call.1} parent=1 // loop_header_branch
      %23 = sbr.rel (%p21) target = $region8
    $region5: #{tpu_custom_call.1} parent=1 // loop_body
      %s25 = ssub.s32 %s20, 1
      %s26 = ssub.s32 %s20, 2
      %s27 = sadd.s32 %s20, 1
      %s28 = ssub.s32 %s20, %s27
      %p29 = scmp.eq.s32.totalorder %s28, 0
      %s31 = sadd.s32 %s30, 1
      %s32 = scalar_select %p29, %s30, %s31
      %p35 = pneg %p29
      %p36 = scmp.eq.s32.totalorder %s20, 7
      %p37 = por %p35, %p36
      %p38 = scmp.ne.s32.totalorder %s30, %s33
      %p39 = scmp.eq.s32.totalorder %s20, 0
      %p40 = por %p38, %p39
      %p41 = scmp.ne.s32.totalorder %s30, %s33
      %p42 = scmp.eq.s32.totalorder %s25, 7
      %p43 = por %p41, %p42
      %p44 = scmp.ne.s32.totalorder %s33, %s34
      %p45 = scmp.eq.s32.totalorder %s25, 0
      %p46 = por %p44, %p45
      %p47 = scmp.ne.s32.totalorder %s33, %s34
      %p48 = scmp.eq.s32.totalorder %s26, 7
      %p49 = por %p47, %p48
      %p51 = scmp.ne.s32.totalorder %s34, %s50
      %p52 = scmp.eq.s32.totalorder %s26, 0
      %p53 = por %p51, %p52
      %s54 = ssub.s32 %s20, %s27
      %p55 = scmp.eq.s32.totalorder %s54, 0
      %s57 = sadd.s32 %s56, 1
      %s58 = scalar_select %p55, %s56, %s57
      %p61 = pneg %p55
      %p62 = scmp.eq.s32.totalorder %s20, 7
      %p63 = por %p61, %p62
      %p64 = scmp.ne.s32.totalorder %s56, %s59
      %p65 = scmp.eq.s32.totalorder %s20, 0
      %p66 = por %p64, %p65
      %p67 = scmp.ne.s32.totalorder %s56, %s59
      %p68 = scmp.eq.s32.totalorder %s25, 7
      %p69 = por %p67, %p68
      %p70 = scmp.ne.s32.totalorder %s59, %s60
      %p71 = scmp.eq.s32.totalorder %s25, 0
      %p72 = por %p70, %p71
      %p73 = scmp.ne.s32.totalorder %s59, %s60
      %p74 = scmp.eq.s32.totalorder %s26, 7
      %p75 = por %p73, %p74
      %p77 = scmp.ne.s32.totalorder %s60, %s76
      %p78 = scmp.eq.s32.totalorder %s26, 0
      %p79 = por %p77, %p78
      %s80 = ssub.s32 %s20, %s27
      %p81 = scmp.eq.s32.totalorder %s80, 0
      %s83 = sadd.s32 %s82, 1
      %s84 = scalar_select %p81, %s82, %s83
      %p87 = pneg %p81
      %p88 = scmp.eq.s32.totalorder %s20, 7
      %p89 = por %p87, %p88
      %p90 = scmp.ne.s32.totalorder %s82, %s85
      %p91 = scmp.eq.s32.totalorder %s20, 0
      %p92 = por %p90, %p91
      %p93 = scmp.ne.s32.totalorder %s82, %s85
      %p94 = scmp.eq.s32.totalorder %s25, 7
      %p95 = por %p93, %p94
      %p96 = scmp.ne.s32.totalorder %s85, %s86
      %p97 = scmp.eq.s32.totalorder %s25, 0
      %p98 = por %p96, %p97
      %p99 = scmp.ne.s32.totalorder %s85, %s86
      %p100 = scmp.eq.s32.totalorder %s26, 7
      %p101 = por %p99, %p100
      %p103 = scmp.ne.s32.totalorder %s86, %s102
      %p104 = scmp.eq.s32.totalorder %s26, 0
      %p105 = por %p103, %p104
      %s106 = ssub.s32 %s20, %s27
      %p107 = scmp.eq.s32.totalorder %s106, 0
      %s109 = sadd.s32 %s108, 1
      %s110 = scalar_select %p107, %s108, %s109
      %p113 = pneg %p107
      %p114 = scmp.eq.s32.totalorder %s20, 7
      %p115 = por %p113, %p114
      %p116 = scmp.ne.s32.totalorder %s108, %s111
      %p117 = scmp.eq.s32.totalorder %s20, 0
      %p118 = por %p116, %p117
      %p119 = scmp.ne.s32.totalorder %s108, %s111
      %p120 = scmp.eq.s32.totalorder %s25, 7
      %p121 = por %p119, %p120
      %p122 = scmp.ne.s32.totalorder %s111, %s112
      %p123 = scmp.eq.s32.totalorder %s25, 0
      %p124 = por %p122, %p123
      %p125 = scmp.ne.s32.totalorder %s111, %s112
      %p126 = scmp.eq.s32.totalorder %s26, 7
      %p127 = por %p125, %p126
      %p129 = scmp.ne.s32.totalorder %s112, %s128
      %p130 = scmp.eq.s32.totalorder %s26, 0
      %p131 = por %p129, %p130
      %s132 = ssub.s32 %s20, %s27
      %p133 = scmp.eq.s32.totalorder %s132, 0
      %s135 = sadd.s32 %s134, 1
      %s136 = scalar_select %p133, %s134, %s135
      %p139 = pneg %p133
      %p140 = scmp.eq.s32.totalorder %s20, 7
      %p141 = por %p139, %p140
      %p142 = scmp.ne.s32.totalorder %s134, %s137
      %p143 = scmp.eq.s32.totalorder %s20, 0
      %p144 = por %p142, %p143
      %p145 = scmp.ne.s32.totalorder %s134, %s137
      %p146 = scmp.eq.s32.totalorder %s25, 7
      %p147 = por %p145, %p146
      %p148 = scmp.ne.s32.totalorder %s137, %s138
      %p149 = scmp.eq.s32.totalorder %s25, 0
      %p150 = por %p148, %p149
      %p151 = scmp.ne.s32.totalorder %s137, %s138
      %p152 = scmp.eq.s32.totalorder %s26, 7
      %p153 = por %p151, %p152
      %p155 = scmp.ne.s32.totalorder %s138, %s154
      %p156 = scmp.eq.s32.totalorder %s26, 0
      %p157 = por %p155, %p156
      %s159 = sadd.s32 %s158, 1
      %p162 = scmp.eq.s32.totalorder %s20, 7
      %p163 = scmp.ne.s32.totalorder %s158, %s160
      %p164 = scmp.eq.s32.totalorder %s20, 0
      %p165 = por %p163, %p164
      %p166 = scmp.ne.s32.totalorder %s158, %s160
      %p167 = scmp.eq.s32.totalorder %s25, 7
      %p168 = por %p166, %p167
      %p169 = scmp.ne.s32.totalorder %s160, %s161
      %p170 = scmp.eq.s32.totalorder %s25, 0
      %p171 = por %p169, %p170
      %p172 = scmp.ne.s32.totalorder %s160, %s161
      %p173 = scmp.eq.s32.totalorder %s26, 7
      %p174 = por %p172, %p173
      %p176 = scmp.ne.s32.totalorder %s161, %s175
      %p177 = scmp.eq.s32.totalorder %s26, 0
      %p178 = por %p176, %p177
      %s180 = sadd.s32 %s179, 1
      %p183 = scmp.eq.s32.totalorder %s20, 7
      %p184 = scmp.ne.s32.totalorder %s179, %s181
      %p185 = scmp.eq.s32.totalorder %s20, 0
      %p186 = por %p184, %p185
      %p187 = scmp.ne.s32.totalorder %s179, %s181
      %p188 = scmp.eq.s32.totalorder %s25, 7
      %p189 = por %p187, %p188
      %p190 = scmp.ne.s32.totalorder %s181, %s182
      %p191 = scmp.eq.s32.totalorder %s25, 0
      %p192 = por %p190, %p191
      %p193 = scmp.ne.s32.totalorder %s181, %s182
      %p194 = scmp.eq.s32.totalorder %s26, 7
      %p195 = por %p193, %p194
      %p197 = scmp.ne.s32.totalorder %s182, %s196
      %p198 = scmp.eq.s32.totalorder %s26, 0
      %p199 = por %p197, %p198
      %s200 = ssub.s32 %s20, %s27
      %p201 = scmp.eq.s32.totalorder %s200, 0
      %s203 = sadd.s32 %s202, 1
      %s204 = scalar_select %p201, %s202, %s203
      %p207 = pneg %p201
      %p208 = scmp.eq.s32.totalorder %s20, 7
      %p209 = por %p207, %p208
      %p210 = scmp.ne.s32.totalorder %s202, %s205
      %p211 = scmp.eq.s32.totalorder %s20, 0
      %p212 = por %p210, %p211
      %p213 = scmp.ne.s32.totalorder %s202, %s205
      %p214 = scmp.eq.s32.totalorder %s25, 7
      %p215 = por %p213, %p214
      %p216 = scmp.ne.s32.totalorder %s205, %s206
      %p217 = scmp.eq.s32.totalorder %s25, 0
      %p218 = por %p216, %p217
      %p219 = scmp.ne.s32.totalorder %s205, %s206
      %p220 = scmp.eq.s32.totalorder %s26, 7
      %p221 = por %p219, %p220
      %p223 = scmp.ne.s32.totalorder %s206, %s222
      %p224 = scmp.eq.s32.totalorder %s26, 0
      %p225 = por %p223, %p224
      %p226 = scmp.le.s32.totalorder 1, %s20
      %p227 = scmp.lt.s32.totalorder %s20, 9
      %p228 = pnand %p226, %p227
      %p229 = pneg %p228
      // Predicated region
      $region9: #{tpu_custom_call.1} parent=5 // pred_check
        _
      $region10: #{tpu_custom_call.1} parent=5 // pred_check_branch
        %231 = sbr.rel (%p228) target = $region12
      $region11: #{tpu_custom_call.1} parent=5 // pred_region
        %s232 = ssub.s32 %s20, 1
        // Predicated region
        $region13: #{tpu_custom_call.1} parent=11 // pred_check
          %p233 = pneg %p171
        $region14: #{tpu_custom_call.1} parent=11 // pred_check_branch
          %235 = sbr.rel (%p233) target = $region16
        $region15: #{tpu_custom_call.1} parent=11 // pred_region
          _
        $region16: #{tpu_custom_call.1} parent=11 // pred_fallthru
          _
        // Predicated region
        $region17: #{tpu_custom_call.1} parent=11 // pred_check
          %p236 = pneg %p192
        $region18: #{tpu_custom_call.1} parent=11 // pred_check_branch
          %238 = sbr.rel (%p236) target = $region20
        $region19: #{tpu_custom_call.1} parent=11 // pred_region
          %s240 = ssub.s32 16, 16
          %241 = vsyncadd [#allocation4], %s240
          %s243 = sshll.u32 %s6, 4
          %s244 = int_to_ptr.vmem [resolvable:$true] %s243
          %246 = dma.vmem_to_smem %s244, 16, [#allocation8], [#allocation4]
        $region20: #{tpu_custom_call.1} parent=11 // pred_fallthru
          _
      $region12: #{tpu_custom_call.1} parent=5 // pred_fallthru
        _
      %p247 = scmp.lt.s32.totalorder %s20, 8
      // Predicated region
      $region21: #{tpu_custom_call.1} parent=5 // pred_check
        %p248 = pneg %p247
      $region22: #{tpu_custom_call.1} parent=5 // pred_check_branch
        %250 = sbr.rel (%p248) target = $region24
      $region23: #{tpu_custom_call.1} parent=5 // pred_region
        // Predicated region
        $region25: #{tpu_custom_call.1} parent=23 // pred_check
          %p251 = pneg %p40
        $region26: #{tpu_custom_call.1} parent=23 // pred_check_branch
          %253 = sbr.rel (%p251) target = $region28
        $region27: #{tpu_custom_call.1} parent=23 // pred_region
          %s254 = sand.u32 %s30, 1
          %s255 = scalar_lea.sflag [#allocation3], %s254
          %s256 = sand.u32 %s30, 1
          %s257 = smul.addr %s256, 128
          %s258 = scalar_lea.vmem [#allocation2], %s257
          %s259 = smul.u32 8, %s20
          %s261 = ssub.s32 2048, 2048
          %262 = vsyncadd %s255, %s261
          %s263 = smul.addr %s259, 4
          %s264 = smul.addr %s263, 64
          %s265 = scalar_lea.hbm %s0, %s264
          %s266 = sshll.u32 %s258, 4
          %s267 = int_to_ptr.vmem [resolvable:$true] %s266
          %272 = dma.hbm_to_vmem [thread:$0]  %s265, 2048, %s267, %s255, 64, 64, 4
        $region28: #{tpu_custom_call.1} parent=23 // pred_fallthru
          _
        // Predicated region
        $region29: #{tpu_custom_call.1} parent=23 // pred_check
          %p273 = pneg %p66
        $region30: #{tpu_custom_call.1} parent=23 // pred_check_branch
          %275 = sbr.rel (%p273) target = $region32
        $region31: #{tpu_custom_call.1} parent=23 // pred_region
          %s276 = sand.u32 %s20, 1
          %s277 = scalar_lea.sflag [#allocation6], %s276
          %s278 = sand.u32 %s56, 1
          %s279 = smul.addr %s278, 128
          %s280 = scalar_lea.vmem [#allocation5], %s279
          %s281 = smul.u32 8, %s20
          %s283 = ssub.s32 2048, 2048
          %284 = vsyncadd %s277, %s283
          %s285 = smul.addr %s281, 4
          %s286 = smul.addr %s285, 64
          %s287 = scalar_lea.hbm %s1, %s286
          %s288 = sshll.u32 %s280, 4
          %s289 = int_to_ptr.vmem [resolvable:$true] %s288
          %294 = dma.hbm_to_vmem [thread:$0]  %s287, 2048, %s289, %s277, 64, 64, 4
        $region32: #{tpu_custom_call.1} parent=23 // pred_fallthru
          _
        // Predicated region
        $region33: #{tpu_custom_call.1} parent=23 // pred_check
          %p295 = pneg %p92
        $region34: #{tpu_custom_call.1} parent=23 // pred_check_branch
          %297 = sbr.rel (%p295) target = $region36
        $region35: #{tpu_custom_call.1} parent=23 // pred_region
          %s298 = sand.u32 %s20, 1
          %s299 = scalar_lea.sflag [#allocation6], %s298
          %s300 = sand.u32 %s82, 1
          %s301 = smul.addr %s300, 32
          %s302 = scalar_lea.vmem [#allocation7], %s301
          %s303 = smul.u32 8, %s20
          %s305 = ssub.s32 512, 512
          %306 = vsyncadd %s299, %s305
          %s307 = smul.addr %s303, 4
          %s308 = smul.addr %s307, 16
          %s309 = scalar_lea.hbm %s2, %s308
          %s310 = sshll.u32 %s302, 4
          %s311 = int_to_ptr.vmem [resolvable:$true] %s310
          %316 = dma.hbm_to_vmem [thread:$0]  %s309, 512, %s311, %s299, 16, 16, 1
        $region36: #{tpu_custom_call.1} parent=23 // pred_fallthru
          _
        // Predicated region
        $region37: #{tpu_custom_call.1} parent=23 // pred_check
          %p317 = pneg %p118
        $region38: #{tpu_custom_call.1} parent=23 // pred_check_branch
          %319 = sbr.rel (%p317) target = $region40
        $region39: #{tpu_custom_call.1} parent=23 // pred_region
          %p320 = scmp.lt.s32.totalorder %s20, 7
          %s321 = scalar_select %p320, %s20, 7
          %s322 = smul.addr %s321, 8
          %s323 = scalar_lea.vmem %s3, %s322
        $region40: #{tpu_custom_call.1} parent=23 // pred_fallthru
          _
        // Predicated region
        $region41: #{tpu_custom_call.1} parent=23 // pred_check
          %p324 = pneg %p144
        $region42: #{tpu_custom_call.1} parent=23 // pred_check_branch
          %326 = sbr.rel (%p324) target = $region44
        $region43: #{tpu_custom_call.1} parent=23 // pred_region
          %p327 = scmp.lt.s32.totalorder %s20, 7
          %s328 = scalar_select %p327, %s20, 7
          %s329 = smul.addr %s328, 8
          %s330 = scalar_lea.vmem %s4, %s329
        $region44: #{tpu_custom_call.1} parent=23 // pred_fallthru
          _
      $region24: #{tpu_custom_call.1} parent=5 // pred_fallthru
        _
      %p331 = scmp.le.s32.totalorder 1, %s20
      %p332 = scmp.lt.s32.totalorder %s20, 9
      %p333 = pnand %p331, %p332
      %p334 = pneg %p333
      // Predicated region
      $region45: #{tpu_custom_call.1} parent=5 // pred_check
        _
      $region46: #{tpu_custom_call.1} parent=5 // pred_check_branch
        %336 = sbr.rel (%p333) target = $region48
      $region47: #{tpu_custom_call.1} parent=5 // pred_region
        %s337 = ssub.s32 %s20, 1
        %s338 = sand.u32 %s33, 1
        %s339 = scalar_lea.sflag [#allocation3], %s338
        %s340 = sand.u32 %s33, 1
        %s341 = smul.addr %s340, 128
        %s342 = scalar_lea.vmem [#allocation2], %s341
        // Predicated region
        $region49: #{tpu_custom_call.1} parent=47 // pred_check
          %p343 = pneg %p46
        $region50: #{tpu_custom_call.1} parent=47 // pred_check_branch
          %345 = sbr.rel (%p343) target = $region52
        $region51: #{tpu_custom_call.1} parent=47 // pred_region
          %346 = dma.done %s339, 2048
        $region52: #{tpu_custom_call.1} parent=47 // pred_fallthru
          _
        %s347 = sand.u32 %s25, 1
        %s348 = scalar_lea.sflag [#allocation6], %s347
        %s349 = sand.u32 %s59, 1
        %s350 = smul.addr %s349, 128
        %s351 = scalar_lea.vmem [#allocation5], %s350
        // Predicated region
        $region53: #{tpu_custom_call.1} parent=47 // pred_check
          %p352 = pneg %p72
        $region54: #{tpu_custom_call.1} parent=47 // pred_check_branch
          %354 = sbr.rel (%p352) target = $region56
        $region55: #{tpu_custom_call.1} parent=47 // pred_region
          %355 = dma.done %s348, 2048
        $region56: #{tpu_custom_call.1} parent=47 // pred_fallthru
          _
        %s356 = sand.u32 %s25, 1
        %s357 = scalar_lea.sflag [#allocation6], %s356
        %s358 = sand.u32 %s85, 1
        %s359 = smul.addr %s358, 32
        %s360 = scalar_lea.vmem [#allocation7], %s359
        // Predicated region
        $region57: #{tpu_custom_call.1} parent=47 // pred_check
          %p361 = pneg %p98
        $region58: #{tpu_custom_call.1} parent=47 // pred_check_branch
          %363 = sbr.rel (%p361) target = $region60
        $region59: #{tpu_custom_call.1} parent=47 // pred_region
          %364 = dma.done %s357, 512
        $region60: #{tpu_custom_call.1} parent=47 // pred_fallthru
          _
        // Predicated region
        $region61: #{tpu_custom_call.1} parent=47 // pred_check
          %p365 = pneg %p192
        $region62: #{tpu_custom_call.1} parent=47 // pred_check_branch
          %367 = sbr.rel (%p365) target = $region64
        $region63: #{tpu_custom_call.1} parent=47 // pred_region
          %368 = dma.done [#allocation4], 16
        $region64: #{tpu_custom_call.1} parent=47 // pred_fallthru
          _
        %369 = sfence
        %s370 = sand.u32 %s33, 1
        %s371 = scalar_lea.sflag [#allocation3], %s370
        %s372 = sand.u32 %s33, 1
        %s373 = smul.addr %s372, 128
        %s374 = scalar_lea.vmem [#allocation2], %s373
        %p375 = pneg %p46
        %p376 = pneg %p43
        %s377 = sand.u32 %s25, 1
        %s378 = scalar_lea.sflag [#allocation6], %s377
        %s379 = sand.u32 %s59, 1
        %s380 = smul.addr %s379, 128
        %s381 = scalar_lea.vmem [#allocation5], %s380
        %p382 = pneg %p72
        %p383 = pneg %p69
        %s384 = sand.u32 %s25, 1
        %s385 = scalar_lea.sflag [#allocation6], %s384
        %s386 = sand.u32 %s85, 1
        %s387 = smul.addr %s386, 32
        %s388 = scalar_lea.vmem [#allocation7], %s387
        %p389 = pneg %p98
        %p390 = pneg %p95
        %p391 = scmp.lt.s32.totalorder %s25, 7
        %s392 = scalar_select %p391, %s25, 7
        %s393 = smul.addr %s392, 8
        %s394 = scalar_lea.vmem %s3, %s393
        %p395 = pneg %p124
        %p396 = pneg %p121
        %p397 = scmp.lt.s32.totalorder %s25, 7
        %s398 = scalar_select %p397, %s25, 7
        %s399 = smul.addr %s398, 8
        %s400 = scalar_lea.vmem %s4, %s399
        %p401 = pneg %p150
        %p402 = pneg %p147
        %p403 = pneg %p171
        %p404 = pneg %p168
        %p405 = pneg %p192
        %p406 = pneg %p189
        %p407 = pneg %p218
        %p408 = pneg %p215
        %p409 = scmp.lt.s32.totalorder %s25, 7
        %s410 = scalar_select %p409, %s25, 7
        %s411 = smul.addr %s410, 8
        %s412 = scalar_lea.vmem %s7, %s411
        %s413 = smul.u32 8, %s25
        %s414 = smul.u32 8, %s25
        %s415 = smul.u32 8, %s25
        %p416 = scmp.lt.s32.totalorder %s25, 7
        %s417 = scalar_select %p416, %s25, 7
        %s418 = smul.addr %s417, 8
        %s419 = scalar_lea.vmem %s3, %s418
        %p420 = scmp.lt.s32.totalorder %s25, 7
        %s421 = scalar_select %p420, %s25, 7
        %s422 = smul.addr %s421, 8
        %s423 = scalar_lea.vmem %s4, %s422
        %p424 = scmp.lt.s32.totalorder %s25, 7
        %s425 = scalar_select %p424, %s25, 7
        %s426 = smul.addr %s425, 8
        %s427 = scalar_lea.vmem %s7, %s426
        %v429 = vld [vmem:[%s342] sm:$0xf]
        %v430 = vld [vmem:[%s342 + $0x4] sm:$0xf]
        %v431 = vld [vmem:[%s342 + $0x8] sm:$0xf]
        %v432 = vld [vmem:[%s342 + $0xc] sm:$0xf]
        %v433 = vld [vmem:[%s342 + $0x10] sm:$0xf]
        %v434 = vld [vmem:[%s342 + $0x14] sm:$0xf]
        %v435 = vld [vmem:[%s342 + $0x18] sm:$0xf]
        %v436 = vld [vmem:[%s342 + $0x1c] sm:$0xf]
        %v437 = vld [vmem:[%s342 + $0x20] sm:$0xf]
        %v438 = vld [vmem:[%s342 + $0x24] sm:$0xf]
        %v439 = vld [vmem:[%s342 + $0x28] sm:$0xf]
        %v440 = vld [vmem:[%s342 + $0x2c] sm:$0xf]
        %v441 = vld [vmem:[%s342 + $0x30] sm:$0xf]
        %v442 = vld [vmem:[%s342 + $0x34] sm:$0xf]
        %v443 = vld [vmem:[%s342 + $0x38] sm:$0xf]
        %v444 = vld [vmem:[%s342 + $0x3c] sm:$0xf]
        %v445 = vld [vmem:[%s342 + $0x40] sm:$0xf]
        %v446 = vld [vmem:[%s342 + $0x44] sm:$0xf]
        %v447 = vld [vmem:[%s342 + $0x48] sm:$0xf]
        %v448 = vld [vmem:[%s342 + $0x4c] sm:$0xf]
        %v449 = vld [vmem:[%s342 + $0x50] sm:$0xf]
        %v450 = vld [vmem:[%s342 + $0x54] sm:$0xf]
        %v451 = vld [vmem:[%s342 + $0x58] sm:$0xf]
        %v452 = vld [vmem:[%s342 + $0x5c] sm:$0xf]
        %v453 = vld [vmem:[%s342 + $0x60] sm:$0xf]
        %v454 = vld [vmem:[%s342 + $0x64] sm:$0xf]
        %v455 = vld [vmem:[%s342 + $0x68] sm:$0xf]
        %v456 = vld [vmem:[%s342 + $0x6c] sm:$0xf]
        %v457 = vld [vmem:[%s342 + $0x70] sm:$0xf]
        %v458 = vld [vmem:[%s342 + $0x74] sm:$0xf]
        %v459 = vld [vmem:[%s342 + $0x78] sm:$0xf]
        %v460 = vld [vmem:[%s342 + $0x7c] sm:$0xf]
        %v461 = vld [vmem:[%s351] sm:$0xf]
        %v462 = vld [vmem:[%s351 + $0x4] sm:$0xf]
        %v463 = vld [vmem:[%s351 + $0x8] sm:$0xf]
        %v464 = vld [vmem:[%s351 + $0xc] sm:$0xf]
        %v465 = vld [vmem:[%s351 + $0x10] sm:$0xf]
        %v466 = vld [vmem:[%s351 + $0x14] sm:$0xf]
        %v467 = vld [vmem:[%s351 + $0x18] sm:$0xf]
        %v468 = vld [vmem:[%s351 + $0x1c] sm:$0xf]
        %v469 = vld [vmem:[%s351 + $0x20] sm:$0xf]
        %v470 = vld [vmem:[%s351 + $0x24] sm:$0xf]
        %v471 = vld [vmem:[%s351 + $0x28] sm:$0xf]
        %v472 = vld [vmem:[%s351 + $0x2c] sm:$0xf]
        %v473 = vld [vmem:[%s351 + $0x30] sm:$0xf]
        %v474 = vld [vmem:[%s351 + $0x34] sm:$0xf]
        %v475 = vld [vmem:[%s351 + $0x38] sm:$0xf]
        %v476 = vld [vmem:[%s351 + $0x3c] sm:$0xf]
        %v477 = vld [vmem:[%s351 + $0x40] sm:$0xf]
        %v478 = vld [vmem:[%s351 + $0x44] sm:$0xf]
        %v479 = vld [vmem:[%s351 + $0x48] sm:$0xf]
        %v480 = vld [vmem:[%s351 + $0x4c] sm:$0xf]
        %v481 = vld [vmem:[%s351 + $0x50] sm:$0xf]
        %v482 = vld [vmem:[%s351 + $0x54] sm:$0xf]
        %v483 = vld [vmem:[%s351 + $0x58] sm:$0xf]
        %v484 = vld [vmem:[%s351 + $0x5c] sm:$0xf]
        %v485 = vld [vmem:[%s351 + $0x60] sm:$0xf]
        %v486 = vld [vmem:[%s351 + $0x64] sm:$0xf]
        %v487 = vld [vmem:[%s351 + $0x68] sm:$0xf]
        %v488 = vld [vmem:[%s351 + $0x6c] sm:$0xf]
        %v489 = vld [vmem:[%s351 + $0x70] sm:$0xf]
        %v490 = vld [vmem:[%s351 + $0x74] sm:$0xf]
        %v491 = vld [vmem:[%s351 + $0x78] sm:$0xf]
        %v492 = vld [vmem:[%s351 + $0x7c] sm:$0xf]
        %v493 = vld [vmem:[%s360] sm:$0x1]
        %v494 = vld [vmem:[%s360 + $0x1] sm:$0x1]
        %v495 = vld [vmem:[%s360 + $0x2] sm:$0x1]
        %v496 = vld [vmem:[%s360 + $0x3] sm:$0x1]
        %v497 = vld [vmem:[%s360 + $0x4] sm:$0x1]
        %v498 = vld [vmem:[%s360 + $0x5] sm:$0x1]
        %v499 = vld [vmem:[%s360 + $0x6] sm:$0x1]
        %v500 = vld [vmem:[%s360 + $0x7] sm:$0x1]
        %v501 = vld [vmem:[%s360 + $0x8] sm:$0x1]
        %v502 = vld [vmem:[%s360 + $0x9] sm:$0x1]
        %v503 = vld [vmem:[%s360 + $0xa] sm:$0x1]
        %v504 = vld [vmem:[%s360 + $0xb] sm:$0x1]
        %v505 = vld [vmem:[%s360 + $0xc] sm:$0x1]
        %v506 = vld [vmem:[%s360 + $0xd] sm:$0x1]
        %v507 = vld [vmem:[%s360 + $0xe] sm:$0x1]
        %v508 = vld [vmem:[%s360 + $0xf] sm:$0x1]
        %v509 = vld [vmem:[%s360 + $0x10] sm:$0x1]
        %v510 = vld [vmem:[%s360 + $0x11] sm:$0x1]
        %v511 = vld [vmem:[%s360 + $0x12] sm:$0x1]
        %v512 = vld [vmem:[%s360 + $0x13] sm:$0x1]
        %v513 = vld [vmem:[%s360 + $0x14] sm:$0x1]
        %v514 = vld [vmem:[%s360 + $0x15] sm:$0x1]
        %v515 = vld [vmem:[%s360 + $0x16] sm:$0x1]
        %v516 = vld [vmem:[%s360 + $0x17] sm:$0x1]
        %v517 = vld [vmem:[%s360 + $0x18] sm:$0x1]
        %v518 = vld [vmem:[%s360 + $0x19] sm:$0x1]
        %v519 = vld [vmem:[%s360 + $0x1a] sm:$0x1]
        %v520 = vld [vmem:[%s360 + $0x1b] sm:$0x1]
        %v521 = vld [vmem:[%s360 + $0x1c] sm:$0x1]
        %v522 = vld [vmem:[%s360 + $0x1d] sm:$0x1]
        %v523 = vld [vmem:[%s360 + $0x1e] sm:$0x1]
        %v524 = vld [vmem:[%s360 + $0x1f] sm:$0x1]
        %v525 = vld [vmem:[%s5] sm:$0xf]
        %v526 = vld [vmem:[%s5 + $0x4] sm:$0xf]
        %v527 = vld [vmem:[%s5 + $0x8] sm:$0xf]
        %v528 = vld [vmem:[%s5 + $0xc] sm:$0xf]
        %v529 = vld [vmem:[%s5 + $0x10] sm:$0xf]
        %v530 = vld [vmem:[%s5 + $0x14] sm:$0xf]
        %v531 = vld [vmem:[%s5 + $0x18] sm:$0xf]
        %v532 = vld [vmem:[%s5 + $0x1c] sm:$0xf]
        %v533 = vld [vmem:[%s5 + $0x20] sm:$0xf]
        %v534 = vld [vmem:[%s5 + $0x24] sm:$0xf]
        %v535 = vld [vmem:[%s5 + $0x28] sm:$0xf]
        %v536 = vld [vmem:[%s5 + $0x2c] sm:$0xf]
        %v537 = vld [vmem:[%s5 + $0x30] sm:$0xf]
        %v538 = vld [vmem:[%s5 + $0x34] sm:$0xf]
        %v539 = vld [vmem:[%s5 + $0x38] sm:$0xf]
        %v540 = vld [vmem:[%s5 + $0x3c] sm:$0xf]
        %541 = vmatprep.subr.bf16.mxu0 0
        %542 = vmatpush1.bf16.xpose.msra.mxu0 %v429
        %543 = vmatprep.subr.bf16.mxu0 0
        %544 = vmatpush1.bf16.xpose.msra.mxu0 0
        %545 = vmatprep.subr.bf16.mxu0 0
        %546 = vmatpush1.bf16.xpose.msra.mxu0 0
        %547 = vmatprep.subr.bf16.mxu0 0
        %548 = vmatpush1.bf16.xpose.msra.mxu0 0
        %549 = vmatprep.subr.bf16.mxu0 0
        %550 = vmatpush1.bf16.xpose.msra.mxu0 0
        %551 = vmatprep.subr.bf16.mxu0 0
        %552 = vmatpush1.bf16.xpose.msra.mxu0 0
        %553 = vmatprep.subr.bf16.mxu0 0
        %554 = vmatpush1.bf16.xpose.msra.mxu0 0
        %555 = vmatprep.subr.bf16.mxu0 0
        %556 = vmatpush1.bf16.xpose.msra.mxu0 0
        %557 = vmatprep.subr.bf16.mxu0 0
        %558 = vmatpush1.bf16.xpose.msra.mxu0 0
        %559 = vmatprep.subr.bf16.mxu0 0
        %560 = vmatpush1.bf16.xpose.msra.mxu0 0
        %561 = vmatprep.subr.bf16.mxu0 0
        %562 = vmatpush1.bf16.xpose.msra.mxu0 0
        %563 = vmatprep.subr.bf16.mxu0 0
        %564 = vmatpush1.bf16.xpose.msra.mxu0 0
        %565 = vmatprep.subr.bf16.mxu0 0
        %566 = vmatpush1.bf16.xpose.msra.mxu0 0
        %567 = vmatprep.subr.bf16.mxu0 0
        %568 = vmatpush1.bf16.xpose.msra.mxu0 0
        %569 = vmatprep.subr.bf16.mxu0 0
        %570 = vmatpush1.bf16.xpose.msra.mxu0 0
        %571 = vmatprep.subr.bf16.mxu0 0
        %572 = vmatpush1.bf16.xpose.msra.mxu0 0
        %573 = vmatprep.mubr.bf16.mxu0 0
        %574 = vmatmul.mubr.bf16.gmra.mrb[0].mxu0 %v493
        %v575 = vpop.f32.mrb[0].mxu0
        %v576 = vadd.f32 0.0, %v575
        %v577 = vpop.f32.mrb[0].mxu0
        %v578 = vpop.f32.mrb[0].mxu0
        %v579 = vpop.f32.mrb[0].mxu0
        %580 = vdwg.mxu0
        %581 = vmatprep.subr.bf16.mxu0 0
        %582 = vmatpush1.bf16.xpose.msra.mxu0 %v430
        %583 = vmatprep.subr.bf16.mxu0 0
        %584 = vmatpush1.bf16.xpose.msra.mxu0 0
        %585 = vmatprep.subr.bf16.mxu0 0
        %586 = vmatpush1.bf16.xpose.msra.mxu0 0
        %587 = vmatprep.subr.bf16.mxu0 0
        %588 = vmatpush1.bf16.xpose.msra.mxu0 0
        %589 = vmatprep.subr.bf16.mxu0 0
        %590 = vmatpush1.bf16.xpose.msra.mxu0 0
        %591 = vmatprep.subr.bf16.mxu0 0
        %592 = vmatpush1.bf16.xpose.msra.mxu0 0
        %593 = vmatprep.subr.bf16.mxu0 0
        %594 = vmatpush1.bf16.xpose.msra.mxu0 0
        %595 = vmatprep.subr.bf16.mxu0 0
        %596 = vmatpush1.bf16.xpose.msra.mxu0 0
        %597 = vmatprep.subr.bf16.mxu0 0
        %598 = vmatpush1.bf16.xpose.msra.mxu0 0
        %599 = vmatprep.subr.bf16.mxu0 0
        %600 = vmatpush1.bf16.xpose.msra.mxu0 0
        %601 = vmatprep.subr.bf16.mxu0 0
        %602 = vmatpush1.bf16.xpose.msra.mxu0 0
        %603 = vmatprep.subr.bf16.mxu0 0
        %604 = vmatpush1.bf16.xpose.msra.mxu0 0
        %605 = vmatprep.subr.bf16.mxu0 0
        %606 = vmatpush1.bf16.xpose.msra.mxu0 0
        %607 = vmatprep.subr.bf16.mxu0 0
        %608 = vmatpush1.bf16.xpose.msra.mxu0 0
        %609 = vmatprep.subr.bf16.mxu0 0
        %610 = vmatpush1.bf16.xpose.msra.mxu0 0
        %611 = vmatprep.subr.bf16.mxu0 0
        %612 = vmatpush1.bf16.xpose.msra.mxu0 0
        %613 = vmatprep.mubr.bf16.mxu0 0
        %614 = vmatmul.mubr.bf16.gmra.mrb[0].mxu0 %v494
        %v615 = vpop.f32.mrb[0].mxu0
        %v616 = vadd.f32 0.0, %v615
        %v617 = vpop.f32.mrb[0].mxu0
        %v618 = vpop.f32.mrb[0].mxu0
        %v619 = vpop.f32.mrb[0].mxu0
        %620 = vdwg.mxu0
        %621 = vmatprep.subr.bf16.mxu0 0
        %622 = vmatpush1.bf16.xpose.msra.mxu0 %v431
        %623 = vmatprep.subr.bf16.mxu0 0
        %624 = vmatpush1.bf16.xpose.msra.mxu0 0
        %625 = vmatprep.subr.bf16.mxu0 0
        %626 = vmatpush1.bf16.xpose.msra.mxu0 0
        %627 = vmatprep.subr.bf16.mxu0 0
        %628 = vmatpush1.bf16.xpose.msra.mxu0 0
        %629 = vmatprep.subr.bf16.mxu0 0
        %630 = vmatpush1.bf16.xpose.msra.mxu0 0
        %631 = vmatprep.subr.bf16.mxu0 0
        %632 = vmatpush1.bf16.xpose.msra.mxu0 0
        %633 = vmatprep.subr.bf16.mxu0 0
        %634 = vmatpush1.bf16.xpose.msra.mxu0 0
        %635 = vmatprep.subr.bf16.mxu0 0
        %636 = vmatpush1.bf16.xpose.msra.mxu0 0
        %637 = vmatprep.subr.bf16.mxu0 0
        %638 = vmatpush1.bf16.xpose.msra.mxu0 0
        %639 = vmatprep.subr.bf16.mxu0 0
        %640 = vmatpush1.bf16.xpose.msra.mxu0 0
        %641 = vmatprep.subr.bf16.mxu0 0
        %642 = vmatpush1.bf16.xpose.msra.mxu0 0
        %643 = vmatprep.subr.bf16.mxu0 0
        %644 = vmatpush1.bf16.xpose.msra.mxu0 0
        %645 = vmatprep.subr.bf16.mxu0 0
        %646 = vmatpush1.bf16.xpose.msra.mxu0 0
        %647 = vmatprep.subr.bf16.mxu0 0
        %648 = vmatpush1.bf16.xpose.msra.mxu0 0
        %649 = vmatprep.subr.bf16.mxu0 0
        %650 = vmatpush1.bf16.xpose.msra.mxu0 0
        %651 = vmatprep.subr.bf16.mxu0 0
        %652 = vmatpush1.bf16.xpose.msra.mxu0 0
        %653 = vmatprep.mubr.bf16.mxu0 0
        %654 = vmatmul.mubr.bf16.gmra.mrb[0].mxu0 %v495
        %v655 = vpop.f32.mrb[0].mxu0
        %v656 = vadd.f32 0.0, %v655
        %v657 = vpop.f32.mrb[0].mxu0
        %v658 = vpop.f32.mrb[0].mxu0
        %v659 = vpop.f32.mrb[0].mxu0
        %660 = vdwg.mxu0
        %661 = vmatprep.subr.bf16.mxu0 0
        %662 = vmatpush1.bf16.xpose.msra.mxu0 %v432
        %663 = vmatprep.subr.bf16.mxu0 0
        %664 = vmatpush1.bf16.xpose.msra.mxu0 0
        %665 = vmatprep.subr.bf16.mxu0 0
        %666 = vmatpush1.bf16.xpose.msra.mxu0 0
        %667 = vmatprep.subr.bf16.mxu0 0
        %668 = vmatpush1.bf16.xpose.msra.mxu0 0
        %669 = vmatprep.subr.bf16.mxu0 0
        %670 = vmatpush1.bf16.xpose.msra.mxu0 0
        %671 = vmatprep.subr.bf16.mxu0 0
        %672 = vmatpush1.bf16.xpose.msra.mxu0 0
        %673 = vmatprep.subr.bf16.mxu0 0
        %674 = vmatpush1.bf16.xpose.msra.mxu0 0
        %675 = vmatprep.subr.bf16.mxu0 0
        %676 = vmatpush1.bf16.xpose.msra.mxu0 0
        %677 = vmatprep.subr.bf16.mxu0 0
        %678 = vmatpush1.bf16.xpose.msra.mxu0 0
        %679 = vmatprep.subr.bf16.mxu0 0
        %680 = vmatpush1.bf16.xpose.msra.mxu0 0
        %681 = vmatprep.subr.bf16.mxu0 0
        %682 = vmatpush1.bf16.xpose.msra.mxu0 0
        %683 = vmatprep.subr.bf16.mxu0 0
        %684 = vmatpush1.bf16.xpose.msra.mxu0 0
        %685 = vmatprep.subr.bf16.mxu0 0
        %686 = vmatpush1.bf16.xpose.msra.mxu0 0
        %687 = vmatprep.subr.bf16.mxu0 0
        %688 = vmatpush1.bf16.xpose.msra.mxu0 0
        %689 = vmatprep.subr.bf16.mxu0 0
        %690 = vmatpush1.bf16.xpose.msra.mxu0 0
        %691 = vmatprep.subr.bf16.mxu0 0
        %692 = vmatpush1.bf16.xpose.msra.mxu0 0
        %693 = vmatprep.mubr.bf16.mxu0 0
        %694 = vmatmul.mubr.bf16.gmra.mrb[0].mxu0 %v496
        %v695 = vpop.f32.mrb[0].mxu0
        %v696 = vadd.f32 0.0, %v695
        %v697 = vpop.f32.mrb[0].mxu0
        %v698 = vpop.f32.mrb[0].mxu0
        %v699 = vpop.f32.mrb[0].mxu0
        %700 = vdwg.mxu0
        %701 = vmatprep.subr.bf16.mxu0 0
        %702 = vmatpush1.bf16.xpose.msra.mxu0 %v433
        %703 = vmatprep.subr.bf16.mxu0 0
        %704 = vmatpush1.bf16.xpose.msra.mxu0 0
        %705 = vmatprep.subr.bf16.mxu0 0
        %706 = vmatpush1.bf16.xpose.msra.mxu0 0
        %707 = vmatprep.subr.bf16.mxu0 0
        %708 = vmatpush1.bf16.xpose.msra.mxu0 0
        %709 = vmatprep.subr.bf16.mxu0 0
        %710 = vmatpush1.bf16.xpose.msra.mxu0 0
        %711 = vmatprep.subr.bf16.mxu0 0
        %712 = vmatpush1.bf16.xpose.msra.mxu0 0
        %713 = vmatprep.subr.bf16.mxu0 0
        %714 = vmatpush1.bf16.xpose.msra.mxu0 0
        %715 = vmatprep.subr.bf16.mxu0 0
        %716 = vmatpush1.bf16.xpose.msra.mxu0 0
        %717 = vmatprep.subr.bf16.mxu0 0
        %718 = vmatpush1.bf16.xpose.msra.mxu0 0
        %719 = vmatprep.subr.bf16.mxu0 0
        %720 = vmatpush1.bf16.xpose.msra.mxu0 0
        %721 = vmatprep.subr.bf16.mxu0 0
        %722 = vmatpush1.bf16.xpose.msra.mxu0 0
        %723 = vmatprep.subr.bf16.mxu0 0
        %724 = vmatpush1.bf16.xpose.msra.mxu0 0
        %725 = vmatprep.subr.bf16.mxu0 0
        %726 = vmatpush1.bf16.xpose.msra.mxu0 0
        %727 = vmatprep.subr.bf16.mxu0 0
        %728 = vmatpush1.bf16.xpose.msra.mxu0 0
        %729 = vmatprep.subr.bf16.mxu0 0
        %730 = vmatpush1.bf16.xpose.msra.mxu0 0
        %731 = vmatprep.subr.bf16.mxu0 0
        %732 = vmatpush1.bf16.xpose.msra.mxu0 0
        %733 = vmatprep.mubr.bf16.mxu0 0
        %734 = vmatmul.mubr.bf16.gmra.mrb[0].mxu0 %v497
        %v735 = vpop.f32.mrb[0].mxu0
        %v736 = vadd.f32 0.0, %v735
        %v737 = vpop.f32.mrb[0].mxu0
        %v738 = vpop.f32.mrb[0].mxu0
        %v739 = vpop.f32.mrb[0].mxu0
        %740 = vdwg.mxu0
        %741 = vmatprep.subr.bf16.mxu0 0
        %742 = vmatpush1.bf16.xpose.msra.mxu0 %v434
        %743 = vmatprep.subr.bf16.mxu0 0
        %744 = vmatpush1.bf16.xpose.msra.mxu0 0
        %745 = vmatprep.subr.bf16.mxu0 0
        %746 = vmatpush1.bf16.xpose.msra.mxu0 0
        %747 = vmatprep.subr.bf16.mxu0 0
        %748 = vmatpush1.bf16.xpose.msra.mxu0 0
        %749 = vmatprep.subr.bf16.mxu0 0
        %750 = vmatpush1.bf16.xpose.msra.mxu0 0
        %751 = vmatprep.subr.bf16.mxu0 0
        %752 = vmatpush1.bf16.xpose.msra.mxu0 0
        %753 = vmatprep.subr.bf16.mxu0 0
        %754 = vmatpush1.bf16.xpose.msra.mxu0 0
        %755 = vmatprep.subr.bf16.mxu0 0
        %756 = vmatpush1.bf16.xpose.msra.mxu0 0
        %757 = vmatprep.subr.bf16.mxu0 0
        %758 = vmatpush1.bf16.xpose.msra.mxu0 0
        %759 = vmatprep.subr.bf16.mxu0 0
        %760 = vmatpush1.bf16.xpose.msra.mxu0 0
        %761 = vmatprep.subr.bf16.mxu0 0
        %762 = vmatpush1.bf16.xpose.msra.mxu0 0
        %763 = vmatprep.subr.bf16.mxu0 0
        %764 = vmatpush1.bf16.xpose.msra.mxu0 0
        %765 = vmatprep.subr.bf16.mxu0 0
        %766 = vmatpush1.bf16.xpose.msra.mxu0 0
        %767 = vmatprep.subr.bf16.mxu0 0
        %768 = vmatpush1.bf16.xpose.msra.mxu0 0
        %769 = vmatprep.subr.bf16.mxu0 0
        %770 = vmatpush1.bf16.xpose.msra.mxu0 0
        %771 = vmatprep.subr.bf16.mxu0 0
        %772 = vmatpush1.bf16.xpose.msra.mxu0 0
        %773 = vmatprep.mubr.bf16.mxu0 0
        %774 = vmatmul.mubr.bf16.gmra.mrb[0].mxu0 %v498
        %v775 = vpop.f32.mrb[0].mxu0
        %v776 = vadd.f32 0.0, %v775
        %v777 = vpop.f32.mrb[0].mxu0
        %v778 = vpop.f32.mrb[0].mxu0
        %v779 = vpop.f32.mrb[0].mxu0
        %780 = vdwg.mxu0
        %781 = vmatprep.subr.bf16.mxu0 0
        %782 = vmatpush1.bf16.xpose.msra.mxu0 %v435
        %783 = vmatprep.subr.bf16.mxu0 0
        %784 = vmatpush1.bf16.xpose.msra.mxu0 0
        %785 = vmatprep.subr.bf16.mxu0 0
        %786 = vmatpush1.bf16.xpose.msra.mxu0 0
        %787 = vmatprep.subr.bf16.mxu0 0
        %788 = vmatpush1.bf16.xpose.msra.mxu0 0
        %789 = vmatprep.subr.bf16.mxu0 0
        %790 = vmatpush1.bf16.xpose.msra.mxu0 0
        %791 = vmatprep.subr.bf16.mxu0 0
        %792 = vmatpush1.bf16.xpose.msra.mxu0 0
        %793 = vmatprep.subr.bf16.mxu0 0
        %794 = vmatpush1.bf16.xpose.msra.mxu0 0
        %795 = vmatprep.subr.bf16.mxu0 0
        %796 = vmatpush1.bf16.xpose.msra.mxu0 0
        %797 = vmatprep.subr.bf16.mxu0 0
        %798 = vmatpush1.bf16.xpose.msra.mxu0 0
        %799 = vmatprep.subr.bf16.mxu0 0
        %800 = vmatpush1.bf16.xpose.msra.mxu0 0
        %801 = vmatprep.subr.bf16.mxu0 0
        %802 = vmatpush1.bf16.xpose.msra.mxu0 0
        %803 = vmatprep.subr.bf16.mxu0 0
        %804 = vmatpush1.bf16.xpose.msra.mxu0 0
        %805 = vmatprep.subr.bf16.mxu0 0
        %806 = vmatpush1.bf16.xpose.msra.mxu0 0
        %807 = vmatprep.subr.bf16.mxu0 0
        %808 = vmatpush1.bf16.xpose.msra.mxu0 0
        %809 = vmatprep.subr.bf16.mxu0 0
        %810 = vmatpush1.bf16.xpose.msra.mxu0 0
        %811 = vmatprep.subr.bf16.mxu0 0
        %812 = vmatpush1.bf16.xpose.msra.mxu0 0
        %813 = vmatprep.mubr.bf16.mxu0 0
        %814 = vmatmul.mubr.bf16.gmra.mrb[0].mxu0 %v499
        %v815 = vpop.f32.mrb[0].mxu0
        %v816 = vadd.f32 0.0, %v815
        %v817 = vpop.f32.mrb[0].mxu0
        %v818 = vpop.f32.mrb[0].mxu0
        %v819 = vpop.f32.mrb[0].mxu0
        %820 = vdwg.mxu0
        %821 = vmatprep.subr.bf16.mxu0 0
        %822 = vmatpush1.bf16.xpose.msra.mxu0 %v436
        %823 = vmatprep.subr.bf16.mxu0 0
        %824 = vmatpush1.bf16.xpose.msra.mxu0 0
        %825 = vmatprep.subr.bf16.mxu0 0
        %826 = vmatpush1.bf16.xpose.msra.mxu0 0
        %827 = vmatprep.subr.bf16.mxu0 0
        %828 = vmatpush1.bf16.xpose.msra.mxu0 0
        %829 = vmatprep.subr.bf16.mxu0 0
        %830 = vmatpush1.bf16.xpose.msra.mxu0 0
        %831 = vmatprep.subr.bf16.mxu0 0
        %832 = vmatpush1.bf16.xpose.msra.mxu0 0
        %833 = vmatprep.subr.bf16.mxu0 0
        %834 = vmatpush1.bf16.xpose.msra.mxu0 0
        %835 = vmatprep.subr.bf16.mxu0 0
        %836 = vmatpush1.bf16.xpose.msra.mxu0 0
        %837 = vmatprep.subr.bf16.mxu0 0
        %838 = vmatpush1.bf16.xpose.msra.mxu0 0
        %839 = vmatprep.subr.bf16.mxu0 0
        %840 = vmatpush1.bf16.xpose.msra.mxu0 0
        %841 = vmatprep.subr.bf16.mxu0 0
        %842 = vmatpush1.bf16.xpose.msra.mxu0 0
        %843 = vmatprep.subr.bf16.mxu0 0
        %844 = vmatpush1.bf16.xpose.msra.mxu0 0
        %845 = vmatprep.subr.bf16.mxu0 0
        %846 = vmatpush1.bf16.xpose.msra.mxu0 0
        %847 = vmatprep.subr.bf16.mxu0 0
        %848 = vmatpush1.bf16.xpose.msra.mxu0 0
        %849 = vmatprep.subr.bf16.mxu0 0
        %850 = vmatpush1.bf16.xpose.msra.mxu0 0
        %851 = vmatprep.subr.bf16.mxu0 0
        %852 = vmatpush1.bf16.xpose.msra.mxu0 0
        %853 = vmatprep.mubr.bf16.mxu0 0
        %854 = vmatmul.mubr.bf16.gmra.mrb[0].mxu0 %v500
        %v855 = vpop.f32.mrb[0].mxu0
        %v856 = vadd.f32 0.0, %v855
        %v857 = vpop.f32.mrb[0].mxu0
        %v858 = vpop.f32.mrb[0].mxu0
        %v859 = vpop.f32.mrb[0].mxu0
        %860 = vdwg.mxu0
        %861 = vmatprep.subr.bf16.mxu0 0
        %862 = vmatpush1.bf16.xpose.msra.mxu0 %v437
        %863 = vmatprep.subr.bf16.mxu0 0
        %864 = vmatpush1.bf16.xpose.msra.mxu0 0
        %865 = vmatprep.subr.bf16.mxu0 0
        %866 = vmatpush1.bf16.xpose.msra.mxu0 0
        %867 = vmatprep.subr.bf16.mxu0 0
        %868 = vmatpush1.bf16.xpose.msra.mxu0 0
        %869 = vmatprep.subr.bf16.mxu0 0
        %870 = vmatpush1.bf16.xpose.msra.mxu0 0
        %871 = vmatprep.subr.bf16.mxu0 0
        %872 = vmatpush1.bf16.xpose.msra.mxu0 0
        %873 = vmatprep.subr.bf16.mxu0 0
        %874 = vmatpush1.bf16.xpose.msra.mxu0 0
        %875 = vmatprep.subr.bf16.mxu0 0
        %876 = vmatpush1.bf16.xpose.msra.mxu0 0
        %877 = vmatprep.subr.bf16.mxu0 0
        %878 = vmatpush1.bf16.xpose.msra.mxu0 0
        %879 = vmatprep.subr.bf16.mxu0 0
        %880 = vmatpush1.bf16.xpose.msra.mxu0 0
        %881 = vmatprep.subr.bf16.mxu0 0
        %882 = vmatpush1.bf16.xpose.msra.mxu0 0
        %883 = vmatprep.subr.bf16.mxu0 0
        %884 = vmatpush1.bf16.xpose.msra.mxu0 0
        %885 = vmatprep.subr.bf16.mxu0 0
        %886 = vmatpush1.bf16.xpose.msra.mxu0 0
        %887 = vmatprep.subr.bf16.mxu0 0
        %888 = vmatpush1.bf16.xpose.msra.mxu0 0
        %889 = vmatprep.subr.bf16.mxu0 0
        %890 = vmatpush1.bf16.xpose.msra.mxu0 0
        %891 = vmatprep.subr.bf16.mxu0 0
        %892 = vmatpush1.bf16.xpose.msra.mxu0 0
        %893 = vmatprep.mubr.bf16.mxu0 0
        %894 = vmatmul.mubr.bf16.gmra.mrb[0].mxu0 %v501
        %v895 = vpop.f32.mrb[0].mxu0
        %v896 = vadd.f32 0.0, %v895
        %v897 = vpop.f32.mrb[0].mxu0
        %v898 = vpop.f32.mrb[0].mxu0
        %v899 = vpop.f32.mrb[0].mxu0
        %900 = vdwg.mxu0
        %901 = vmatprep.subr.bf16.mxu0 0
        %902 = vmatpush1.bf16.xpose.msra.mxu0 %v438
        %903 = vmatprep.subr.bf16.mxu0 0
        %904 = vmatpush1.bf16.xpose.msra.mxu0 0
        %905 = vmatprep.subr.bf16.mxu0 0
        %906 = vmatpush1.bf16.xpose.msra.mxu0 0
        %907 = vmatprep.subr.bf16.mxu0 0
        %908 = vmatpush1.bf16.xpose.msra.mxu0 0
        %909 = vmatprep.subr.bf16.mxu0 0
        %910 = vmatpush1.bf16.xpose.msra.mxu0 0
        %911 = vmatprep.subr.bf16.mxu0 0
        %912 = vmatpush1.bf16.xpose.msra.mxu0 0
        %913 = vmatprep.subr.bf16.mxu0 0
        %914 = vmatpush1.bf16.xpose.msra.mxu0 0
        %915 = vmatprep.subr.bf16.mxu0 0
        %916 = vmatpush1.bf16.xpose.msra.mxu0 0
        %917 = vmatprep.subr.bf16.mxu0 0
        %918 = vmatpush1.bf16.xpose.msra.mxu0 0
        %919 = vmatprep.subr.bf16.mxu0 0
        %920 = vmatpush1.bf16.xpose.msra.mxu0 0
        %921 = vmatprep.subr.bf16.mxu0 0
        %922 = vmatpush1.bf16.xpose.msra.mxu0 0
        %923 = vmatprep.subr.bf16.mxu0 0
        %924 = vmatpush1.bf16.xpose.msra.mxu0 0
        %925 = vmatprep.subr.bf16.mxu0 0
        %926 = vmatpush1.bf16.xpose.msra.mxu0 0
        %927 = vmatprep.subr.bf16.mxu0 0
        %928 = vmatpush1.bf16.xpose.msra.mxu0 0
        %929 = vmatprep.subr.bf16.mxu0 0
        %930 = vmatpush1.bf16.xpose.msra.mxu0 0
        %931 = vmatprep.subr.bf16.mxu0 0
        %932 = vmatpush1.bf16.xpose.msra.mxu0 0
        %933 = vmatprep.mubr.bf16.mxu0 0
        %934 = vmatmul.mubr.bf16.gmra.mrb[0].mxu0 %v502
        %v935 = vpop.f32.mrb[0].mxu0
        %v936 = vadd.f32 0.0, %v935
        %v937 = vpop.f32.mrb[0].mxu0
        %v938 = vpop.f32.mrb[0].mxu0
        %v939 = vpop.f32.mrb[0].mxu0
        %940 = vdwg.mxu0
        %941 = vmatprep.subr.bf16.mxu0 0
        %942 = vmatpush1.bf16.xpose.msra.mxu0 %v439
        %943 = vmatprep.subr.bf16.mxu0 0
        %944 = vmatpush1.bf16.xpose.msra.mxu0 0
        %945 = vmatprep.subr.bf16.mxu0 0
        %946 = vmatpush1.bf16.xpose.msra.mxu0 0
        %947 = vmatprep.subr.bf16.mxu0 0
        %948 = vmatpush1.bf16.xpose.msra.mxu0 0
        %949 = vmatprep.subr.bf16.mxu0 0
        %950 = vmatpush1.bf16.xpose.msra.mxu0 0
        %951 = vmatprep.subr.bf16.mxu0 0
        %952 = vmatpush1.bf16.xpose.msra.mxu0 0
        %953 = vmatprep.subr.bf16.mxu0 0
        %954 = vmatpush1.bf16.xpose.msra.mxu0 0
        %955 = vmatprep.subr.bf16.mxu0 0
        %956 = vmatpush1.bf16.xpose.msra.mxu0 0
        %957 = vmatprep.subr.bf16.mxu0 0
        %958 = vmatpush1.bf16.xpose.msra.mxu0 0
        %959 = vmatprep.subr.bf16.mxu0 0
        %960 = vmatpush1.bf16.xpose.msra.mxu0 0
        %961 = vmatprep.subr.bf16.mxu0 0
        %962 = vmatpush1.bf16.xpose.msra.mxu0 0
        %963 = vmatprep.subr.bf16.mxu0 0
        %964 = vmatpush1.bf16.xpose.msra.mxu0 0
        %965 = vmatprep.subr.bf16.mxu0 0
        %966 = vmatpush1.bf16.xpose.msra.mxu0 0
        %967 = vmatprep.subr.bf16.mxu0 0
        %968 = vmatpush1.bf16.xpose.msra.mxu0 0
        %969 = vmatprep.subr.bf16.mxu0 0
        %970 = vmatpush1.bf16.xpose.msra.mxu0 0
        %971 = vmatprep.subr.bf16.mxu0 0
        %972 = vmatpush1.bf16.xpose.msra.mxu0 0
        %973 = vmatprep.mubr.bf16.mxu0 0
        %974 = vmatmul.mubr.bf16.gmra.mrb[0].mxu0 %v503
        %v975 = vpop.f32.mrb[0].mxu0
        %v976 = vadd.f32 0.0, %v975
        %v977 = vpop.f32.mrb[0].mxu0
        %v978 = vpop.f32.mrb[0].mxu0
        %v979 = vpop.f32.mrb[0].mxu0
        %980 = vdwg.mxu0
        %981 = vmatprep.subr.bf16.mxu0 0
        %982 = vmatpush1.bf16.xpose.msra.mxu0 %v440
        %983 = vmatprep.subr.bf16.mxu0 0
        %984 = vmatpush1.bf16.xpose.msra.mxu0 0
        %985 = vmatprep.subr.bf16.mxu0 0
        %986 = vmatpush1.bf16.xpose.msra.mxu0 0
        %987 = vmatprep.subr.bf16.mxu0 0
        %988 = vmatpush1.bf16.xpose.msra.mxu0 0
        %989 = vmatprep.subr.bf16.mxu0 0
        %990 = vmatpush1.bf16.xpose.msra.mxu0 0
        %991 = vmatprep.subr.bf16.mxu0 0
        %992 = vmatpush1.bf16.xpose.msra.mxu0 0
        %993 = vmatprep.subr.bf16.mxu0 0
        %994 = vmatpush1.bf16.xpose.msra.mxu0 0
        %995 = vmatprep.subr.bf16.mxu0 0
        %996 = vmatpush1.bf16.xpose.msra.mxu0 0
        %997 = vmatprep.subr.bf16.mxu0 0
        %998 = vmatpush1.bf16.xpose.msra.mxu0 0
        %999 = vmatprep.subr.bf16.mxu0 0
        %1000 = vmatpush1.bf16.xpose.msra.mxu0 0
        %1001 = vmatprep.subr.bf16.mxu0 0
        %1002 = vmatpush1.bf16.xpose.msra.mxu0 0
        %1003 = vmatprep.subr.bf16.mxu0 0
        %1004 = vmatpush1.bf16.xpose.msra.mxu0 0
        %1005 = vmatprep.subr.bf16.mxu0 0
        %1006 = vmatpush1.bf16.xpose.msra.mxu0 0
        %1007 = vmatprep.subr.bf16.mxu0 0
        %1008 = vmatpush1.bf16.xpose.msra.mxu0 0
        %1009 = vmatprep.subr.bf16.mxu0 0
        %1010 = vmatpush1.bf16.xpose.msra.mxu0 0
        %1011 = vmatprep.subr.bf16.mxu0 0
        %1012 = vmatpush1.bf16.xpose.msra.mxu0 0
        %1013 = vmatprep.mubr.bf16.mxu0 0
        %1014 = vmatmul.mubr.bf16.gmra.mrb[0].mxu0 %v504
        %v1015 = vpop.f32.mrb[0].mxu0
        %v1016 = vadd.f32 0.0, %v1015
        %v1017 = vpop.f32.mrb[0].mxu0
        %v1018 = vpop.f32.mrb[0].mxu0
        %v1019 = vpop.f32.mrb[0].mxu0
        %1020 = vdwg.mxu0
        %1021 = vmatprep.subr.bf16.mxu0 0
        %1022 = vmatpush1.bf16.xpose.msra.mxu0 %v441
        %1023 = vmatprep.subr.bf16.mxu0 0
        %1024 = vmatpush1.bf16.xpose.msra.mxu0 0
        %1025 = vmatprep.subr.bf16.mxu0 0
        %1026 = vmatpush1.bf16.xpose.msra.mxu0 0
        %1027 = vmatprep.subr.bf16.mxu0 0
        %1028 = vmatpush1.bf16.xpose.msra.mxu0 0
        %1029 = vmatprep.subr.bf16.mxu0 0
        %1030 = vmatpush1.bf16.xpose.msra.mxu0 0
        %1031 = vmatprep.subr.bf16.mxu0 0
        %1032 = vmatpush1.bf16.xpose.msra.mxu0 0
        %1033 = vmatprep.subr.bf16.mxu0 0
        %1034 = vmatpush1.bf16.xpose.msra.mxu0 0
        %1035 = vmatprep.subr.bf16.mxu0 0
        %1036 = vmatpush1.bf16.xpose.msra.mxu0 0
        %1037 = vmatprep.subr.bf16.mxu0 0
        %1038 = vmatpush1.bf16.xpose.msra.mxu0 0
        %1039 = vmatprep.subr.bf16.mxu0 0
        %1040 = vmatpush1.bf16.xpose.msra.mxu0 0
        %1041 = vmatprep.subr.bf16.mxu0 0
        %1042 = vmatpush1.bf16.xpose.msra.mxu0 0
        %1043 = vmatprep.subr.bf16.mxu0 0
        %1044 = vmatpush1.bf16.xpose.msra.mxu0 0
        %1045 = vmatprep.subr.bf16.mxu0 0
        %1046 = vmatpush1.bf16.xpose.msra.mxu0 0
        %1047 = vmatprep.subr.bf16.mxu0 0
        %1048 = vmatpush1.bf16.xpose.msra.mxu0 0
        %1049 = vmatprep.subr.bf16.mxu0 0
        %1050 = vmatpush1.bf16.xpose.msra.mxu0 0
        %1051 = vmatprep.subr.bf16.mxu0 0
        %1052 = vmatpush1.bf16.xpose.msra.mxu0 0
        %1053 = vmatprep.mubr.bf16.mxu0 0
        %1054 = vmatmul.mubr.bf16.gmra.mrb[0].mxu0 %v505
        %v1055 = vpop.f32.mrb[0].mxu0
        %v1056 = vadd.f32 0.0, %v1055
        %v1057 = vpop.f32.mrb[0].mxu0
        %v1058 = vpop.f32.mrb[0].mxu0
        %v1059 = vpop.f32.mrb[0].mxu0
        %1060 = vdwg.mxu0
        %1061 = vmatprep.subr.bf16.mxu0 0
        %1062 = vmatpush1.bf16.xpose.msra.mxu0 %v442
        %1063 = vmatprep.subr.bf16.mxu0 0
        %1064 = vmatpush1.bf16.xpose.msra.mxu0 0
        %1065 = vmatprep.subr.bf16.mxu0 0
        %1066 = vmatpush1.bf16.xpose.msra.mxu0 0
        %1067 = vmatprep.subr.bf16.mxu0 0
        %1068 = vmatpush1.bf16.xpose.msra.mxu0 0
        %1069 = vmatprep.subr.bf16.mxu0 0
        %1070 = vmatpush1.bf16.xpose.msra.mxu0 0
        %1071 = vmatprep.subr.bf16.mxu0 0
        %1072 = vmatpush1.bf16.xpose.msra.mxu0 0
        %1073 = vmatprep.subr.bf16.mxu0 0
        %1074 = vmatpush1.bf16.xpose.msra.mxu0 0
        %1075 = vmatprep.subr.bf16.mxu0 0
        %1076 = vmatpush1.bf16.xpose.msra.mxu0 0
        %1077 = vmatprep.subr.bf16.mxu0 0
        %1078 = vmatpush1.bf16.xpose.msra.mxu0 0
        %1079 = vmatprep.subr.bf16.mxu0 0
        %1080 = vmatpush1.bf16.xpose.msra.mxu0 0
        %1081 = vmatprep.subr.bf16.mxu0 0
        %1082 = vmatpush1.bf16.xpose.msra.mxu0 0
        %1083 = vmatprep.subr.bf16.mxu0 0
        %1084 = vmatpush1.bf16.xpose.msra.mxu0 0
        %1085 = vmatprep.subr.bf16.mxu0 0
        %1086 = vmatpush1.bf16.xpose.msra.mxu0 0
        %1087 = vmatprep.subr.bf16.mxu0 0
        %1088 = vmatpush1.bf16.xpose.msra.mxu0 0
        %1089 = vmatprep.subr.bf16.mxu0 0
        %1090 = vmatpush1.bf16.xpose.msra.mxu0 0
        %1091 = vmatprep.subr.bf16.mxu0 0
        %1092 = vmatpush1.bf16.xpose.msra.mxu0 0
        %1093 = vmatprep.mubr.bf16.mxu0 0
        %1094 = vmatmul.mubr.bf16.gmra.mrb[0].mxu0 %v506
        %v1095 = vpop.f32.mrb[0].mxu0
        %v1096 = vadd.f32 0.0, %v1095
        %v1097 = vpop.f32.mrb[0].mxu0
        %v1098 = vpop.f32.mrb[0].mxu0
        %v1099 = vpop.f32.mrb[0].mxu0
        %1100 = vdwg.mxu0
        %1101 = vmatprep.subr.bf16.mxu0 0
        %1102 = vmatpush1.bf16.xpose.msra.mxu0 %v443
        %1103 = vmatprep.subr.bf16.mxu0 0
        %1104 = vmatpush1.bf16.xpose.msra.mxu0 0
        %1105 = vmatprep.subr.bf16.mxu0 0
        %1106 = vmatpush1.bf16.xpose.msra.mxu0 0
        %1107 = vmatprep.subr.bf16.mxu0 0
        %1108 = vmatpush1.bf16.xpose.msra.mxu0 0
        %1109 = vmatprep.subr.bf16.mxu0 0
        %1110 = vmatpush1.bf16.xpose.msra.mxu0 0
        %1111 = vmatprep.subr.bf16.mxu0 0
        %1112 = vmatpush1.bf16.xpose.msra.mxu0 0
        %1113 = vmatprep.subr.bf16.mxu0 0
        %1114 = vmatpush1.bf16.xpose.msra.mxu0 0
        %1115 = vmatprep.subr.bf16.mxu0 0
        %1116 = vmatpush1.bf16.xpose.msra.mxu0 0
        %1117 = vmatprep.subr.bf16.mxu0 0
        %1118 = vmatpush1.bf16.xpose.msra.mxu0 0
        %1119 = vmatprep.subr.bf16.mxu0 0
        %1120 = vmatpush1.bf16.xpose.msra.mxu0 0
        %1121 = vmatprep.subr.bf16.mxu0 0
        %1122 = vmatpush1.bf16.xpose.msra.mxu0 0
        %1123 = vmatprep.subr.bf16.mxu0 0
        %1124 = vmatpush1.bf16.xpose.msra.mxu0 0
        %1125 = vmatprep.subr.bf16.mxu0 0
        %1126 = vmatpush1.bf16.xpose.msra.mxu0 0
        %1127 = vmatprep.subr.bf16.mxu0 0
        %1128 = vmatpush1.bf16.xpose.msra.mxu0 0
        %1129 = vmatprep.subr.bf16.mxu0 0
        %1130 = vmatpush1.bf16.xpose.msra.mxu0 0
        %1131 = vmatprep.subr.bf16.mxu0 0
        %1132 = vmatpush1.bf16.xpose.msra.mxu0 0
        %1133 = vmatprep.mubr.bf16.mxu0 0
        %1134 = vmatmul.mubr.bf16.gmra.mrb[0].mxu0 %v507
        %v1135 = vpop.f32.mrb[0].mxu0
        %v1136 = vadd.f32 0.0, %v1135
        %v1137 = vpop.f32.mrb[0].mxu0
        %v1138 = vpop.f32.mrb[0].mxu0
        %v1139 = vpop.f32.mrb[0].mxu0
        %1140 = vdwg.mxu0
        %1141 = vmatprep.subr.bf16.mxu0 0
        %1142 = vmatpush1.bf16.xpose.msra.mxu0 %v444
        %1143 = vmatprep.subr.bf16.mxu0 0
        %1144 = vmatpush1.bf16.xpose.msra.mxu0 0
        %1145 = vmatprep.subr.bf16.mxu0 0
        %1146 = vmatpush1.bf16.xpose.msra.mxu0 0
        %1147 = vmatprep.subr.bf16.mxu0 0
        %1148 = vmatpush1.bf16.xpose.msra.mxu0 0
        %1149 = vmatprep.subr.bf16.mxu0 0
        %1150 = vmatpush1.bf16.xpose.msra.mxu0 0
        %1151 = vmatprep.subr.bf16.mxu0 0
        %1152 = vmatpush1.bf16.xpose.msra.mxu0 0
        %1153 = vmatprep.subr.bf16.mxu0 0
        %1154 = vmatpush1.bf16.xpose.msra.mxu0 0
        %1155 = vmatprep.subr.bf16.mxu0 0
        %1156 = vmatpush1.bf16.xpose.msra.mxu0 0
        %1157 = vmatprep.subr.bf16.mxu0 0
        %1158 = vmatpush1.bf16.xpose.msra.mxu0 0
        %1159 = vmatprep.subr.bf16.mxu0 0
        %1160 = vmatpush1.bf16.xpose.msra.mxu0 0
        %1161 = vmatprep.subr.bf16.mxu0 0
        %1162 = vmatpush1.bf16.xpose.msra.mxu0 0
        %1163 = vmatprep.subr.bf16.mxu0 0
        %1164 = vmatpush1.bf16.xpose.msra.mxu0 0
        %1165 = vmatprep.subr.bf16.mxu0 0
        %1166 = vmatpush1.bf16.xpose.msra.mxu0 0
        %1167 = vmatprep.subr.bf16.mxu0 0
        %1168 = vmatpush1.bf16.xpose.msra.mxu0 0
        %1169 = vmatprep.subr.bf16.mxu0 0
        %1170 = vmatpush1.bf16.xpose.msra.mxu0 0
        %1171 = vmatprep.subr.bf16.mxu0 0
        %1172 = vmatpush1.bf16.xpose.msra.mxu0 0
        %1173 = vmatprep.mubr.bf16.mxu0 0
        %1174 = vmatmul.mubr.bf16.gmra.mrb[0].mxu0 %v508
        %v1175 = vpop.f32.mrb[0].mxu0
        %v1176 = vadd.f32 0.0, %v1175
        %v1177 = vpop.f32.mrb[0].mxu0
        %v1178 = vpop.f32.mrb[0].mxu0
        %v1179 = vpop.f32.mrb[0].mxu0
        %1180 = vdwg.mxu0
        %1181 = vmatprep.subr.bf16.mxu0 0
        %1182 = vmatpush1.bf16.xpose.msra.mxu0 %v445
        %1183 = vmatprep.subr.bf16.mxu0 0
        %1184 = vmatpush1.bf16.xpose.msra.mxu0 0
        %1185 = vmatprep.subr.bf16.mxu0 0
        %1186 = vmatpush1.bf16.xpose.msra.mxu0 0
        %1187 = vmatprep.subr.bf16.mxu0 0
        %1188 = vmatpush1.bf16.xpose.msra.mxu0 0
        %1189 = vmatprep.subr.bf16.mxu0 0
        %1190 = vmatpush1.bf16.xpose.msra.mxu0 0
        %1191 = vmatprep.subr.bf16.mxu0 0
        %1192 = vmatpush1.bf16.xpose.msra.mxu0 0
        %1193 = vmatprep.subr.bf16.mxu0 0
        %1194 = vmatpush1.bf16.xpose.msra.mxu0 0
        %1195 = vmatprep.subr.bf16.mxu0 0
        %1196 = vmatpush1.bf16.xpose.msra.mxu0 0
        %1197 = vmatprep.subr.bf16.mxu0 0
        %1198 = vmatpush1.bf16.xpose.msra.mxu0 0
        %1199 = vmatprep.subr.bf16.mxu0 0
        %1200 = vmatpush1.bf16.xpose.msra.mxu0 0
        %1201 = vmatprep.subr.bf16.mxu0 0
        %1202 = vmatpush1.bf16.xpose.msra.mxu0 0
        %1203 = vmatprep.subr.bf16.mxu0 0
        %1204 = vmatpush1.bf16.xpose.msra.mxu0 0
        %1205 = vmatprep.subr.bf16.mxu0 0
        %1206 = vmatpush1.bf16.xpose.msra.mxu0 0
        %1207 = vmatprep.subr.bf16.mxu0 0
        %1208 = vmatpush1.bf16.xpose.msra.mxu0 0
        %1209 = vmatprep.subr.bf16.mxu0 0
        %1210 = vmatpush1.bf16.xpose.msra.mxu0 0
        %1211 = vmatprep.subr.bf16.mxu0 0
        %1212 = vmatpush1.bf16.xpose.msra.mxu0 0
        %1213 = vmatprep.mubr.bf16.mxu0 0
        %1214 = vmatmul.mubr.bf16.gmra.mrb[0].mxu0 %v509
        %v1215 = vpop.f32.mrb[0].mxu0
        %v1216 = vadd.f32 0.0, %v1215
        %v1217 = vpop.f32.mrb[0].mxu0
        %v1218 = vpop.f32.mrb[0].mxu0
        %v1219 = vpop.f32.mrb[0].mxu0
        %1220 = vdwg.mxu0
        %1221 = vmatprep.subr.bf16.mxu0 0
        %1222 = vmatpush1.bf16.xpose.msra.mxu0 %v446
        %1223 = vmatprep.subr.bf16.mxu0 0
        %1224 = vmatpush1.bf16.xpose.msra.mxu0 0
        %1225 = vmatprep.subr.bf16.mxu0 0
        %1226 = vmatpush1.bf16.xpose.msra.mxu0 0
        %1227 = vmatprep.subr.bf16.mxu0 0
        %1228 = vmatpush1.bf16.xpose.msra.mxu0 0
        %1229 = vmatprep.subr.bf16.mxu0 0
        %1230 = vmatpush1.bf16.xpose.msra.mxu0 0
        %1231 = vmatprep.subr.bf16.mxu0 0
        %1232 = vmatpush1.bf16.xpose.msra.mxu0 0
        %1233 = vmatprep.subr.bf16.mxu0 0
        %1234 = vmatpush1.bf16.xpose.msra.mxu0 0
        %1235 = vmatprep.subr.bf16.mxu0 0
        %1236 = vmatpush1.bf16.xpose.msra.mxu0 0
        %1237 = vmatprep.subr.bf16.mxu0 0
        %1238 = vmatpush1.bf16.xpose.msra.mxu0 0
        %1239 = vmatprep.subr.bf16.mxu0 0
        %1240 = vmatpush1.bf16.xpose.msra.mxu0 0
        %1241 = vmatprep.subr.bf16.mxu0 0
        %1242 = vmatpush1.bf16.xpose.msra.mxu0 0
        %1243 = vmatprep.subr.bf16.mxu0 0
        %1244 = vmatpush1.bf16.xpose.msra.mxu0 0
        %1245 = vmatprep.subr.bf16.mxu0 0
        %1246 = vmatpush1.bf16.xpose.msra.mxu0 0
        %1247 = vmatprep.subr.bf16.mxu0 0
        %1248 = vmatpush1.bf16.xpose.msra.mxu0 0
        %1249 = vmatprep.subr.bf16.mxu0 0
        %1250 = vmatpush1.bf16.xpose.msra.mxu0 0
        %1251 = vmatprep.subr.bf16.mxu0 0
        %1252 = vmatpush1.bf16.xpose.msra.mxu0 0
        %1253 = vmatprep.mubr.bf16.mxu0 0
        %1254 = vmatmul.mubr.bf16.gmra.mrb[0].mxu0 %v510
        %v1255 = vpop.f32.mrb[0].mxu0
        %v1256 = vadd.f32 0.0, %v1255
        %v1257 = vpop.f32.mrb[0].mxu0
        %v1258 = vpop.f32.mrb[0].mxu0
        %v1259 = vpop.f32.mrb[0].mxu0
        %1260 = vdwg.mxu0
        %1261 = vmatprep.subr.bf16.mxu0 0
        %1262 = vmatpush1.bf16.xpose.msra.mxu0 %v447
        %1263 = vmatprep.subr.bf16.mxu0 0
        %1264 = vmatpush1.bf16.xpose.msra.mxu0 0
        %1265 = vmatprep.subr.bf16.mxu0 0
        %1266 = vmatpush1.bf16.xpose.msra.mxu0 0
        %1267 = vmatprep.subr.bf16.mxu0 0
        %1268 = vmatpush1.bf16.xpose.msra.mxu0 0
        %1269 = vmatprep.subr.bf16.mxu0 0
        %1270 = vmatpush1.bf16.xpose.msra.mxu0 0
        %1271 = vmatprep.subr.bf16.mxu0 0
        %1272 = vmatpush1.bf16.xpose.msra.mxu0 0
        %1273 = vmatprep.subr.bf16.mxu0 0
        %1274 = vmatpush1.bf16.xpose.msra.mxu0 0
        %1275 = vmatprep.subr.bf16.mxu0 0
        %1276 = vmatpush1.bf16.xpose.msra.mxu0 0
        %1277 = vmatprep.subr.bf16.mxu0 0
        %1278 = vmatpush1.bf16.xpose.msra.mxu0 0
        %1279 = vmatprep.subr.bf16.mxu0 0
        %1280 = vmatpush1.bf16.xpose.msra.mxu0 0
        %1281 = vmatprep.subr.bf16.mxu0 0
        %1282 = vmatpush1.bf16.xpose.msra.mxu0 0
        %1283 = vmatprep.subr.bf16.mxu0 0
        %1284 = vmatpush1.bf16.xpose.msra.mxu0 0
        %1285 = vmatprep.subr.bf16.mxu0 0
        %1286 = vmatpush1.bf16.xpose.msra.mxu0 0
        %1287 = vmatprep.subr.bf16.mxu0 0
        %1288 = vmatpush1.bf16.xpose.msra.mxu0 0
        %1289 = vmatprep.subr.bf16.mxu0 0
        %1290 = vmatpush1.bf16.xpose.msra.mxu0 0
        %1291 = vmatprep.subr.bf16.mxu0 0
        %1292 = vmatpush1.bf16.xpose.msra.mxu0 0
        %1293 = vmatprep.mubr.bf16.mxu0 0
        %1294 = vmatmul.mubr.bf16.gmra.mrb[0].mxu0 %v511
        %v1295 = vpop.f32.mrb[0].mxu0
        %v1296 = vadd.f32 0.0, %v1295
        %v1297 = vpop.f32.mrb[0].mxu0
        %v1298 = vpop.f32.mrb[0].mxu0
        %v1299 = vpop.f32.mrb[0].mxu0
        %1300 = vdwg.mxu0
        %1301 = vmatprep.subr.bf16.mxu0 0
        %1302 = vmatpush1.bf16.xpose.msra.mxu0 %v448
        %1303 = vmatprep.subr.bf16.mxu0 0
        %1304 = vmatpush1.bf16.xpose.msra.mxu0 0
        %1305 = vmatprep.subr.bf16.mxu0 0
        %1306 = vmatpush1.bf16.xpose.msra.mxu0 0
        %1307 = vmatprep.subr.bf16.mxu0 0
        %1308 = vmatpush1.bf16.xpose.msra.mxu0 0
        %1309 = vmatprep.subr.bf16.mxu0 0
        %1310 = vmatpush1.bf16.xpose.msra.mxu0 0
        %1311 = vmatprep.subr.bf16.mxu0 0
        %1312 = vmatpush1.bf16.xpose.msra.mxu0 0
        %1313 = vmatprep.subr.bf16.mxu0 0
        %1314 = vmatpush1.bf16.xpose.msra.mxu0 0
        %1315 = vmatprep.subr.bf16.mxu0 0
        %1316 = vmatpush1.bf16.xpose.msra.mxu0 0
        %1317 = vmatprep.subr.bf16.mxu0 0
        %1318 = vmatpush1.bf16.xpose.msra.mxu0 0
        %1319 = vmatprep.subr.bf16.mxu0 0
        %1320 = vmatpush1.bf16.xpose.msra.mxu0 0
        %1321 = vmatprep.subr.bf16.mxu0 0
        %1322 = vmatpush1.bf16.xpose.msra.mxu0 0
        %1323 = vmatprep.subr.bf16.mxu0 0
        %1324 = vmatpush1.bf16.xpose.msra.mxu0 0
        %1325 = vmatprep.subr.bf16.mxu0 0
        %1326 = vmatpush1.bf16.xpose.msra.mxu0 0
        %1327 = vmatprep.subr.bf16.mxu0 0
        %1328 = vmatpush1.bf16.xpose.msra.mxu0 0
        %1329 = vmatprep.subr.bf16.mxu0 0
        %1330 = vmatpush1.bf16.xpose.msra.mxu0 0
        %1331 = vmatprep.subr.bf16.mxu0 0
        %1332 = vmatpush1.bf16.xpose.msra.mxu0 0
        %1333 = vmatprep.mubr.bf16.mxu0 0
        %1334 = vmatmul.mubr.bf16.gmra.mrb[0].mxu0 %v512
        %v1335 = vpop.f32.mrb[0].mxu0
        %v1336 = vadd.f32 0.0, %v1335
        %v1337 = vpop.f32.mrb[0].mxu0
        %v1338 = vpop.f32.mrb[0].mxu0
        %v1339 = vpop.f32.mrb[0].mxu0
        %1340 = vdwg.mxu0
        %1341 = vmatprep.subr.bf16.mxu0 0
        %1342 = vmatpush1.bf16.xpose.msra.mxu0 %v449
        %1343 = vmatprep.subr.bf16.mxu0 0
        %1344 = vmatpush1.bf16.xpose.msra.mxu0 0
        %1345 = vmatprep.subr.bf16.mxu0 0
        %1346 = vmatpush1.bf16.xpose.msra.mxu0 0
        %1347 = vmatprep.subr.bf16.mxu0 0
        %1348 = vmatpush1.bf16.xpose.msra.mxu0 0
        %1349 = vmatprep.subr.bf16.mxu0 0
        %1350 = vmatpush1.bf16.xpose.msra.mxu0 0
        %1351 = vmatprep.subr.bf16.mxu0 0
        %1352 = vmatpush1.bf16.xpose.msra.mxu0 0
        %1353 = vmatprep.subr.bf16.mxu0 0
        %1354 = vmatpush1.bf16.xpose.msra.mxu0 0
        %1355 = vmatprep.subr.bf16.mxu0 0
        %1356 = vmatpush1.bf16.xpose.msra.mxu0 0
        %1357 = vmatprep.subr.bf16.mxu0 0
        %1358 = vmatpush1.bf16.xpose.msra.mxu0 0
        %1359 = vmatprep.subr.bf16.mxu0 0
        %1360 = vmatpush1.bf16.xpose.msra.mxu0 0
        %1361 = vmatprep.subr.bf16.mxu0 0
        %1362 = vmatpush1.bf16.xpose.msra.mxu0 0
        %1363 = vmatprep.subr.bf16.mxu0 0
        %1364 = vmatpush1.bf16.xpose.msra.mxu0 0
        %1365 = vmatprep.subr.bf16.mxu0 0
        %1366 = vmatpush1.bf16.xpose.msra.mxu0 0
        %1367 = vmatprep.subr.bf16.mxu0 0
        %1368 = vmatpush1.bf16.xpose.msra.mxu0 0
        %1369 = vmatprep.subr.bf16.mxu0 0
        %1370 = vmatpush1.bf16.xpose.msra.mxu0 0
        %1371 = vmatprep.subr.bf16.mxu0 0
        %1372 = vmatpush1.bf16.xpose.msra.mxu0 0
        %1373 = vmatprep.mubr.bf16.mxu0 0
        %1374 = vmatmul.mubr.bf16.gmra.mrb[0].mxu0 %v513
        %v1375 = vpop.f32.mrb[0].mxu0
        %v1376 = vadd.f32 0.0, %v1375
        %v1377 = vpop.f32.mrb[0].mxu0
        %v1378 = vpop.f32.mrb[0].mxu0
        %v1379 = vpop.f32.mrb[0].mxu0
        %1380 = vdwg.mxu0
        %1381 = vmatprep.subr.bf16.mxu0 0
        %1382 = vmatpush1.bf16.xpose.msra.mxu0 %v450
        %1383 = vmatprep.subr.bf16.mxu0 0
        %1384 = vmatpush1.bf16.xpose.msra.mxu0 0
        %1385 = vmatprep.subr.bf16.mxu0 0
        %1386 = vmatpush1.bf16.xpose.msra.mxu0 0
        %1387 = vmatprep.subr.bf16.mxu0 0
        %1388 = vmatpush1.bf16.xpose.msra.mxu0 0
        %1389 = vmatprep.subr.bf16.mxu0 0
        %1390 = vmatpush1.bf16.xpose.msra.mxu0 0
        %1391 = vmatprep.subr.bf16.mxu0 0
        %1392 = vmatpush1.bf16.xpose.msra.mxu0 0
        %1393 = vmatprep.subr.bf16.mxu0 0
        %1394 = vmatpush1.bf16.xpose.msra.mxu0 0
        %1395 = vmatprep.subr.bf16.mxu0 0
        %1396 = vmatpush1.bf16.xpose.msra.mxu0 0
        %1397 = vmatprep.subr.bf16.mxu0 0
        %1398 = vmatpush1.bf16.xpose.msra.mxu0 0
        %1399 = vmatprep.subr.bf16.mxu0 0
        %1400 = vmatpush1.bf16.xpose.msra.mxu0 0
        %1401 = vmatprep.subr.bf16.mxu0 0
        %1402 = vmatpush1.bf16.xpose.msra.mxu0 0
        %1403 = vmatprep.subr.bf16.mxu0 0
        %1404 = vmatpush1.bf16.xpose.msra.mxu0 0
        %1405 = vmatprep.subr.bf16.mxu0 0
        %1406 = vmatpush1.bf16.xpose.msra.mxu0 0
        %1407 = vmatprep.subr.bf16.mxu0 0
        %1408 = vmatpush1.bf16.xpose.msra.mxu0 0
        %1409 = vmatprep.subr.bf16.mxu0 0
        %1410 = vmatpush1.bf16.xpose.msra.mxu0 0
        %1411 = vmatprep.subr.bf16.mxu0 0
        %1412 = vmatpush1.bf16.xpose.msra.mxu0 0
        %1413 = vmatprep.mubr.bf16.mxu0 0
        %1414 = vmatmul.mubr.bf16.gmra.mrb[0].mxu0 %v514
        %v1415 = vpop.f32.mrb[0].mxu0
        %v1416 = vadd.f32 0.0, %v1415
        %v1417 = vpop.f32.mrb[0].mxu0
        %v1418 = vpop.f32.mrb[0].mxu0
        %v1419 = vpop.f32.mrb[0].mxu0
        %1420 = vdwg.mxu0
        %1421 = vmatprep.subr.bf16.mxu0 0
        %1422 = vmatpush1.bf16.xpose.msra.mxu0 %v451
        %1423 = vmatprep.subr.bf16.mxu0 0
        %1424 = vmatpush1.bf16.xpose.msra.mxu0 0
        %1425 = vmatprep.subr.bf16.mxu0 0
        %1426 = vmatpush1.bf16.xpose.msra.mxu0 0
        %1427 = vmatprep.subr.bf16.mxu0 0
        %1428 = vmatpush1.bf16.xpose.msra.mxu0 0
        %1429 = vmatprep.subr.bf16.mxu0 0
        %1430 = vmatpush1.bf16.xpose.msra.mxu0 0
        %1431 = vmatprep.subr.bf16.mxu0 0
        %1432 = vmatpush1.bf16.xpose.msra.mxu0 0
        %1433 = vmatprep.subr.bf16.mxu0 0
        %1434 = vmatpush1.bf16.xpose.msra.mxu0 0
        %1435 = vmatprep.subr.bf16.mxu0 0
        %1436 = vmatpush1.bf16.xpose.msra.mxu0 0
        %1437 = vmatprep.subr.bf16.mxu0 0
        %1438 = vmatpush1.bf16.xpose.msra.mxu0 0
        %1439 = vmatprep.subr.bf16.mxu0 0
        %1440 = vmatpush1.bf16.xpose.msra.mxu0 0
        %1441 = vmatprep.subr.bf16.mxu0 0
        %1442 = vmatpush1.bf16.xpose.msra.mxu0 0
        %1443 = vmatprep.subr.bf16.mxu0 0
        %1444 = vmatpush1.bf16.xpose.msra.mxu0 0
        %1445 = vmatprep.subr.bf16.mxu0 0
        %1446 = vmatpush1.bf16.xpose.msra.mxu0 0
        %1447 = vmatprep.subr.bf16.mxu0 0
        %1448 = vmatpush1.bf16.xpose.msra.mxu0 0
        %1449 = vmatprep.subr.bf16.mxu0 0
        %1450 = vmatpush1.bf16.xpose.msra.mxu0 0
        %1451 = vmatprep.subr.bf16.mxu0 0
        %1452 = vmatpush1.bf16.xpose.msra.mxu0 0
        %1453 = vmatprep.mubr.bf16.mxu0 0
        %1454 = vmatmul.mubr.bf16.gmra.mrb[0].mxu0 %v515
        %v1455 = vpop.f32.mrb[0].mxu0
        %v1456 = vadd.f32 0.0, %v1455
        %v1457 = vpop.f32.mrb[0].mxu0
        %v1458 = vpop.f32.mrb[0].mxu0
        %v1459 = vpop.f32.mrb[0].mxu0
        %1460 = vdwg.mxu0
        %1461 = vmatprep.subr.bf16.mxu0 0
        %1462 = vmatpush1.bf16.xpose.msra.mxu0 %v452
        %1463 = vmatprep.subr.bf16.mxu0 0
        %1464 = vmatpush1.bf16.xpose.msra.mxu0 0
        %1465 = vmatprep.subr.bf16.mxu0 0
        %1466 = vmatpush1.bf16.xpose.msra.mxu0 0
        %1467 = vmatprep.subr.bf16.mxu0 0
        %1468 = vmatpush1.bf16.xpose.msra.mxu0 0
        %1469 = vmatprep.subr.bf16.mxu0 0
        %1470 = vmatpush1.bf16.xpose.msra.mxu0 0
        %1471 = vmatprep.subr.bf16.mxu0 0
        %1472 = vmatpush1.bf16.xpose.msra.mxu0 0
        %1473 = vmatprep.subr.bf16.mxu0 0
        %1474 = vmatpush1.bf16.xpose.msra.mxu0 0
        %1475 = vmatprep.subr.bf16.mxu0 0
        %1476 = vmatpush1.bf16.xpose.msra.mxu0 0
        %1477 = vmatprep.subr.bf16.mxu0 0
        %1478 = vmatpush1.bf16.xpose.msra.mxu0 0
        %1479 = vmatprep.subr.bf16.mxu0 0
        %1480 = vmatpush1.bf16.xpose.msra.mxu0 0
        %1481 = vmatprep.subr.bf16.mxu0 0
        %1482 = vmatpush1.bf16.xpose.msra.mxu0 0
        %1483 = vmatprep.subr.bf16.mxu0 0
        %1484 = vmatpush1.bf16.xpose.msra.mxu0 0
        %1485 = vmatprep.subr.bf16.mxu0 0
        %1486 = vmatpush1.bf16.xpose.msra.mxu0 0
        %1487 = vmatprep.subr.bf16.mxu0 0
        %1488 = vmatpush1.bf16.xpose.msra.mxu0 0
        %1489 = vmatprep.subr.bf16.mxu0 0
        %1490 = vmatpush1.bf16.xpose.msra.mxu0 0
        %1491 = vmatprep.subr.bf16.mxu0 0
        %1492 = vmatpush1.bf16.xpose.msra.mxu0 0
        %1493 = vmatprep.mubr.bf16.mxu0 0
        %1494 = vmatmul.mubr.bf16.gmra.mrb[0].mxu0 %v516
        %v1495 = vpop.f32.mrb[0].mxu0
        %v1496 = vadd.f32 0.0, %v1495
        %v1497 = vpop.f32.mrb[0].mxu0
        %v1498 = vpop.f32.mrb[0].mxu0
        %v1499 = vpop.f32.mrb[0].mxu0
        %1500 = vdwg.mxu0
        %1501 = vmatprep.subr.bf16.mxu0 0
        %1502 = vmatpush1.bf16.xpose.msra.mxu0 %v453
        %1503 = vmatprep.subr.bf16.mxu0 0
        %1504 = vmatpush1.bf16.xpose.msra.mxu0 0
        %1505 = vmatprep.subr.bf16.mxu0 0
        %1506 = vmatpush1.bf16.xpose.msra.mxu0 0
        %1507 = vmatprep.subr.bf16.mxu0 0
        %1508 = vmatpush1.bf16.xpose.msra.mxu0 0
        %1509 = vmatprep.subr.bf16.mxu0 0
        %1510 = vmatpush1.bf16.xpose.msra.mxu0 0
        %1511 = vmatprep.subr.bf16.mxu0 0
        %1512 = vmatpush1.bf16.xpose.msra.mxu0 0
        %1513 = vmatprep.subr.bf16.mxu0 0
        %1514 = vmatpush1.bf16.xpose.msra.mxu0 0
        %1515 = vmatprep.subr.bf16.mxu0 0
        %1516 = vmatpush1.bf16.xpose.msra.mxu0 0
        %1517 = vmatprep.subr.bf16.mxu0 0
        %1518 = vmatpush1.bf16.xpose.msra.mxu0 0
        %1519 = vmatprep.subr.bf16.mxu0 0
        %1520 = vmatpush1.bf16.xpose.msra.mxu0 0
        %1521 = vmatprep.subr.bf16.mxu0 0
        %1522 = vmatpush1.bf16.xpose.msra.mxu0 0
        %1523 = vmatprep.subr.bf16.mxu0 0
        %1524 = vmatpush1.bf16.xpose.msra.mxu0 0
        %1525 = vmatprep.subr.bf16.mxu0 0
        %1526 = vmatpush1.bf16.xpose.msra.mxu0 0
        %1527 = vmatprep.subr.bf16.mxu0 0
        %1528 = vmatpush1.bf16.xpose.msra.mxu0 0
        %1529 = vmatprep.subr.bf16.mxu0 0
        %1530 = vmatpush1.bf16.xpose.msra.mxu0 0
        %1531 = vmatprep.subr.bf16.mxu0 0
        %1532 = vmatpush1.bf16.xpose.msra.mxu0 0
        %1533 = vmatprep.mubr.bf16.mxu0 0
        %1534 = vmatmul.mubr.bf16.gmra.mrb[0].mxu0 %v517
        %v1535 = vpop.f32.mrb[0].mxu0
        %v1536 = vadd.f32 0.0, %v1535
        %v1537 = vpop.f32.mrb[0].mxu0
        %v1538 = vpop.f32.mrb[0].mxu0
        %v1539 = vpop.f32.mrb[0].mxu0
        %1540 = vdwg.mxu0
        %1541 = vmatprep.subr.bf16.mxu0 0
        %1542 = vmatpush1.bf16.xpose.msra.mxu0 %v454
        %1543 = vmatprep.subr.bf16.mxu0 0
        %1544 = vmatpush1.bf16.xpose.msra.mxu0 0
        %1545 = vmatprep.subr.bf16.mxu0 0
        %1546 = vmatpush1.bf16.xpose.msra.mxu0 0
        %1547 = vmatprep.subr.bf16.mxu0 0
        %1548 = vmatpush1.bf16.xpose.msra.mxu0 0
        %1549 = vmatprep.subr.bf16.mxu0 0
        %1550 = vmatpush1.bf16.xpose.msra.mxu0 0
        %1551 = vmatprep.subr.bf16.mxu0 0
        %1552 = vmatpush1.bf16.xpose.msra.mxu0 0
        %1553 = vmatprep.subr.bf16.mxu0 0
        %1554 = vmatpush1.bf16.xpose.msra.mxu0 0
        %1555 = vmatprep.subr.bf16.mxu0 0
        %1556 = vmatpush1.bf16.xpose.msra.mxu0 0
        %1557 = vmatprep.subr.bf16.mxu0 0
        %1558 = vmatpush1.bf16.xpose.msra.mxu0 0
        %1559 = vmatprep.subr.bf16.mxu0 0
        %1560 = vmatpush1.bf16.xpose.msra.mxu0 0
        %1561 = vmatprep.subr.bf16.mxu0 0
        %1562 = vmatpush1.bf16.xpose.msra.mxu0 0
        %1563 = vmatprep.subr.bf16.mxu0 0
        %1564 = vmatpush1.bf16.xpose.msra.mxu0 0
        %1565 = vmatprep.subr.bf16.mxu0 0
        %1566 = vmatpush1.bf16.xpose.msra.mxu0 0
        %1567 = vmatprep.subr.bf16.mxu0 0
        %1568 = vmatpush1.bf16.xpose.msra.mxu0 0
        %1569 = vmatprep.subr.bf16.mxu0 0
        %1570 = vmatpush1.bf16.xpose.msra.mxu0 0
        %1571 = vmatprep.subr.bf16.mxu0 0
        %1572 = vmatpush1.bf16.xpose.msra.mxu0 0
        %1573 = vmatprep.mubr.bf16.mxu0 0
        %1574 = vmatmul.mubr.bf16.gmra.mrb[0].mxu0 %v518
        %v1575 = vpop.f32.mrb[0].mxu0
        %v1576 = vadd.f32 0.0, %v1575
        %v1577 = vpop.f32.mrb[0].mxu0
        %v1578 = vpop.f32.mrb[0].mxu0
        %v1579 = vpop.f32.mrb[0].mxu0
        %1580 = vdwg.mxu0
        %1581 = vmatprep.subr.bf16.mxu0 0
        %1582 = vmatpush1.bf16.xpose.msra.mxu0 %v455
        %1583 = vmatprep.subr.bf16.mxu0 0
        %1584 = vmatpush1.bf16.xpose.msra.mxu0 0
        %1585 = vmatprep.subr.bf16.mxu0 0
        %1586 = vmatpush1.bf16.xpose.msra.mxu0 0
        %1587 = vmatprep.subr.bf16.mxu0 0
        %1588 = vmatpush1.bf16.xpose.msra.mxu0 0
        %1589 = vmatprep.subr.bf16.mxu0 0
        %1590 = vmatpush1.bf16.xpose.msra.mxu0 0
        %1591 = vmatprep.subr.bf16.mxu0 0
        %1592 = vmatpush1.bf16.xpose.msra.mxu0 0
        %1593 = vmatprep.subr.bf16.mxu0 0
        %1594 = vmatpush1.bf16.xpose.msra.mxu0 0
        %1595 = vmatprep.subr.bf16.mxu0 0
        %1596 = vmatpush1.bf16.xpose.msra.mxu0 0
        %1597 = vmatprep.subr.bf16.mxu0 0
        %1598 = vmatpush1.bf16.xpose.msra.mxu0 0
        %1599 = vmatprep.subr.bf16.mxu0 0
        %1600 = vmatpush1.bf16.xpose.msra.mxu0 0
        %1601 = vmatprep.subr.bf16.mxu0 0
        %1602 = vmatpush1.bf16.xpose.msra.mxu0 0
        %1603 = vmatprep.subr.bf16.mxu0 0
        %1604 = vmatpush1.bf16.xpose.msra.mxu0 0
        %1605 = vmatprep.subr.bf16.mxu0 0
        %1606 = vmatpush1.bf16.xpose.msra.mxu0 0
        %1607 = vmatprep.subr.bf16.mxu0 0
        %1608 = vmatpush1.bf16.xpose.msra.mxu0 0
        %1609 = vmatprep.subr.bf16.mxu0 0
        %1610 = vmatpush1.bf16.xpose.msra.mxu0 0
        %1611 = vmatprep.subr.bf16.mxu0 0
        %1612 = vmatpush1.bf16.xpose.msra.mxu0 0
        %1613 = vmatprep.mubr.bf16.mxu0 0
        %1614 = vmatmul.mubr.bf16.gmra.mrb[0].mxu0 %v519
        %v1615 = vpop.f32.mrb[0].mxu0
        %v1616 = vadd.f32 0.0, %v1615
        %v1617 = vpop.f32.mrb[0].mxu0
        %v1618 = vpop.f32.mrb[0].mxu0
        %v1619 = vpop.f32.mrb[0].mxu0
        %1620 = vdwg.mxu0
        %1621 = vmatprep.subr.bf16.mxu0 0
        %1622 = vmatpush1.bf16.xpose.msra.mxu0 %v456
        %1623 = vmatprep.subr.bf16.mxu0 0
        %1624 = vmatpush1.bf16.xpose.msra.mxu0 0
        %1625 = vmatprep.subr.bf16.mxu0 0
        %1626 = vmatpush1.bf16.xpose.msra.mxu0 0
        %1627 = vmatprep.subr.bf16.mxu0 0
        %1628 = vmatpush1.bf16.xpose.msra.mxu0 0
        %1629 = vmatprep.subr.bf16.mxu0 0
        %1630 = vmatpush1.bf16.xpose.msra.mxu0 0
        %1631 = vmatprep.subr.bf16.mxu0 0
        %1632 = vmatpush1.bf16.xpose.msra.mxu0 0
        %1633 = vmatprep.subr.bf16.mxu0 0
        %1634 = vmatpush1.bf16.xpose.msra.mxu0 0
        %1635 = vmatprep.subr.bf16.mxu0 0
        %1636 = vmatpush1.bf16.xpose.msra.mxu0 0
        %1637 = vmatprep.subr.bf16.mxu0 0
        %1638 = vmatpush1.bf16.xpose.msra.mxu0 0
        %1639 = vmatprep.subr.bf16.mxu0 0
        %1640 = vmatpush1.bf16.xpose.msra.mxu0 0
        %1641 = vmatprep.subr.bf16.mxu0 0
        %1642 = vmatpush1.bf16.xpose.msra.mxu0 0
        %1643 = vmatprep.subr.bf16.mxu0 0
        %1644 = vmatpush1.bf16.xpose.msra.mxu0 0
        %1645 = vmatprep.subr.bf16.mxu0 0
        %1646 = vmatpush1.bf16.xpose.msra.mxu0 0
        %1647 = vmatprep.subr.bf16.mxu0 0
        %1648 = vmatpush1.bf16.xpose.msra.mxu0 0
        %1649 = vmatprep.subr.bf16.mxu0 0
        %1650 = vmatpush1.bf16.xpose.msra.mxu0 0
        %1651 = vmatprep.subr.bf16.mxu0 0
        %1652 = vmatpush1.bf16.xpose.msra.mxu0 0
        %1653 = vmatprep.mubr.bf16.mxu0 0
        %1654 = vmatmul.mubr.bf16.gmra.mrb[0].mxu0 %v520
        %v1655 = vpop.f32.mrb[0].mxu0
        %v1656 = vadd.f32 0.0, %v1655
        %v1657 = vpop.f32.mrb[0].mxu0
        %v1658 = vpop.f32.mrb[0].mxu0
        %v1659 = vpop.f32.mrb[0].mxu0
        %1660 = vdwg.mxu0
        %1661 = vmatprep.subr.bf16.mxu0 0
        %1662 = vmatpush1.bf16.xpose.msra.mxu0 %v457
        %1663 = vmatprep.subr.bf16.mxu0 0
        %1664 = vmatpush1.bf16.xpose.msra.mxu0 0
        %1665 = vmatprep.subr.bf16.mxu0 0
        %1666 = vmatpush1.bf16.xpose.msra.mxu0 0
        %1667 = vmatprep.subr.bf16.mxu0 0
        %1668 = vmatpush1.bf16.xpose.msra.mxu0 0
        %1669 = vmatprep.subr.bf16.mxu0 0
        %1670 = vmatpush1.bf16.xpose.msra.mxu0 0
        %1671 = vmatprep.subr.bf16.mxu0 0
        %1672 = vmatpush1.bf16.xpose.msra.mxu0 0
        %1673 = vmatprep.subr.bf16.mxu0 0
        %1674 = vmatpush1.bf16.xpose.msra.mxu0 0
        %1675 = vmatprep.subr.bf16.mxu0 0
        %1676 = vmatpush1.bf16.xpose.msra.mxu0 0
        %1677 = vmatprep.subr.bf16.mxu0 0
        %1678 = vmatpush1.bf16.xpose.msra.mxu0 0
        %1679 = vmatprep.subr.bf16.mxu0 0
        %1680 = vmatpush1.bf16.xpose.msra.mxu0 0
        %1681 = vmatprep.subr.bf16.mxu0 0
        %1682 = vmatpush1.bf16.xpose.msra.mxu0 0
        %1683 = vmatprep.subr.bf16.mxu0 0
        %1684 = vmatpush1.bf16.xpose.msra.mxu0 0
        %1685 = vmatprep.subr.bf16.mxu0 0
        %1686 = vmatpush1.bf16.xpose.msra.mxu0 0
        %1687 = vmatprep.subr.bf16.mxu0 0
        %1688 = vmatpush1.bf16.xpose.msra.mxu0 0
        %1689 = vmatprep.subr.bf16.mxu0 0
        %1690 = vmatpush1.bf16.xpose.msra.mxu0 0
        %1691 = vmatprep.subr.bf16.mxu0 0
        %1692 = vmatpush1.bf16.xpose.msra.mxu0 0
        %1693 = vmatprep.mubr.bf16.mxu0 0
        %1694 = vmatmul.mubr.bf16.gmra.mrb[0].mxu0 %v521
        %v1695 = vpop.f32.mrb[0].mxu0
        %v1696 = vadd.f32 0.0, %v1695
        %v1697 = vpop.f32.mrb[0].mxu0
        %v1698 = vpop.f32.mrb[0].mxu0
        %v1699 = vpop.f32.mrb[0].mxu0
        %1700 = vdwg.mxu0
        %1701 = vmatprep.subr.bf16.mxu0 0
        %1702 = vmatpush1.bf16.xpose.msra.mxu0 %v458
        %1703 = vmatprep.subr.bf16.mxu0 0
        %1704 = vmatpush1.bf16.xpose.msra.mxu0 0
        %1705 = vmatprep.subr.bf16.mxu0 0
        %1706 = vmatpush1.bf16.xpose.msra.mxu0 0
        %1707 = vmatprep.subr.bf16.mxu0 0
        %1708 = vmatpush1.bf16.xpose.msra.mxu0 0
        %1709 = vmatprep.subr.bf16.mxu0 0
        %1710 = vmatpush1.bf16.xpose.msra.mxu0 0
        %1711 = vmatprep.subr.bf16.mxu0 0
        %1712 = vmatpush1.bf16.xpose.msra.mxu0 0
        %1713 = vmatprep.subr.bf16.mxu0 0
        %1714 = vmatpush1.bf16.xpose.msra.mxu0 0
        %1715 = vmatprep.subr.bf16.mxu0 0
        %1716 = vmatpush1.bf16.xpose.msra.mxu0 0
        %1717 = vmatprep.subr.bf16.mxu0 0
        %1718 = vmatpush1.bf16.xpose.msra.mxu0 0
        %1719 = vmatprep.subr.bf16.mxu0 0
        %1720 = vmatpush1.bf16.xpose.msra.mxu0 0
        %1721 = vmatprep.subr.bf16.mxu0 0
        %1722 = vmatpush1.bf16.xpose.msra.mxu0 0
        %1723 = vmatprep.subr.bf16.mxu0 0
        %1724 = vmatpush1.bf16.xpose.msra.mxu0 0
        %1725 = vmatprep.subr.bf16.mxu0 0
        %1726 = vmatpush1.bf16.xpose.msra.mxu0 0
        %1727 = vmatprep.subr.bf16.mxu0 0
        %1728 = vmatpush1.bf16.xpose.msra.mxu0 0
        %1729 = vmatprep.subr.bf16.mxu0 0
        %1730 = vmatpush1.bf16.xpose.msra.mxu0 0
        %1731 = vmatprep.subr.bf16.mxu0 0
        %1732 = vmatpush1.bf16.xpose.msra.mxu0 0
        %1733 = vmatprep.mubr.bf16.mxu0 0
        %1734 = vmatmul.mubr.bf16.gmra.mrb[0].mxu0 %v522
        %v1735 = vpop.f32.mrb[0].mxu0
        %v1736 = vadd.f32 0.0, %v1735
        %v1737 = vpop.f32.mrb[0].mxu0
        %v1738 = vpop.f32.mrb[0].mxu0
        %v1739 = vpop.f32.mrb[0].mxu0
        %1740 = vdwg.mxu0
        %1741 = vmatprep.subr.bf16.mxu0 0
        %1742 = vmatpush1.bf16.xpose.msra.mxu0 %v459
        %1743 = vmatprep.subr.bf16.mxu0 0
        %1744 = vmatpush1.bf16.xpose.msra.mxu0 0
        %1745 = vmatprep.subr.bf16.mxu0 0
        %1746 = vmatpush1.bf16.xpose.msra.mxu0 0
        %1747 = vmatprep.subr.bf16.mxu0 0
        %1748 = vmatpush1.bf16.xpose.msra.mxu0 0
        %1749 = vmatprep.subr.bf16.mxu0 0
        %1750 = vmatpush1.bf16.xpose.msra.mxu0 0
        %1751 = vmatprep.subr.bf16.mxu0 0
        %1752 = vmatpush1.bf16.xpose.msra.mxu0 0
        %1753 = vmatprep.subr.bf16.mxu0 0
        %1754 = vmatpush1.bf16.xpose.msra.mxu0 0
        %1755 = vmatprep.subr.bf16.mxu0 0
        %1756 = vmatpush1.bf16.xpose.msra.mxu0 0
        %1757 = vmatprep.subr.bf16.mxu0 0
        %1758 = vmatpush1.bf16.xpose.msra.mxu0 0
        %1759 = vmatprep.subr.bf16.mxu0 0
        %1760 = vmatpush1.bf16.xpose.msra.mxu0 0
        %1761 = vmatprep.subr.bf16.mxu0 0
        %1762 = vmatpush1.bf16.xpose.msra.mxu0 0
        %1763 = vmatprep.subr.bf16.mxu0 0
        %1764 = vmatpush1.bf16.xpose.msra.mxu0 0
        %1765 = vmatprep.subr.bf16.mxu0 0
        %1766 = vmatpush1.bf16.xpose.msra.mxu0 0
        %1767 = vmatprep.subr.bf16.mxu0 0
        %1768 = vmatpush1.bf16.xpose.msra.mxu0 0
        %1769 = vmatprep.subr.bf16.mxu0 0
        %1770 = vmatpush1.bf16.xpose.msra.mxu0 0
        %1771 = vmatprep.subr.bf16.mxu0 0
        %1772 = vmatpush1.bf16.xpose.msra.mxu0 0
        %1773 = vmatprep.mubr.bf16.mxu0 0
        %1774 = vmatmul.mubr.bf16.gmra.mrb[0].mxu0 %v523
        %v1775 = vpop.f32.mrb[0].mxu0
        %v1776 = vadd.f32 0.0, %v1775
        %v1777 = vpop.f32.mrb[0].mxu0
        %v1778 = vpop.f32.mrb[0].mxu0
        %v1779 = vpop.f32.mrb[0].mxu0
        %1780 = vdwg.mxu0
        %1781 = vmatprep.subr.bf16.mxu0 0
        %1782 = vmatpush1.bf16.xpose.msra.mxu0 %v460
        %1783 = vmatprep.subr.bf16.mxu0 0
        %1784 = vmatpush1.bf16.xpose.msra.mxu0 0
        %1785 = vmatprep.subr.bf16.mxu0 0
        %1786 = vmatpush1.bf16.xpose.msra.mxu0 0
        %1787 = vmatprep.subr.bf16.mxu0 0
        %1788 = vmatpush1.bf16.xpose.msra.mxu0 0
        %1789 = vmatprep.subr.bf16.mxu0 0
        %1790 = vmatpush1.bf16.xpose.msra.mxu0 0
        %1791 = vmatprep.subr.bf16.mxu0 0
        %1792 = vmatpush1.bf16.xpose.msra.mxu0 0
        %1793 = vmatprep.subr.bf16.mxu0 0
        %1794 = vmatpush1.bf16.xpose.msra.mxu0 0
        %1795 = vmatprep.subr.bf16.mxu0 0
        %1796 = vmatpush1.bf16.xpose.msra.mxu0 0
        %1797 = vmatprep.subr.bf16.mxu0 0
        %1798 = vmatpush1.bf16.xpose.msra.mxu0 0
        %1799 = vmatprep.subr.bf16.mxu0 0
        %1800 = vmatpush1.bf16.xpose.msra.mxu0 0
        %1801 = vmatprep.subr.bf16.mxu0 0
        %1802 = vmatpush1.bf16.xpose.msra.mxu0 0
        %1803 = vmatprep.subr.bf16.mxu0 0
        %1804 = vmatpush1.bf16.xpose.msra.mxu0 0
        %1805 = vmatprep.subr.bf16.mxu0 0
        %1806 = vmatpush1.bf16.xpose.msra.mxu0 0
        %1807 = vmatprep.subr.bf16.mxu0 0
        %1808 = vmatpush1.bf16.xpose.msra.mxu0 0
        %1809 = vmatprep.subr.bf16.mxu0 0
        %1810 = vmatpush1.bf16.xpose.msra.mxu0 0
        %1811 = vmatprep.subr.bf16.mxu0 0
        %1812 = vmatpush1.bf16.xpose.msra.mxu0 0
        %1813 = vmatprep.mubr.bf16.mxu0 0
        %1814 = vmatmul.mubr.bf16.gmra.mrb[0].mxu0 %v524
        %v1815 = vpop.f32.mrb[0].mxu0
        %v1816 = vadd.f32 0.0, %v1815
        %v1817 = vpop.f32.mrb[0].mxu0
        %v1818 = vpop.f32.mrb[0].mxu0
        %v1819 = vpop.f32.mrb[0].mxu0
        %1820 = vdwg.mxu0
        %1821 = vmatprep.subr.bf16.mxu0 0
        %1822 = vmatpush1.bf16.xpose.msra.mxu0 %v461
        %1823 = vmatprep.subr.bf16.mxu0 0
        %1824 = vmatpush1.bf16.xpose.msra.mxu0 0
        %1825 = vmatprep.subr.bf16.mxu0 0
        %1826 = vmatpush1.bf16.xpose.msra.mxu0 0
        %1827 = vmatprep.subr.bf16.mxu0 0
        %1828 = vmatpush1.bf16.xpose.msra.mxu0 0
        %1829 = vmatprep.subr.bf16.mxu0 0
        %1830 = vmatpush1.bf16.xpose.msra.mxu0 0
        %1831 = vmatprep.subr.bf16.mxu0 0
        %1832 = vmatpush1.bf16.xpose.msra.mxu0 0
        %1833 = vmatprep.subr.bf16.mxu0 0
        %1834 = vmatpush1.bf16.xpose.msra.mxu0 0
        %1835 = vmatprep.subr.bf16.mxu0 0
        %1836 = vmatpush1.bf16.xpose.msra.mxu0 0
        %1837 = vmatprep.subr.bf16.mxu0 0
        %1838 = vmatpush1.bf16.xpose.msra.mxu0 0
        %1839 = vmatprep.subr.bf16.mxu0 0
        %1840 = vmatpush1.bf16.xpose.msra.mxu0 0
        %1841 = vmatprep.subr.bf16.mxu0 0
        %1842 = vmatpush1.bf16.xpose.msra.mxu0 0
        %1843 = vmatprep.subr.bf16.mxu0 0
        %1844 = vmatpush1.bf16.xpose.msra.mxu0 0
        %1845 = vmatprep.subr.bf16.mxu0 0
        %1846 = vmatpush1.bf16.xpose.msra.mxu0 0
        %1847 = vmatprep.subr.bf16.mxu0 0
        %1848 = vmatpush1.bf16.xpose.msra.mxu0 0
        %1849 = vmatprep.subr.bf16.mxu0 0
        %1850 = vmatpush1.bf16.xpose.msra.mxu0 0
        %1851 = vmatprep.subr.bf16.mxu0 0
        %1852 = vmatpush1.bf16.xpose.msra.mxu0 0
        %1853 = vmatprep.mubr.bf16.mxu0 0
        %1854 = vmatmul.mubr.bf16.gmra.mrb[0].mxu0 %v493
        %v1855 = vpop.f32.mrb[0].mxu0
        %v1856 = vadd.f32 0.0, %v1855
        %v1857 = vpop.f32.mrb[0].mxu0
        %v1858 = vpop.f32.mrb[0].mxu0
        %v1859 = vpop.f32.mrb[0].mxu0
        %1860 = vdwg.mxu0
        %1861 = vmatprep.subr.bf16.mxu0 0
        %1862 = vmatpush1.bf16.xpose.msra.mxu0 %v462
        %1863 = vmatprep.subr.bf16.mxu0 0
        %1864 = vmatpush1.bf16.xpose.msra.mxu0 0
        %1865 = vmatprep.subr.bf16.mxu0 0
        %1866 = vmatpush1.bf16.xpose.msra.mxu0 0
        %1867 = vmatprep.subr.bf16.mxu0 0
        %1868 = vmatpush1.bf16.xpose.msra.mxu0 0
        %1869 = vmatprep.subr.bf16.mxu0 0
        %1870 = vmatpush1.bf16.xpose.msra.mxu0 0
        %1871 = vmatprep.subr.bf16.mxu0 0
        %1872 = vmatpush1.bf16.xpose.msra.mxu0 0
        %1873 = vmatprep.subr.bf16.mxu0 0
        %1874 = vmatpush1.bf16.xpose.msra.mxu0 0
        %1875 = vmatprep.subr.bf16.mxu0 0
        %1876 = vmatpush1.bf16.xpose.msra.mxu0 0
        %1877 = vmatprep.subr.bf16.mxu0 0
        %1878 = vmatpush1.bf16.xpose.msra.mxu0 0
        %1879 = vmatprep.subr.bf16.mxu0 0
        %1880 = vmatpush1.bf16.xpose.msra.mxu0 0
        %1881 = vmatprep.subr.bf16.mxu0 0
        %1882 = vmatpush1.bf16.xpose.msra.mxu0 0
        %1883 = vmatprep.subr.bf16.mxu0 0
        %1884 = vmatpush1.bf16.xpose.msra.mxu0 0
        %1885 = vmatprep.subr.bf16.mxu0 0
        %1886 = vmatpush1.bf16.xpose.msra.mxu0 0
        %1887 = vmatprep.subr.bf16.mxu0 0
        %1888 = vmatpush1.bf16.xpose.msra.mxu0 0
        %1889 = vmatprep.subr.bf16.mxu0 0
        %1890 = vmatpush1.bf16.xpose.msra.mxu0 0
        %1891 = vmatprep.subr.bf16.mxu0 0
        %1892 = vmatpush1.bf16.xpose.msra.mxu0 0
        %1893 = vmatprep.mubr.bf16.mxu0 0
        %1894 = vmatmul.mubr.bf16.gmra.mrb[0].mxu0 %v494
        %v1895 = vpop.f32.mrb[0].mxu0
        %v1896 = vadd.f32 0.0, %v1895
        %v1897 = vpop.f32.mrb[0].mxu0
        %v1898 = vpop.f32.mrb[0].mxu0
        %v1899 = vpop.f32.mrb[0].mxu0
        %1900 = vdwg.mxu0
        %1901 = vmatprep.subr.bf16.mxu0 0
        %1902 = vmatpush1.bf16.xpose.msra.mxu0 %v463
        %1903 = vmatprep.subr.bf16.mxu0 0
        %1904 = vmatpush1.bf16.xpose.msra.mxu0 0
        %1905 = vmatprep.subr.bf16.mxu0 0
        %1906 = vmatpush1.bf16.xpose.msra.mxu0 0
        %1907 = vmatprep.subr.bf16.mxu0 0
        %1908 = vmatpush1.bf16.xpose.msra.mxu0 0
        %1909 = vmatprep.subr.bf16.mxu0 0
        %1910 = vmatpush1.bf16.xpose.msra.mxu0 0
        %1911 = vmatprep.subr.bf16.mxu0 0
        %1912 = vmatpush1.bf16.xpose.msra.mxu0 0
        %1913 = vmatprep.subr.bf16.mxu0 0
        %1914 = vmatpush1.bf16.xpose.msra.mxu0 0
        %1915 = vmatprep.subr.bf16.mxu0 0
        %1916 = vmatpush1.bf16.xpose.msra.mxu0 0
        %1917 = vmatprep.subr.bf16.mxu0 0
        %1918 = vmatpush1.bf16.xpose.msra.mxu0 0
        %1919 = vmatprep.subr.bf16.mxu0 0
        %1920 = vmatpush1.bf16.xpose.msra.mxu0 0
        %1921 = vmatprep.subr.bf16.mxu0 0
        %1922 = vmatpush1.bf16.xpose.msra.mxu0 0
        %1923 = vmatprep.subr.bf16.mxu0 0
        %1924 = vmatpush1.bf16.xpose.msra.mxu0 0
        %1925 = vmatprep.subr.bf16.mxu0 0
        %1926 = vmatpush1.bf16.xpose.msra.mxu0 0
        %1927 = vmatprep.subr.bf16.mxu0 0
        %1928 = vmatpush1.bf16.xpose.msra.mxu0 0
        %1929 = vmatprep.subr.bf16.mxu0 0
        %1930 = vmatpush1.bf16.xpose.msra.mxu0 0
        %1931 = vmatprep.subr.bf16.mxu0 0
        %1932 = vmatpush1.bf16.xpose.msra.mxu0 0
        %1933 = vmatprep.mubr.bf16.mxu0 0
        %1934 = vmatmul.mubr.bf16.gmra.mrb[0].mxu0 %v495
        %v1935 = vpop.f32.mrb[0].mxu0
        %v1936 = vadd.f32 0.0, %v1935
        %v1937 = vpop.f32.mrb[0].mxu0
        %v1938 = vpop.f32.mrb[0].mxu0
        %v1939 = vpop.f32.mrb[0].mxu0
        %1940 = vdwg.mxu0
        %1941 = vmatprep.subr.bf16.mxu0 0
        %1942 = vmatpush1.bf16.xpose.msra.mxu0 %v464
        %1943 = vmatprep.subr.bf16.mxu0 0
        %1944 = vmatpush1.bf16.xpose.msra.mxu0 0
        %1945 = vmatprep.subr.bf16.mxu0 0
        %1946 = vmatpush1.bf16.xpose.msra.mxu0 0
        %1947 = vmatprep.subr.bf16.mxu0 0
        %1948 = vmatpush1.bf16.xpose.msra.mxu0 0
        %1949 = vmatprep.subr.bf16.mxu0 0
        %1950 = vmatpush1.bf16.xpose.msra.mxu0 0
        %1951 = vmatprep.subr.bf16.mxu0 0
        %1952 = vmatpush1.bf16.xpose.msra.mxu0 0
        %1953 = vmatprep.subr.bf16.mxu0 0
        %1954 = vmatpush1.bf16.xpose.msra.mxu0 0
        %1955 = vmatprep.subr.bf16.mxu0 0
        %1956 = vmatpush1.bf16.xpose.msra.mxu0 0
        %1957 = vmatprep.subr.bf16.mxu0 0
        %1958 = vmatpush1.bf16.xpose.msra.mxu0 0
        %1959 = vmatprep.subr.bf16.mxu0 0
        %1960 = vmatpush1.bf16.xpose.msra.mxu0 0
        %1961 = vmatprep.subr.bf16.mxu0 0
        %1962 = vmatpush1.bf16.xpose.msra.mxu0 0
        %1963 = vmatprep.subr.bf16.mxu0 0
        %1964 = vmatpush1.bf16.xpose.msra.mxu0 0
        %1965 = vmatprep.subr.bf16.mxu0 0
        %1966 = vmatpush1.bf16.xpose.msra.mxu0 0
        %1967 = vmatprep.subr.bf16.mxu0 0
        %1968 = vmatpush1.bf16.xpose.msra.mxu0 0
        %1969 = vmatprep.subr.bf16.mxu0 0
        %1970 = vmatpush1.bf16.xpose.msra.mxu0 0
        %1971 = vmatprep.subr.bf16.mxu0 0
        %1972 = vmatpush1.bf16.xpose.msra.mxu0 0
        %1973 = vmatprep.mubr.bf16.mxu0 0
        %1974 = vmatmul.mubr.bf16.gmra.mrb[0].mxu0 %v496
        %v1975 = vpop.f32.mrb[0].mxu0
        %v1976 = vadd.f32 0.0, %v1975
        %v1977 = vpop.f32.mrb[0].mxu0
        %v1978 = vpop.f32.mrb[0].mxu0
        %v1979 = vpop.f32.mrb[0].mxu0
        %1980 = vdwg.mxu0
        %1981 = vmatprep.subr.bf16.mxu0 0
        %1982 = vmatpush1.bf16.xpose.msra.mxu0 %v465
        %1983 = vmatprep.subr.bf16.mxu0 0
        %1984 = vmatpush1.bf16.xpose.msra.mxu0 0
        %1985 = vmatprep.subr.bf16.mxu0 0
        %1986 = vmatpush1.bf16.xpose.msra.mxu0 0
        %1987 = vmatprep.subr.bf16.mxu0 0
        %1988 = vmatpush1.bf16.xpose.msra.mxu0 0
        %1989 = vmatprep.subr.bf16.mxu0 0
        %1990 = vmatpush1.bf16.xpose.msra.mxu0 0
        %1991 = vmatprep.subr.bf16.mxu0 0
        %1992 = vmatpush1.bf16.xpose.msra.mxu0 0
        %1993 = vmatprep.subr.bf16.mxu0 0
        %1994 = vmatpush1.bf16.xpose.msra.mxu0 0
        %1995 = vmatprep.subr.bf16.mxu0 0
        %1996 = vmatpush1.bf16.xpose.msra.mxu0 0
        %1997 = vmatprep.subr.bf16.mxu0 0
        %1998 = vmatpush1.bf16.xpose.msra.mxu0 0
        %1999 = vmatprep.subr.bf16.mxu0 0
        %2000 = vmatpush1.bf16.xpose.msra.mxu0 0
        %2001 = vmatprep.subr.bf16.mxu0 0
        %2002 = vmatpush1.bf16.xpose.msra.mxu0 0
        %2003 = vmatprep.subr.bf16.mxu0 0
        %2004 = vmatpush1.bf16.xpose.msra.mxu0 0
        %2005 = vmatprep.subr.bf16.mxu0 0
        %2006 = vmatpush1.bf16.xpose.msra.mxu0 0
        %2007 = vmatprep.subr.bf16.mxu0 0
        %2008 = vmatpush1.bf16.xpose.msra.mxu0 0
        %2009 = vmatprep.subr.bf16.mxu0 0
        %2010 = vmatpush1.bf16.xpose.msra.mxu0 0
        %2011 = vmatprep.subr.bf16.mxu0 0
        %2012 = vmatpush1.bf16.xpose.msra.mxu0 0
        %2013 = vmatprep.mubr.bf16.mxu0 0
        %2014 = vmatmul.mubr.bf16.gmra.mrb[0].mxu0 %v497
        %v2015 = vpop.f32.mrb[0].mxu0
        %v2016 = vadd.f32 0.0, %v2015
        %v2017 = vpop.f32.mrb[0].mxu0
        %v2018 = vpop.f32.mrb[0].mxu0
        %v2019 = vpop.f32.mrb[0].mxu0
        %2020 = vdwg.mxu0
        %2021 = vmatprep.subr.bf16.mxu0 0
        %2022 = vmatpush1.bf16.xpose.msra.mxu0 %v466
        %2023 = vmatprep.subr.bf16.mxu0 0
        %2024 = vmatpush1.bf16.xpose.msra.mxu0 0
        %2025 = vmatprep.subr.bf16.mxu0 0
        %2026 = vmatpush1.bf16.xpose.msra.mxu0 0
        %2027 = vmatprep.subr.bf16.mxu0 0
        %2028 = vmatpush1.bf16.xpose.msra.mxu0 0
        %2029 = vmatprep.subr.bf16.mxu0 0
        %2030 = vmatpush1.bf16.xpose.msra.mxu0 0
        %2031 = vmatprep.subr.bf16.mxu0 0
        %2032 = vmatpush1.bf16.xpose.msra.mxu0 0
        %2033 = vmatprep.subr.bf16.mxu0 0
        %2034 = vmatpush1.bf16.xpose.msra.mxu0 0
        %2035 = vmatprep.subr.bf16.mxu0 0
        %2036 = vmatpush1.bf16.xpose.msra.mxu0 0
        %2037 = vmatprep.subr.bf16.mxu0 0
        %2038 = vmatpush1.bf16.xpose.msra.mxu0 0
        %2039 = vmatprep.subr.bf16.mxu0 0
        %2040 = vmatpush1.bf16.xpose.msra.mxu0 0
        %2041 = vmatprep.subr.bf16.mxu0 0
        %2042 = vmatpush1.bf16.xpose.msra.mxu0 0
        %2043 = vmatprep.subr.bf16.mxu0 0
        %2044 = vmatpush1.bf16.xpose.msra.mxu0 0
        %2045 = vmatprep.subr.bf16.mxu0 0
        %2046 = vmatpush1.bf16.xpose.msra.mxu0 0
        %2047 = vmatprep.subr.bf16.mxu0 0
        %2048 = vmatpush1.bf16.xpose.msra.mxu0 0
        %2049 = vmatprep.subr.bf16.mxu0 0
        %2050 = vmatpush1.bf16.xpose.msra.mxu0 0
        %2051 = vmatprep.subr.bf16.mxu0 0
        %2052 = vmatpush1.bf16.xpose.msra.mxu0 0
        %2053 = vmatprep.mubr.bf16.mxu0 0
        %2054 = vmatmul.mubr.bf16.gmra.mrb[0].mxu0 %v498
        %v2055 = vpop.f32.mrb[0].mxu0
        %v2056 = vadd.f32 0.0, %v2055
        %v2057 = vpop.f32.mrb[0].mxu0
        %v2058 = vpop.f32.mrb[0].mxu0
        %v2059 = vpop.f32.mrb[0].mxu0
        %2060 = vdwg.mxu0
        %2061 = vmatprep.subr.bf16.mxu0 0
        %2062 = vmatpush1.bf16.xpose.msra.mxu0 %v467
        %2063 = vmatprep.subr.bf16.mxu0 0
        %2064 = vmatpush1.bf16.xpose.msra.mxu0 0
        %2065 = vmatprep.subr.bf16.mxu0 0
        %2066 = vmatpush1.bf16.xpose.msra.mxu0 0
        %2067 = vmatprep.subr.bf16.mxu0 0
        %2068 = vmatpush1.bf16.xpose.msra.mxu0 0
        %2069 = vmatprep.subr.bf16.mxu0 0
        %2070 = vmatpush1.bf16.xpose.msra.mxu0 0
        %2071 = vmatprep.subr.bf16.mxu0 0
        %2072 = vmatpush1.bf16.xpose.msra.mxu0 0
        %2073 = vmatprep.subr.bf16.mxu0 0
        %2074 = vmatpush1.bf16.xpose.msra.mxu0 0
        %2075 = vmatprep.subr.bf16.mxu0 0
        %2076 = vmatpush1.bf16.xpose.msra.mxu0 0
        %2077 = vmatprep.subr.bf16.mxu0 0
        %2078 = vmatpush1.bf16.xpose.msra.mxu0 0
        %2079 = vmatprep.subr.bf16.mxu0 0
        %2080 = vmatpush1.bf16.xpose.msra.mxu0 0
        %2081 = vmatprep.subr.bf16.mxu0 0
        %2082 = vmatpush1.bf16.xpose.msra.mxu0 0
        %2083 = vmatprep.subr.bf16.mxu0 0
        %2084 = vmatpush1.bf16.xpose.msra.mxu0 0
        %2085 = vmatprep.subr.bf16.mxu0 0
        %2086 = vmatpush1.bf16.xpose.msra.mxu0 0
        %2087 = vmatprep.subr.bf16.mxu0 0
        %2088 = vmatpush1.bf16.xpose.msra.mxu0 0
        %2089 = vmatprep.subr.bf16.mxu0 0
        %2090 = vmatpush1.bf16.xpose.msra.mxu0 0
        %2091 = vmatprep.subr.bf16.mxu0 0
        %2092 = vmatpush1.bf16.xpose.msra.mxu0 0
        %2093 = vmatprep.mubr.bf16.mxu0 0
        %2094 = vmatmul.mubr.bf16.gmra.mrb[0].mxu0 %v499
        %v2095 = vpop.f32.mrb[0].mxu0
        %v2096 = vadd.f32 0.0, %v2095
        %v2097 = vpop.f32.mrb[0].mxu0
        %v2098 = vpop.f32.mrb[0].mxu0
        %v2099 = vpop.f32.mrb[0].mxu0
        %2100 = vdwg.mxu0
        %2101 = vmatprep.subr.bf16.mxu0 0
        %2102 = vmatpush1.bf16.xpose.msra.mxu0 %v468
        %2103 = vmatprep.subr.bf16.mxu0 0
        %2104 = vmatpush1.bf16.xpose.msra.mxu0 0
        %2105 = vmatprep.subr.bf16.mxu0 0
        %2106 = vmatpush1.bf16.xpose.msra.mxu0 0
        %2107 = vmatprep.subr.bf16.mxu0 0
        %2108 = vmatpush1.bf16.xpose.msra.mxu0 0
        %2109 = vmatprep.subr.bf16.mxu0 0
        %2110 = vmatpush1.bf16.xpose.msra.mxu0 0
        %2111 = vmatprep.subr.bf16.mxu0 0
        %2112 = vmatpush1.bf16.xpose.msra.mxu0 0
        %2113 = vmatprep.subr.bf16.mxu0 0
        %2114 = vmatpush1.bf16.xpose.msra.mxu0 0
        %2115 = vmatprep.subr.bf16.mxu0 0
        %2116 = vmatpush1.bf16.xpose.msra.mxu0 0
        %2117 = vmatprep.subr.bf16.mxu0 0
        %2118 = vmatpush1.bf16.xpose.msra.mxu0 0
        %2119 = vmatprep.subr.bf16.mxu0 0
        %2120 = vmatpush1.bf16.xpose.msra.mxu0 0
        %2121 = vmatprep.subr.bf16.mxu0 0
        %2122 = vmatpush1.bf16.xpose.msra.mxu0 0
        %2123 = vmatprep.subr.bf16.mxu0 0
        %2124 = vmatpush1.bf16.xpose.msra.mxu0 0
        %2125 = vmatprep.subr.bf16.mxu0 0
        %2126 = vmatpush1.bf16.xpose.msra.mxu0 0
        %2127 = vmatprep.subr.bf16.mxu0 0
        %2128 = vmatpush1.bf16.xpose.msra.mxu0 0
        %2129 = vmatprep.subr.bf16.mxu0 0
        %2130 = vmatpush1.bf16.xpose.msra.mxu0 0
        %2131 = vmatprep.subr.bf16.mxu0 0
        %2132 = vmatpush1.bf16.xpose.msra.mxu0 0
        %2133 = vmatprep.mubr.bf16.mxu0 0
        %2134 = vmatmul.mubr.bf16.gmra.mrb[0].mxu0 %v500
        %v2135 = vpop.f32.mrb[0].mxu0
        %v2136 = vadd.f32 0.0, %v2135
        %v2137 = vpop.f32.mrb[0].mxu0
        %v2138 = vpop.f32.mrb[0].mxu0
        %v2139 = vpop.f32.mrb[0].mxu0
        %2140 = vdwg.mxu0
        %2141 = vmatprep.subr.bf16.mxu0 0
        %2142 = vmatpush1.bf16.xpose.msra.mxu0 %v469
        %2143 = vmatprep.subr.bf16.mxu0 0
        %2144 = vmatpush1.bf16.xpose.msra.mxu0 0
        %2145 = vmatprep.subr.bf16.mxu0 0
        %2146 = vmatpush1.bf16.xpose.msra.mxu0 0
        %2147 = vmatprep.subr.bf16.mxu0 0
        %2148 = vmatpush1.bf16.xpose.msra.mxu0 0
        %2149 = vmatprep.subr.bf16.mxu0 0
        %2150 = vmatpush1.bf16.xpose.msra.mxu0 0
        %2151 = vmatprep.subr.bf16.mxu0 0
        %2152 = vmatpush1.bf16.xpose.msra.mxu0 0
        %2153 = vmatprep.subr.bf16.mxu0 0
        %2154 = vmatpush1.bf16.xpose.msra.mxu0 0
        %2155 = vmatprep.subr.bf16.mxu0 0
        %2156 = vmatpush1.bf16.xpose.msra.mxu0 0
        %2157 = vmatprep.subr.bf16.mxu0 0
        %2158 = vmatpush1.bf16.xpose.msra.mxu0 0
        %2159 = vmatprep.subr.bf16.mxu0 0
        %2160 = vmatpush1.bf16.xpose.msra.mxu0 0
        %2161 = vmatprep.subr.bf16.mxu0 0
        %2162 = vmatpush1.bf16.xpose.msra.mxu0 0
        %2163 = vmatprep.subr.bf16.mxu0 0
        %2164 = vmatpush1.bf16.xpose.msra.mxu0 0
        %2165 = vmatprep.subr.bf16.mxu0 0
        %2166 = vmatpush1.bf16.xpose.msra.mxu0 0
        %2167 = vmatprep.subr.bf16.mxu0 0
        %2168 = vmatpush1.bf16.xpose.msra.mxu0 0
        %2169 = vmatprep.subr.bf16.mxu0 0
        %2170 = vmatpush1.bf16.xpose.msra.mxu0 0
        %2171 = vmatprep.subr.bf16.mxu0 0
        %2172 = vmatpush1.bf16.xpose.msra.mxu0 0
        %2173 = vmatprep.mubr.bf16.mxu0 0
        %2174 = vmatmul.mubr.bf16.gmra.mrb[0].mxu0 %v501
        %v2175 = vpop.f32.mrb[0].mxu0
        %v2176 = vadd.f32 0.0, %v2175
        %v2177 = vpop.f32.mrb[0].mxu0
        %v2178 = vpop.f32.mrb[0].mxu0
        %v2179 = vpop.f32.mrb[0].mxu0
        %2180 = vdwg.mxu0
        %2181 = vmatprep.subr.bf16.mxu0 0
        %2182 = vmatpush1.bf16.xpose.msra.mxu0 %v470
        %2183 = vmatprep.subr.bf16.mxu0 0
        %2184 = vmatpush1.bf16.xpose.msra.mxu0 0
        %2185 = vmatprep.subr.bf16.mxu0 0
        %2186 = vmatpush1.bf16.xpose.msra.mxu0 0
        %2187 = vmatprep.subr.bf16.mxu0 0
        %2188 = vmatpush1.bf16.xpose.msra.mxu0 0
        %2189 = vmatprep.subr.bf16.mxu0 0
        %2190 = vmatpush1.bf16.xpose.msra.mxu0 0
        %2191 = vmatprep.subr.bf16.mxu0 0
        %2192 = vmatpush1.bf16.xpose.msra.mxu0 0
        %2193 = vmatprep.subr.bf16.mxu0 0
        %2194 = vmatpush1.bf16.xpose.msra.mxu0 0
        %2195 = vmatprep.subr.bf16.mxu0 0
        %2196 = vmatpush1.bf16.xpose.msra.mxu0 0
        %2197 = vmatprep.subr.bf16.mxu0 0
        %2198 = vmatpush1.bf16.xpose.msra.mxu0 0
        %2199 = vmatprep.subr.bf16.mxu0 0
        %2200 = vmatpush1.bf16.xpose.msra.mxu0 0
        %2201 = vmatprep.subr.bf16.mxu0 0
        %2202 = vmatpush1.bf16.xpose.msra.mxu0 0
        %2203 = vmatprep.subr.bf16.mxu0 0
        %2204 = vmatpush1.bf16.xpose.msra.mxu0 0
        %2205 = vmatprep.subr.bf16.mxu0 0
        %2206 = vmatpush1.bf16.xpose.msra.mxu0 0
        %2207 = vmatprep.subr.bf16.mxu0 0
        %2208 = vmatpush1.bf16.xpose.msra.mxu0 0
        %2209 = vmatprep.subr.bf16.mxu0 0
        %2210 = vmatpush1.bf16.xpose.msra.mxu0 0
        %2211 = vmatprep.subr.bf16.mxu0 0
        %2212 = vmatpush1.bf16.xpose.msra.mxu0 0
        %2213 = vmatprep.mubr.bf16.mxu0 0
        %2214 = vmatmul.mubr.bf16.gmra.mrb[0].mxu0 %v502
        %v2215 = vpop.f32.mrb[0].mxu0
        %v2216 = vadd.f32 0.0, %v2215
        %v2217 = vpop.f32.mrb[0].mxu0
        %v2218 = vpop.f32.mrb[0].mxu0
        %v2219 = vpop.f32.mrb[0].mxu0
        %2220 = vdwg.mxu0
        %2221 = vmatprep.subr.bf16.mxu0 0
        %2222 = vmatpush1.bf16.xpose.msra.mxu0 %v471
        %2223 = vmatprep.subr.bf16.mxu0 0
        %2224 = vmatpush1.bf16.xpose.msra.mxu0 0
        %2225 = vmatprep.subr.bf16.mxu0 0
        %2226 = vmatpush1.bf16.xpose.msra.mxu0 0
        %2227 = vmatprep.subr.bf16.mxu0 0
        %2228 = vmatpush1.bf16.xpose.msra.mxu0 0
        %2229 = vmatprep.subr.bf16.mxu0 0
        %2230 = vmatpush1.bf16.xpose.msra.mxu0 0
        %2231 = vmatprep.subr.bf16.mxu0 0
        %2232 = vmatpush1.bf16.xpose.msra.mxu0 0
        %2233 = vmatprep.subr.bf16.mxu0 0
        %2234 = vmatpush1.bf16.xpose.msra.mxu0 0
        %2235 = vmatprep.subr.bf16.mxu0 0
        %2236 = vmatpush1.bf16.xpose.msra.mxu0 0
        %2237 = vmatprep.subr.bf16.mxu0 0
        %2238 = vmatpush1.bf16.xpose.msra.mxu0 0
        %2239 = vmatprep.subr.bf16.mxu0 0
        %2240 = vmatpush1.bf16.xpose.msra.mxu0 0
        %2241 = vmatprep.subr.bf16.mxu0 0
        %2242 = vmatpush1.bf16.xpose.msra.mxu0 0
        %2243 = vmatprep.subr.bf16.mxu0 0
        %2244 = vmatpush1.bf16.xpose.msra.mxu0 0
        %2245 = vmatprep.subr.bf16.mxu0 0
        %2246 = vmatpush1.bf16.xpose.msra.mxu0 0
        %2247 = vmatprep.subr.bf16.mxu0 0
        %2248 = vmatpush1.bf16.xpose.msra.mxu0 0
        %2249 = vmatprep.subr.bf16.mxu0 0
        %2250 = vmatpush1.bf16.xpose.msra.mxu0 0
        %2251 = vmatprep.subr.bf16.mxu0 0
        %2252 = vmatpush1.bf16.xpose.msra.mxu0 0
        %2253 = vmatprep.mubr.bf16.mxu0 0
        %2254 = vmatmul.mubr.bf16.gmra.mrb[0].mxu0 %v503
        %v2255 = vpop.f32.mrb[0].mxu0
        %v2256 = vadd.f32 0.0, %v2255
        %v2257 = vpop.f32.mrb[0].mxu0
        %v2258 = vpop.f32.mrb[0].mxu0
        %v2259 = vpop.f32.mrb[0].mxu0
        %2260 = vdwg.mxu0
        %2261 = vmatprep.subr.bf16.mxu0 0
        %2262 = vmatpush1.bf16.xpose.msra.mxu0 %v472
        %2263 = vmatprep.subr.bf16.mxu0 0
        %2264 = vmatpush1.bf16.xpose.msra.mxu0 0
        %2265 = vmatprep.subr.bf16.mxu0 0
        %2266 = vmatpush1.bf16.xpose.msra.mxu0 0
        %2267 = vmatprep.subr.bf16.mxu0 0
        %2268 = vmatpush1.bf16.xpose.msra.mxu0 0
        %2269 = vmatprep.subr.bf16.mxu0 0
        %2270 = vmatpush1.bf16.xpose.msra.mxu0 0
        %2271 = vmatprep.subr.bf16.mxu0 0
        %2272 = vmatpush1.bf16.xpose.msra.mxu0 0
        %2273 = vmatprep.subr.bf16.mxu0 0
        %2274 = vmatpush1.bf16.xpose.msra.mxu0 0
        %2275 = vmatprep.subr.bf16.mxu0 0
        %2276 = vmatpush1.bf16.xpose.msra.mxu0 0
        %2277 = vmatprep.subr.bf16.mxu0 0
        %2278 = vmatpush1.bf16.xpose.msra.mxu0 0
        %2279 = vmatprep.subr.bf16.mxu0 0
        %2280 = vmatpush1.bf16.xpose.msra.mxu0 0
        %2281 = vmatprep.subr.bf16.mxu0 0
        %2282 = vmatpush1.bf16.xpose.msra.mxu0 0
        %2283 = vmatprep.subr.bf16.mxu0 0
        %2284 = vmatpush1.bf16.xpose.msra.mxu0 0
        %2285 = vmatprep.subr.bf16.mxu0 0
        %2286 = vmatpush1.bf16.xpose.msra.mxu0 0
        %2287 = vmatprep.subr.bf16.mxu0 0
        %2288 = vmatpush1.bf16.xpose.msra.mxu0 0
        %2289 = vmatprep.subr.bf16.mxu0 0
        %2290 = vmatpush1.bf16.xpose.msra.mxu0 0
        %2291 = vmatprep.subr.bf16.mxu0 0
        %2292 = vmatpush1.bf16.xpose.msra.mxu0 0
        %2293 = vmatprep.mubr.bf16.mxu0 0
        %2294 = vmatmul.mubr.bf16.gmra.mrb[0].mxu0 %v504
        %v2295 = vpop.f32.mrb[0].mxu0
        %v2296 = vadd.f32 0.0, %v2295
        %v2297 = vpop.f32.mrb[0].mxu0
        %v2298 = vpop.f32.mrb[0].mxu0
        %v2299 = vpop.f32.mrb[0].mxu0
        %2300 = vdwg.mxu0
        %2301 = vmatprep.subr.bf16.mxu0 0
        %2302 = vmatpush1.bf16.xpose.msra.mxu0 %v473
        %2303 = vmatprep.subr.bf16.mxu0 0
        %2304 = vmatpush1.bf16.xpose.msra.mxu0 0
        %2305 = vmatprep.subr.bf16.mxu0 0
        %2306 = vmatpush1.bf16.xpose.msra.mxu0 0
        %2307 = vmatprep.subr.bf16.mxu0 0
        %2308 = vmatpush1.bf16.xpose.msra.mxu0 0
        %2309 = vmatprep.subr.bf16.mxu0 0
        %2310 = vmatpush1.bf16.xpose.msra.mxu0 0
        %2311 = vmatprep.subr.bf16.mxu0 0
        %2312 = vmatpush1.bf16.xpose.msra.mxu0 0
        %2313 = vmatprep.subr.bf16.mxu0 0
        %2314 = vmatpush1.bf16.xpose.msra.mxu0 0
        %2315 = vmatprep.subr.bf16.mxu0 0
        %2316 = vmatpush1.bf16.xpose.msra.mxu0 0
        %2317 = vmatprep.subr.bf16.mxu0 0
        %2318 = vmatpush1.bf16.xpose.msra.mxu0 0
        %2319 = vmatprep.subr.bf16.mxu0 0
        %2320 = vmatpush1.bf16.xpose.msra.mxu0 0
        %2321 = vmatprep.subr.bf16.mxu0 0
        %2322 = vmatpush1.bf16.xpose.msra.mxu0 0
        %2323 = vmatprep.subr.bf16.mxu0 0
        %2324 = vmatpush1.bf16.xpose.msra.mxu0 0
        %2325 = vmatprep.subr.bf16.mxu0 0
        %2326 = vmatpush1.bf16.xpose.msra.mxu0 0
        %2327 = vmatprep.subr.bf16.mxu0 0
        %2328 = vmatpush1.bf16.xpose.msra.mxu0 0
        %2329 = vmatprep.subr.bf16.mxu0 0
        %2330 = vmatpush1.bf16.xpose.msra.mxu0 0
        %2331 = vmatprep.subr.bf16.mxu0 0
        %2332 = vmatpush1.bf16.xpose.msra.mxu0 0
        %2333 = vmatprep.mubr.bf16.mxu0 0
        %2334 = vmatmul.mubr.bf16.gmra.mrb[0].mxu0 %v505
        %v2335 = vpop.f32.mrb[0].mxu0
        %v2336 = vadd.f32 0.0, %v2335
        %v2337 = vpop.f32.mrb[0].mxu0
        %v2338 = vpop.f32.mrb[0].mxu0
        %v2339 = vpop.f32.mrb[0].mxu0
        %2340 = vdwg.mxu0
        %2341 = vmatprep.subr.bf16.mxu0 0
        %2342 = vmatpush1.bf16.xpose.msra.mxu0 %v474
        %2343 = vmatprep.subr.bf16.mxu0 0
        %2344 = vmatpush1.bf16.xpose.msra.mxu0 0
        %2345 = vmatprep.subr.bf16.mxu0 0
        %2346 = vmatpush1.bf16.xpose.msra.mxu0 0
        %2347 = vmatprep.subr.bf16.mxu0 0
        %2348 = vmatpush1.bf16.xpose.msra.mxu0 0
        %2349 = vmatprep.subr.bf16.mxu0 0
        %2350 = vmatpush1.bf16.xpose.msra.mxu0 0
        %2351 = vmatprep.subr.bf16.mxu0 0
        %2352 = vmatpush1.bf16.xpose.msra.mxu0 0
        %2353 = vmatprep.subr.bf16.mxu0 0
        %2354 = vmatpush1.bf16.xpose.msra.mxu0 0
        %2355 = vmatprep.subr.bf16.mxu0 0
        %2356 = vmatpush1.bf16.xpose.msra.mxu0 0
        %2357 = vmatprep.subr.bf16.mxu0 0
        %2358 = vmatpush1.bf16.xpose.msra.mxu0 0
        %2359 = vmatprep.subr.bf16.mxu0 0
        %2360 = vmatpush1.bf16.xpose.msra.mxu0 0
        %2361 = vmatprep.subr.bf16.mxu0 0
        %2362 = vmatpush1.bf16.xpose.msra.mxu0 0
        %2363 = vmatprep.subr.bf16.mxu0 0
        %2364 = vmatpush1.bf16.xpose.msra.mxu0 0
        %2365 = vmatprep.subr.bf16.mxu0 0
        %2366 = vmatpush1.bf16.xpose.msra.mxu0 0
        %2367 = vmatprep.subr.bf16.mxu0 0
        %2368 = vmatpush1.bf16.xpose.msra.mxu0 0
        %2369 = vmatprep.subr.bf16.mxu0 0
        %2370 = vmatpush1.bf16.xpose.msra.mxu0 0
        %2371 = vmatprep.subr.bf16.mxu0 0
        %2372 = vmatpush1.bf16.xpose.msra.mxu0 0
        %2373 = vmatprep.mubr.bf16.mxu0 0
        %2374 = vmatmul.mubr.bf16.gmra.mrb[0].mxu0 %v506
        %v2375 = vpop.f32.mrb[0].mxu0
        %v2376 = vadd.f32 0.0, %v2375
        %v2377 = vpop.f32.mrb[0].mxu0
        %v2378 = vpop.f32.mrb[0].mxu0
        %v2379 = vpop.f32.mrb[0].mxu0
        %2380 = vdwg.mxu0
        %2381 = vmatprep.subr.bf16.mxu0 0
        %2382 = vmatpush1.bf16.xpose.msra.mxu0 %v475
        %2383 = vmatprep.subr.bf16.mxu0 0
        %2384 = vmatpush1.bf16.xpose.msra.mxu0 0
        %2385 = vmatprep.subr.bf16.mxu0 0
        %2386 = vmatpush1.bf16.xpose.msra.mxu0 0
        %2387 = vmatprep.subr.bf16.mxu0 0
        %2388 = vmatpush1.bf16.xpose.msra.mxu0 0
        %2389 = vmatprep.subr.bf16.mxu0 0
        %2390 = vmatpush1.bf16.xpose.msra.mxu0 0
        %2391 = vmatprep.subr.bf16.mxu0 0
        %2392 = vmatpush1.bf16.xpose.msra.mxu0 0
        %2393 = vmatprep.subr.bf16.mxu0 0
        %2394 = vmatpush1.bf16.xpose.msra.mxu0 0
        %2395 = vmatprep.subr.bf16.mxu0 0
        %2396 = vmatpush1.bf16.xpose.msra.mxu0 0
        %2397 = vmatprep.subr.bf16.mxu0 0
        %2398 = vmatpush1.bf16.xpose.msra.mxu0 0
        %2399 = vmatprep.subr.bf16.mxu0 0
        %2400 = vmatpush1.bf16.xpose.msra.mxu0 0
        %2401 = vmatprep.subr.bf16.mxu0 0
        %2402 = vmatpush1.bf16.xpose.msra.mxu0 0
        %2403 = vmatprep.subr.bf16.mxu0 0
        %2404 = vmatpush1.bf16.xpose.msra.mxu0 0
        %2405 = vmatprep.subr.bf16.mxu0 0
        %2406 = vmatpush1.bf16.xpose.msra.mxu0 0
        %2407 = vmatprep.subr.bf16.mxu0 0
        %2408 = vmatpush1.bf16.xpose.msra.mxu0 0
        %2409 = vmatprep.subr.bf16.mxu0 0
        %2410 = vmatpush1.bf16.xpose.msra.mxu0 0
        %2411 = vmatprep.subr.bf16.mxu0 0
        %2412 = vmatpush1.bf16.xpose.msra.mxu0 0
        %2413 = vmatprep.mubr.bf16.mxu0 0
        %2414 = vmatmul.mubr.bf16.gmra.mrb[0].mxu0 %v507
        %v2415 = vpop.f32.mrb[0].mxu0
        %v2416 = vadd.f32 0.0, %v2415
        %v2417 = vpop.f32.mrb[0].mxu0
        %v2418 = vpop.f32.mrb[0].mxu0
        %v2419 = vpop.f32.mrb[0].mxu0
        %2420 = vdwg.mxu0
        %2421 = vmatprep.subr.bf16.mxu0 0
        %2422 = vmatpush1.bf16.xpose.msra.mxu0 %v476
        %2423 = vmatprep.subr.bf16.mxu0 0
        %2424 = vmatpush1.bf16.xpose.msra.mxu0 0
        %2425 = vmatprep.subr.bf16.mxu0 0
        %2426 = vmatpush1.bf16.xpose.msra.mxu0 0
        %2427 = vmatprep.subr.bf16.mxu0 0
        %2428 = vmatpush1.bf16.xpose.msra.mxu0 0
        %2429 = vmatprep.subr.bf16.mxu0 0
        %2430 = vmatpush1.bf16.xpose.msra.mxu0 0
        %2431 = vmatprep.subr.bf16.mxu0 0
        %2432 = vmatpush1.bf16.xpose.msra.mxu0 0
        %2433 = vmatprep.subr.bf16.mxu0 0
        %2434 = vmatpush1.bf16.xpose.msra.mxu0 0
        %2435 = vmatprep.subr.bf16.mxu0 0
        %2436 = vmatpush1.bf16.xpose.msra.mxu0 0
        %2437 = vmatprep.subr.bf16.mxu0 0
        %2438 = vmatpush1.bf16.xpose.msra.mxu0 0
        %2439 = vmatprep.subr.bf16.mxu0 0
        %2440 = vmatpush1.bf16.xpose.msra.mxu0 0
        %2441 = vmatprep.subr.bf16.mxu0 0
        %2442 = vmatpush1.bf16.xpose.msra.mxu0 0
        %2443 = vmatprep.subr.bf16.mxu0 0
        %2444 = vmatpush1.bf16.xpose.msra.mxu0 0
        %2445 = vmatprep.subr.bf16.mxu0 0
        %2446 = vmatpush1.bf16.xpose.msra.mxu0 0
        %2447 = vmatprep.subr.bf16.mxu0 0
        %2448 = vmatpush1.bf16.xpose.msra.mxu0 0
        %2449 = vmatprep.subr.bf16.mxu0 0
        %2450 = vmatpush1.bf16.xpose.msra.mxu0 0
        %2451 = vmatprep.subr.bf16.mxu0 0
        %2452 = vmatpush1.bf16.xpose.msra.mxu0 0
        %2453 = vmatprep.mubr.bf16.mxu0 0
        %2454 = vmatmul.mubr.bf16.gmra.mrb[0].mxu0 %v508
        %v2455 = vpop.f32.mrb[0].mxu0
        %v2456 = vadd.f32 0.0, %v2455
        %v2457 = vpop.f32.mrb[0].mxu0
        %v2458 = vpop.f32.mrb[0].mxu0
        %v2459 = vpop.f32.mrb[0].mxu0
        %2460 = vdwg.mxu0
        %2461 = vmatprep.subr.bf16.mxu0 0
        %2462 = vmatpush1.bf16.xpose.msra.mxu0 %v477
        %2463 = vmatprep.subr.bf16.mxu0 0
        %2464 = vmatpush1.bf16.xpose.msra.mxu0 0
        %2465 = vmatprep.subr.bf16.mxu0 0
        %2466 = vmatpush1.bf16.xpose.msra.mxu0 0
        %2467 = vmatprep.subr.bf16.mxu0 0
        %2468 = vmatpush1.bf16.xpose.msra.mxu0 0
        %2469 = vmatprep.subr.bf16.mxu0 0
        %2470 = vmatpush1.bf16.xpose.msra.mxu0 0
        %2471 = vmatprep.subr.bf16.mxu0 0
        %2472 = vmatpush1.bf16.xpose.msra.mxu0 0
        %2473 = vmatprep.subr.bf16.mxu0 0
        %2474 = vmatpush1.bf16.xpose.msra.mxu0 0
        %2475 = vmatprep.subr.bf16.mxu0 0
        %2476 = vmatpush1.bf16.xpose.msra.mxu0 0
        %2477 = vmatprep.subr.bf16.mxu0 0
        %2478 = vmatpush1.bf16.xpose.msra.mxu0 0
        %2479 = vmatprep.subr.bf16.mxu0 0
        %2480 = vmatpush1.bf16.xpose.msra.mxu0 0
        %2481 = vmatprep.subr.bf16.mxu0 0
        %2482 = vmatpush1.bf16.xpose.msra.mxu0 0
        %2483 = vmatprep.subr.bf16.mxu0 0
        %2484 = vmatpush1.bf16.xpose.msra.mxu0 0
        %2485 = vmatprep.subr.bf16.mxu0 0
        %2486 = vmatpush1.bf16.xpose.msra.mxu0 0
        %2487 = vmatprep.subr.bf16.mxu0 0
        %2488 = vmatpush1.bf16.xpose.msra.mxu0 0
        %2489 = vmatprep.subr.bf16.mxu0 0
        %2490 = vmatpush1.bf16.xpose.msra.mxu0 0
        %2491 = vmatprep.subr.bf16.mxu0 0
        %2492 = vmatpush1.bf16.xpose.msra.mxu0 0
        %2493 = vmatprep.mubr.bf16.mxu0 0
        %2494 = vmatmul.mubr.bf16.gmra.mrb[0].mxu0 %v509
        %v2495 = vpop.f32.mrb[0].mxu0
        %v2496 = vadd.f32 0.0, %v2495
        %v2497 = vpop.f32.mrb[0].mxu0
        %v2498 = vpop.f32.mrb[0].mxu0
        %v2499 = vpop.f32.mrb[0].mxu0
        %2500 = vdwg.mxu0
        %2501 = vmatprep.subr.bf16.mxu0 0
        %2502 = vmatpush1.bf16.xpose.msra.mxu0 %v478
        %2503 = vmatprep.subr.bf16.mxu0 0
        %2504 = vmatpush1.bf16.xpose.msra.mxu0 0
        %2505 = vmatprep.subr.bf16.mxu0 0
        %2506 = vmatpush1.bf16.xpose.msra.mxu0 0
        %2507 = vmatprep.subr.bf16.mxu0 0
        %2508 = vmatpush1.bf16.xpose.msra.mxu0 0
        %2509 = vmatprep.subr.bf16.mxu0 0
        %2510 = vmatpush1.bf16.xpose.msra.mxu0 0
        %2511 = vmatprep.subr.bf16.mxu0 0
        %2512 = vmatpush1.bf16.xpose.msra.mxu0 0
        %2513 = vmatprep.subr.bf16.mxu0 0
        %2514 = vmatpush1.bf16.xpose.msra.mxu0 0
        %2515 = vmatprep.subr.bf16.mxu0 0
        %2516 = vmatpush1.bf16.xpose.msra.mxu0 0
        %2517 = vmatprep.subr.bf16.mxu0 0
        %2518 = vmatpush1.bf16.xpose.msra.mxu0 0
        %2519 = vmatprep.subr.bf16.mxu0 0
        %2520 = vmatpush1.bf16.xpose.msra.mxu0 0
        %2521 = vmatprep.subr.bf16.mxu0 0
        %2522 = vmatpush1.bf16.xpose.msra.mxu0 0
        %2523 = vmatprep.subr.bf16.mxu0 0
        %2524 = vmatpush1.bf16.xpose.msra.mxu0 0
        %2525 = vmatprep.subr.bf16.mxu0 0
        %2526 = vmatpush1.bf16.xpose.msra.mxu0 0
        %2527 = vmatprep.subr.bf16.mxu0 0
        %2528 = vmatpush1.bf16.xpose.msra.mxu0 0
        %2529 = vmatprep.subr.bf16.mxu0 0
        %2530 = vmatpush1.bf16.xpose.msra.mxu0 0
        %2531 = vmatprep.subr.bf16.mxu0 0
        %2532 = vmatpush1.bf16.xpose.msra.mxu0 0
        %2533 = vmatprep.mubr.bf16.mxu0 0
        %2534 = vmatmul.mubr.bf16.gmra.mrb[0].mxu0 %v510
        %v2535 = vpop.f32.mrb[0].mxu0
        %v2536 = vadd.f32 0.0, %v2535
        %v2537 = vpop.f32.mrb[0].mxu0
        %v2538 = vpop.f32.mrb[0].mxu0
        %v2539 = vpop.f32.mrb[0].mxu0
        %2540 = vdwg.mxu0
        %2541 = vmatprep.subr.bf16.mxu0 0
        %2542 = vmatpush1.bf16.xpose.msra.mxu0 %v479
        %2543 = vmatprep.subr.bf16.mxu0 0
        %2544 = vmatpush1.bf16.xpose.msra.mxu0 0
        %2545 = vmatprep.subr.bf16.mxu0 0
        %2546 = vmatpush1.bf16.xpose.msra.mxu0 0
        %2547 = vmatprep.subr.bf16.mxu0 0
        %2548 = vmatpush1.bf16.xpose.msra.mxu0 0
        %2549 = vmatprep.subr.bf16.mxu0 0
        %2550 = vmatpush1.bf16.xpose.msra.mxu0 0
        %2551 = vmatprep.subr.bf16.mxu0 0
        %2552 = vmatpush1.bf16.xpose.msra.mxu0 0
        %2553 = vmatprep.subr.bf16.mxu0 0
        %2554 = vmatpush1.bf16.xpose.msra.mxu0 0
        %2555 = vmatprep.subr.bf16.mxu0 0
        %2556 = vmatpush1.bf16.xpose.msra.mxu0 0
        %2557 = vmatprep.subr.bf16.mxu0 0
        %2558 = vmatpush1.bf16.xpose.msra.mxu0 0
        %2559 = vmatprep.subr.bf16.mxu0 0
        %2560 = vmatpush1.bf16.xpose.msra.mxu0 0
        %2561 = vmatprep.subr.bf16.mxu0 0
        %2562 = vmatpush1.bf16.xpose.msra.mxu0 0
        %2563 = vmatprep.subr.bf16.mxu0 0
        %2564 = vmatpush1.bf16.xpose.msra.mxu0 0
        %2565 = vmatprep.subr.bf16.mxu0 0
        %2566 = vmatpush1.bf16.xpose.msra.mxu0 0
        %2567 = vmatprep.subr.bf16.mxu0 0
        %2568 = vmatpush1.bf16.xpose.msra.mxu0 0
        %2569 = vmatprep.subr.bf16.mxu0 0
        %2570 = vmatpush1.bf16.xpose.msra.mxu0 0
        %2571 = vmatprep.subr.bf16.mxu0 0
        %2572 = vmatpush1.bf16.xpose.msra.mxu0 0
        %2573 = vmatprep.mubr.bf16.mxu0 0
        %2574 = vmatmul.mubr.bf16.gmra.mrb[0].mxu0 %v511
        %v2575 = vpop.f32.mrb[0].mxu0
        %v2576 = vadd.f32 0.0, %v2575
        %v2577 = vpop.f32.mrb[0].mxu0
        %v2578 = vpop.f32.mrb[0].mxu0
        %v2579 = vpop.f32.mrb[0].mxu0
        %2580 = vdwg.mxu0
        %2581 = vmatprep.subr.bf16.mxu0 0
        %2582 = vmatpush1.bf16.xpose.msra.mxu0 %v480
        %2583 = vmatprep.subr.bf16.mxu0 0
        %2584 = vmatpush1.bf16.xpose.msra.mxu0 0
        %2585 = vmatprep.subr.bf16.mxu0 0
        %2586 = vmatpush1.bf16.xpose.msra.mxu0 0
        %2587 = vmatprep.subr.bf16.mxu0 0
        %2588 = vmatpush1.bf16.xpose.msra.mxu0 0
        %2589 = vmatprep.subr.bf16.mxu0 0
        %2590 = vmatpush1.bf16.xpose.msra.mxu0 0
        %2591 = vmatprep.subr.bf16.mxu0 0
        %2592 = vmatpush1.bf16.xpose.msra.mxu0 0
        %2593 = vmatprep.subr.bf16.mxu0 0
        %2594 = vmatpush1.bf16.xpose.msra.mxu0 0
        %2595 = vmatprep.subr.bf16.mxu0 0
        %2596 = vmatpush1.bf16.xpose.msra.mxu0 0
        %2597 = vmatprep.subr.bf16.mxu0 0
        %2598 = vmatpush1.bf16.xpose.msra.mxu0 0
        %2599 = vmatprep.subr.bf16.mxu0 0
        %2600 = vmatpush1.bf16.xpose.msra.mxu0 0
        %2601 = vmatprep.subr.bf16.mxu0 0
        %2602 = vmatpush1.bf16.xpose.msra.mxu0 0
        %2603 = vmatprep.subr.bf16.mxu0 0
        %2604 = vmatpush1.bf16.xpose.msra.mxu0 0
        %2605 = vmatprep.subr.bf16.mxu0 0
        %2606 = vmatpush1.bf16.xpose.msra.mxu0 0
        %2607 = vmatprep.subr.bf16.mxu0 0
        %2608 = vmatpush1.bf16.xpose.msra.mxu0 0
        %2609 = vmatprep.subr.bf16.mxu0 0
        %2610 = vmatpush1.bf16.xpose.msra.mxu0 0
        %2611 = vmatprep.subr.bf16.mxu0 0
        %2612 = vmatpush1.bf16.xpose.msra.mxu0 0
        %2613 = vmatprep.mubr.bf16.mxu0 0
        %2614 = vmatmul.mubr.bf16.gmra.mrb[0].mxu0 %v512
        %v2615 = vpop.f32.mrb[0].mxu0
        %v2616 = vadd.f32 0.0, %v2615
        %v2617 = vpop.f32.mrb[0].mxu0
        %v2618 = vpop.f32.mrb[0].mxu0
        %v2619 = vpop.f32.mrb[0].mxu0
        %2620 = vdwg.mxu0
        %2621 = vmatprep.subr.bf16.mxu0 0
        %2622 = vmatpush1.bf16.xpose.msra.mxu0 %v481
        %2623 = vmatprep.subr.bf16.mxu0 0
        %2624 = vmatpush1.bf16.xpose.msra.mxu0 0
        %2625 = vmatprep.subr.bf16.mxu0 0
        %2626 = vmatpush1.bf16.xpose.msra.mxu0 0
        %2627 = vmatprep.subr.bf16.mxu0 0
        %2628 = vmatpush1.bf16.xpose.msra.mxu0 0
        %2629 = vmatprep.subr.bf16.mxu0 0
        %2630 = vmatpush1.bf16.xpose.msra.mxu0 0
        %2631 = vmatprep.subr.bf16.mxu0 0
        %2632 = vmatpush1.bf16.xpose.msra.mxu0 0
        %2633 = vmatprep.subr.bf16.mxu0 0
        %2634 = vmatpush1.bf16.xpose.msra.mxu0 0
        %2635 = vmatprep.subr.bf16.mxu0 0
        %2636 = vmatpush1.bf16.xpose.msra.mxu0 0
        %2637 = vmatprep.subr.bf16.mxu0 0
        %2638 = vmatpush1.bf16.xpose.msra.mxu0 0
        %2639 = vmatprep.subr.bf16.mxu0 0
        %2640 = vmatpush1.bf16.xpose.msra.mxu0 0
        %2641 = vmatprep.subr.bf16.mxu0 0
        %2642 = vmatpush1.bf16.xpose.msra.mxu0 0
        %2643 = vmatprep.subr.bf16.mxu0 0
        %2644 = vmatpush1.bf16.xpose.msra.mxu0 0
        %2645 = vmatprep.subr.bf16.mxu0 0
        %2646 = vmatpush1.bf16.xpose.msra.mxu0 0
        %2647 = vmatprep.subr.bf16.mxu0 0
        %2648 = vmatpush1.bf16.xpose.msra.mxu0 0
        %2649 = vmatprep.subr.bf16.mxu0 0
        %2650 = vmatpush1.bf16.xpose.msra.mxu0 0
        %2651 = vmatprep.subr.bf16.mxu0 0
        %2652 = vmatpush1.bf16.xpose.msra.mxu0 0
        %2653 = vmatprep.mubr.bf16.mxu0 0
        %2654 = vmatmul.mubr.bf16.gmra.mrb[0].mxu0 %v513
        %v2655 = vpop.f32.mrb[0].mxu0
        %v2656 = vadd.f32 0.0, %v2655
        %v2657 = vpop.f32.mrb[0].mxu0
        %v2658 = vpop.f32.mrb[0].mxu0
        %v2659 = vpop.f32.mrb[0].mxu0
        %2660 = vdwg.mxu0
        %2661 = vmatprep.subr.bf16.mxu0 0
        %2662 = vmatpush1.bf16.xpose.msra.mxu0 %v482
        %2663 = vmatprep.subr.bf16.mxu0 0
        %2664 = vmatpush1.bf16.xpose.msra.mxu0 0
        %2665 = vmatprep.subr.bf16.mxu0 0
        %2666 = vmatpush1.bf16.xpose.msra.mxu0 0
        %2667 = vmatprep.subr.bf16.mxu0 0
        %2668 = vmatpush1.bf16.xpose.msra.mxu0 0
        %2669 = vmatprep.subr.bf16.mxu0 0
        %2670 = vmatpush1.bf16.xpose.msra.mxu0 0
        %2671 = vmatprep.subr.bf16.mxu0 0
        %2672 = vmatpush1.bf16.xpose.msra.mxu0 0
        %2673 = vmatprep.subr.bf16.mxu0 0
        %2674 = vmatpush1.bf16.xpose.msra.mxu0 0
        %2675 = vmatprep.subr.bf16.mxu0 0
        %2676 = vmatpush1.bf16.xpose.msra.mxu0 0
        %2677 = vmatprep.subr.bf16.mxu0 0
        %2678 = vmatpush1.bf16.xpose.msra.mxu0 0
        %2679 = vmatprep.subr.bf16.mxu0 0
        %2680 = vmatpush1.bf16.xpose.msra.mxu0 0
        %2681 = vmatprep.subr.bf16.mxu0 0
        %2682 = vmatpush1.bf16.xpose.msra.mxu0 0
        %2683 = vmatprep.subr.bf16.mxu0 0
        %2684 = vmatpush1.bf16.xpose.msra.mxu0 0
        %2685 = vmatprep.subr.bf16.mxu0 0
        %2686 = vmatpush1.bf16.xpose.msra.mxu0 0
        %2687 = vmatprep.subr.bf16.mxu0 0
        %2688 = vmatpush1.bf16.xpose.msra.mxu0 0
        %2689 = vmatprep.subr.bf16.mxu0 0
        %2690 = vmatpush1.bf16.xpose.msra.mxu0 0
        %2691 = vmatprep.subr.bf16.mxu0 0
        %2692 = vmatpush1.bf16.xpose.msra.mxu0 0
        %2693 = vmatprep.mubr.bf16.mxu0 0
        %2694 = vmatmul.mubr.bf16.gmra.mrb[0].mxu0 %v514
        %v2695 = vpop.f32.mrb[0].mxu0
        %v2696 = vadd.f32 0.0, %v2695
        %v2697 = vpop.f32.mrb[0].mxu0
        %v2698 = vpop.f32.mrb[0].mxu0
        %v2699 = vpop.f32.mrb[0].mxu0
        %2700 = vdwg.mxu0
        %2701 = vmatprep.subr.bf16.mxu0 0
        %2702 = vmatpush1.bf16.xpose.msra.mxu0 %v483
        %2703 = vmatprep.subr.bf16.mxu0 0
        %2704 = vmatpush1.bf16.xpose.msra.mxu0 0
        %2705 = vmatprep.subr.bf16.mxu0 0
        %2706 = vmatpush1.bf16.xpose.msra.mxu0 0
        %2707 = vmatprep.subr.bf16.mxu0 0
        %2708 = vmatpush1.bf16.xpose.msra.mxu0 0
        %2709 = vmatprep.subr.bf16.mxu0 0
        %2710 = vmatpush1.bf16.xpose.msra.mxu0 0
        %2711 = vmatprep.subr.bf16.mxu0 0
        %2712 = vmatpush1.bf16.xpose.msra.mxu0 0
        %2713 = vmatprep.subr.bf16.mxu0 0
        %2714 = vmatpush1.bf16.xpose.msra.mxu0 0
        %2715 = vmatprep.subr.bf16.mxu0 0
        %2716 = vmatpush1.bf16.xpose.msra.mxu0 0
        %2717 = vmatprep.subr.bf16.mxu0 0
        %2718 = vmatpush1.bf16.xpose.msra.mxu0 0
        %2719 = vmatprep.subr.bf16.mxu0 0
        %2720 = vmatpush1.bf16.xpose.msra.mxu0 0
        %2721 = vmatprep.subr.bf16.mxu0 0
        %2722 = vmatpush1.bf16.xpose.msra.mxu0 0
        %2723 = vmatprep.subr.bf16.mxu0 0
        %2724 = vmatpush1.bf16.xpose.msra.mxu0 0
        %2725 = vmatprep.subr.bf16.mxu0 0
        %2726 = vmatpush1.bf16.xpose.msra.mxu0 0
        %2727 = vmatprep.subr.bf16.mxu0 0
        %2728 = vmatpush1.bf16.xpose.msra.mxu0 0
        %2729 = vmatprep.subr.bf16.mxu0 0
        %2730 = vmatpush1.bf16.xpose.msra.mxu0 0
        %2731 = vmatprep.subr.bf16.mxu0 0
        %2732 = vmatpush1.bf16.xpose.msra.mxu0 0
        %2733 = vmatprep.mubr.bf16.mxu0 0
        %2734 = vmatmul.mubr.bf16.gmra.mrb[0].mxu0 %v515
        %v2735 = vpop.f32.mrb[0].mxu0
        %v2736 = vadd.f32 0.0, %v2735
        %v2737 = vpop.f32.mrb[0].mxu0
        %v2738 = vpop.f32.mrb[0].mxu0
        %v2739 = vpop.f32.mrb[0].mxu0
        %2740 = vdwg.mxu0
        %2741 = vmatprep.subr.bf16.mxu0 0
        %2742 = vmatpush1.bf16.xpose.msra.mxu0 %v484
        %2743 = vmatprep.subr.bf16.mxu0 0
        %2744 = vmatpush1.bf16.xpose.msra.mxu0 0
        %2745 = vmatprep.subr.bf16.mxu0 0
        %2746 = vmatpush1.bf16.xpose.msra.mxu0 0
        %2747 = vmatprep.subr.bf16.mxu0 0
        %2748 = vmatpush1.bf16.xpose.msra.mxu0 0
        %2749 = vmatprep.subr.bf16.mxu0 0
        %2750 = vmatpush1.bf16.xpose.msra.mxu0 0
        %2751 = vmatprep.subr.bf16.mxu0 0
        %2752 = vmatpush1.bf16.xpose.msra.mxu0 0
        %2753 = vmatprep.subr.bf16.mxu0 0
        %2754 = vmatpush1.bf16.xpose.msra.mxu0 0
        %2755 = vmatprep.subr.bf16.mxu0 0
        %2756 = vmatpush1.bf16.xpose.msra.mxu0 0
        %2757 = vmatprep.subr.bf16.mxu0 0
        %2758 = vmatpush1.bf16.xpose.msra.mxu0 0
        %2759 = vmatprep.subr.bf16.mxu0 0
        %2760 = vmatpush1.bf16.xpose.msra.mxu0 0
        %2761 = vmatprep.subr.bf16.mxu0 0
        %2762 = vmatpush1.bf16.xpose.msra.mxu0 0
        %2763 = vmatprep.subr.bf16.mxu0 0
        %2764 = vmatpush1.bf16.xpose.msra.mxu0 0
        %2765 = vmatprep.subr.bf16.mxu0 0
        %2766 = vmatpush1.bf16.xpose.msra.mxu0 0
        %2767 = vmatprep.subr.bf16.mxu0 0
        %2768 = vmatpush1.bf16.xpose.msra.mxu0 0
        %2769 = vmatprep.subr.bf16.mxu0 0
        %2770 = vmatpush1.bf16.xpose.msra.mxu0 0
        %2771 = vmatprep.subr.bf16.mxu0 0
        %2772 = vmatpush1.bf16.xpose.msra.mxu0 0
        %2773 = vmatprep.mubr.bf16.mxu0 0
        %2774 = vmatmul.mubr.bf16.gmra.mrb[0].mxu0 %v516
        %v2775 = vpop.f32.mrb[0].mxu0
        %v2776 = vadd.f32 0.0, %v2775
        %v2777 = vpop.f32.mrb[0].mxu0
        %v2778 = vpop.f32.mrb[0].mxu0
        %v2779 = vpop.f32.mrb[0].mxu0
        %2780 = vdwg.mxu0
        %2781 = vmatprep.subr.bf16.mxu0 0
        %2782 = vmatpush1.bf16.xpose.msra.mxu0 %v485
        %2783 = vmatprep.subr.bf16.mxu0 0
        %2784 = vmatpush1.bf16.xpose.msra.mxu0 0
        %2785 = vmatprep.subr.bf16.mxu0 0
        %2786 = vmatpush1.bf16.xpose.msra.mxu0 0
        %2787 = vmatprep.subr.bf16.mxu0 0
        %2788 = vmatpush1.bf16.xpose.msra.mxu0 0
        %2789 = vmatprep.subr.bf16.mxu0 0
        %2790 = vmatpush1.bf16.xpose.msra.mxu0 0
        %2791 = vmatprep.subr.bf16.mxu0 0
        %2792 = vmatpush1.bf16.xpose.msra.mxu0 0
        %2793 = vmatprep.subr.bf16.mxu0 0
        %2794 = vmatpush1.bf16.xpose.msra.mxu0 0
        %2795 = vmatprep.subr.bf16.mxu0 0
        %2796 = vmatpush1.bf16.xpose.msra.mxu0 0
        %2797 = vmatprep.subr.bf16.mxu0 0
        %2798 = vmatpush1.bf16.xpose.msra.mxu0 0
        %2799 = vmatprep.subr.bf16.mxu0 0
        %2800 = vmatpush1.bf16.xpose.msra.mxu0 0
        %2801 = vmatprep.subr.bf16.mxu0 0
        %2802 = vmatpush1.bf16.xpose.msra.mxu0 0
        %2803 = vmatprep.subr.bf16.mxu0 0
        %2804 = vmatpush1.bf16.xpose.msra.mxu0 0
        %2805 = vmatprep.subr.bf16.mxu0 0
        %2806 = vmatpush1.bf16.xpose.msra.mxu0 0
        %2807 = vmatprep.subr.bf16.mxu0 0
        %2808 = vmatpush1.bf16.xpose.msra.mxu0 0
        %2809 = vmatprep.subr.bf16.mxu0 0
        %2810 = vmatpush1.bf16.xpose.msra.mxu0 0
        %2811 = vmatprep.subr.bf16.mxu0 0
        %2812 = vmatpush1.bf16.xpose.msra.mxu0 0
        %2813 = vmatprep.mubr.bf16.mxu0 0
        %2814 = vmatmul.mubr.bf16.gmra.mrb[0].mxu0 %v517
        %v2815 = vpop.f32.mrb[0].mxu0
        %v2816 = vadd.f32 0.0, %v2815
        %v2817 = vpop.f32.mrb[0].mxu0
        %v2818 = vpop.f32.mrb[0].mxu0
        %v2819 = vpop.f32.mrb[0].mxu0
        %2820 = vdwg.mxu0
        %2821 = vmatprep.subr.bf16.mxu0 0
        %2822 = vmatpush1.bf16.xpose.msra.mxu0 %v486
        %2823 = vmatprep.subr.bf16.mxu0 0
        %2824 = vmatpush1.bf16.xpose.msra.mxu0 0
        %2825 = vmatprep.subr.bf16.mxu0 0
        %2826 = vmatpush1.bf16.xpose.msra.mxu0 0
        %2827 = vmatprep.subr.bf16.mxu0 0
        %2828 = vmatpush1.bf16.xpose.msra.mxu0 0
        %2829 = vmatprep.subr.bf16.mxu0 0
        %2830 = vmatpush1.bf16.xpose.msra.mxu0 0
        %2831 = vmatprep.subr.bf16.mxu0 0
        %2832 = vmatpush1.bf16.xpose.msra.mxu0 0
        %2833 = vmatprep.subr.bf16.mxu0 0
        %2834 = vmatpush1.bf16.xpose.msra.mxu0 0
        %2835 = vmatprep.subr.bf16.mxu0 0
        %2836 = vmatpush1.bf16.xpose.msra.mxu0 0
        %2837 = vmatprep.subr.bf16.mxu0 0
        %2838 = vmatpush1.bf16.xpose.msra.mxu0 0
        %2839 = vmatprep.subr.bf16.mxu0 0
        %2840 = vmatpush1.bf16.xpose.msra.mxu0 0
        %2841 = vmatprep.subr.bf16.mxu0 0
        %2842 = vmatpush1.bf16.xpose.msra.mxu0 0
        %2843 = vmatprep.subr.bf16.mxu0 0
        %2844 = vmatpush1.bf16.xpose.msra.mxu0 0
        %2845 = vmatprep.subr.bf16.mxu0 0
        %2846 = vmatpush1.bf16.xpose.msra.mxu0 0
        %2847 = vmatprep.subr.bf16.mxu0 0
        %2848 = vmatpush1.bf16.xpose.msra.mxu0 0
        %2849 = vmatprep.subr.bf16.mxu0 0
        %2850 = vmatpush1.bf16.xpose.msra.mxu0 0
        %2851 = vmatprep.subr.bf16.mxu0 0
        %2852 = vmatpush1.bf16.xpose.msra.mxu0 0
        %2853 = vmatprep.mubr.bf16.mxu0 0
        %2854 = vmatmul.mubr.bf16.gmra.mrb[0].mxu0 %v518
        %v2855 = vpop.f32.mrb[0].mxu0
        %v2856 = vadd.f32 0.0, %v2855
        %v2857 = vpop.f32.mrb[0].mxu0
        %v2858 = vpop.f32.mrb[0].mxu0
        %v2859 = vpop.f32.mrb[0].mxu0
        %2860 = vdwg.mxu0
        %2861 = vmatprep.subr.bf16.mxu0 0
        %2862 = vmatpush1.bf16.xpose.msra.mxu0 %v487
        %2863 = vmatprep.subr.bf16.mxu0 0
        %2864 = vmatpush1.bf16.xpose.msra.mxu0 0
        %2865 = vmatprep.subr.bf16.mxu0 0
        %2866 = vmatpush1.bf16.xpose.msra.mxu0 0
        %2867 = vmatprep.subr.bf16.mxu0 0
        %2868 = vmatpush1.bf16.xpose.msra.mxu0 0
        %2869 = vmatprep.subr.bf16.mxu0 0
        %2870 = vmatpush1.bf16.xpose.msra.mxu0 0
        %2871 = vmatprep.subr.bf16.mxu0 0
        %2872 = vmatpush1.bf16.xpose.msra.mxu0 0
        %2873 = vmatprep.subr.bf16.mxu0 0
        %2874 = vmatpush1.bf16.xpose.msra.mxu0 0
        %2875 = vmatprep.subr.bf16.mxu0 0
        %2876 = vmatpush1.bf16.xpose.msra.mxu0 0
        %2877 = vmatprep.subr.bf16.mxu0 0
        %2878 = vmatpush1.bf16.xpose.msra.mxu0 0
        %2879 = vmatprep.subr.bf16.mxu0 0
        %2880 = vmatpush1.bf16.xpose.msra.mxu0 0
        %2881 = vmatprep.subr.bf16.mxu0 0
        %2882 = vmatpush1.bf16.xpose.msra.mxu0 0
        %2883 = vmatprep.subr.bf16.mxu0 0
        %2884 = vmatpush1.bf16.xpose.msra.mxu0 0
        %2885 = vmatprep.subr.bf16.mxu0 0
        %2886 = vmatpush1.bf16.xpose.msra.mxu0 0
        %2887 = vmatprep.subr.bf16.mxu0 0
        %2888 = vmatpush1.bf16.xpose.msra.mxu0 0
        %2889 = vmatprep.subr.bf16.mxu0 0
        %2890 = vmatpush1.bf16.xpose.msra.mxu0 0
        %2891 = vmatprep.subr.bf16.mxu0 0
        %2892 = vmatpush1.bf16.xpose.msra.mxu0 0
        %2893 = vmatprep.mubr.bf16.mxu0 0
        %2894 = vmatmul.mubr.bf16.gmra.mrb[0].mxu0 %v519
        %v2895 = vpop.f32.mrb[0].mxu0
        %v2896 = vadd.f32 0.0, %v2895
        %v2897 = vpop.f32.mrb[0].mxu0
        %v2898 = vpop.f32.mrb[0].mxu0
        %v2899 = vpop.f32.mrb[0].mxu0
        %2900 = vdwg.mxu0
        %2901 = vmatprep.subr.bf16.mxu0 0
        %2902 = vmatpush1.bf16.xpose.msra.mxu0 %v488
        %2903 = vmatprep.subr.bf16.mxu0 0
        %2904 = vmatpush1.bf16.xpose.msra.mxu0 0
        %2905 = vmatprep.subr.bf16.mxu0 0
        %2906 = vmatpush1.bf16.xpose.msra.mxu0 0
        %2907 = vmatprep.subr.bf16.mxu0 0
        %2908 = vmatpush1.bf16.xpose.msra.mxu0 0
        %2909 = vmatprep.subr.bf16.mxu0 0
        %2910 = vmatpush1.bf16.xpose.msra.mxu0 0
        %2911 = vmatprep.subr.bf16.mxu0 0
        %2912 = vmatpush1.bf16.xpose.msra.mxu0 0
        %2913 = vmatprep.subr.bf16.mxu0 0
        %2914 = vmatpush1.bf16.xpose.msra.mxu0 0
        %2915 = vmatprep.subr.bf16.mxu0 0
        %2916 = vmatpush1.bf16.xpose.msra.mxu0 0
        %2917 = vmatprep.subr.bf16.mxu0 0
        %2918 = vmatpush1.bf16.xpose.msra.mxu0 0
        %2919 = vmatprep.subr.bf16.mxu0 0
        %2920 = vmatpush1.bf16.xpose.msra.mxu0 0
        %2921 = vmatprep.subr.bf16.mxu0 0
        %2922 = vmatpush1.bf16.xpose.msra.mxu0 0
        %2923 = vmatprep.subr.bf16.mxu0 0
        %2924 = vmatpush1.bf16.xpose.msra.mxu0 0
        %2925 = vmatprep.subr.bf16.mxu0 0
        %2926 = vmatpush1.bf16.xpose.msra.mxu0 0
        %2927 = vmatprep.subr.bf16.mxu0 0
        %2928 = vmatpush1.bf16.xpose.msra.mxu0 0
        %2929 = vmatprep.subr.bf16.mxu0 0
        %2930 = vmatpush1.bf16.xpose.msra.mxu0 0
        %2931 = vmatprep.subr.bf16.mxu0 0
        %2932 = vmatpush1.bf16.xpose.msra.mxu0 0
        %2933 = vmatprep.mubr.bf16.mxu0 0
        %2934 = vmatmul.mubr.bf16.gmra.mrb[0].mxu0 %v520
        %v2935 = vpop.f32.mrb[0].mxu0
        %v2936 = vadd.f32 0.0, %v2935
        %v2937 = vpop.f32.mrb[0].mxu0
        %v2938 = vpop.f32.mrb[0].mxu0
        %v2939 = vpop.f32.mrb[0].mxu0
        %2940 = vdwg.mxu0
        %2941 = vmatprep.subr.bf16.mxu0 0
        %2942 = vmatpush1.bf16.xpose.msra.mxu0 %v489
        %2943 = vmatprep.subr.bf16.mxu0 0
        %2944 = vmatpush1.bf16.xpose.msra.mxu0 0
        %2945 = vmatprep.subr.bf16.mxu0 0
        %2946 = vmatpush1.bf16.xpose.msra.mxu0 0
        %2947 = vmatprep.subr.bf16.mxu0 0
        %2948 = vmatpush1.bf16.xpose.msra.mxu0 0
        %2949 = vmatprep.subr.bf16.mxu0 0
        %2950 = vmatpush1.bf16.xpose.msra.mxu0 0
        %2951 = vmatprep.subr.bf16.mxu0 0
        %2952 = vmatpush1.bf16.xpose.msra.mxu0 0
        %2953 = vmatprep.subr.bf16.mxu0 0
        %2954 = vmatpush1.bf16.xpose.msra.mxu0 0
        %2955 = vmatprep.subr.bf16.mxu0 0
        %2956 = vmatpush1.bf16.xpose.msra.mxu0 0
        %2957 = vmatprep.subr.bf16.mxu0 0
        %2958 = vmatpush1.bf16.xpose.msra.mxu0 0
        %2959 = vmatprep.subr.bf16.mxu0 0
        %2960 = vmatpush1.bf16.xpose.msra.mxu0 0
        %2961 = vmatprep.subr.bf16.mxu0 0
        %2962 = vmatpush1.bf16.xpose.msra.mxu0 0
        %2963 = vmatprep.subr.bf16.mxu0 0
        %2964 = vmatpush1.bf16.xpose.msra.mxu0 0
        %2965 = vmatprep.subr.bf16.mxu0 0
        %2966 = vmatpush1.bf16.xpose.msra.mxu0 0
        %2967 = vmatprep.subr.bf16.mxu0 0
        %2968 = vmatpush1.bf16.xpose.msra.mxu0 0
        %2969 = vmatprep.subr.bf16.mxu0 0
        %2970 = vmatpush1.bf16.xpose.msra.mxu0 0
        %2971 = vmatprep.subr.bf16.mxu0 0
        %2972 = vmatpush1.bf16.xpose.msra.mxu0 0
        %2973 = vmatprep.mubr.bf16.mxu0 0
        %2974 = vmatmul.mubr.bf16.gmra.mrb[0].mxu0 %v521
        %v2975 = vpop.f32.mrb[0].mxu0
        %v2976 = vadd.f32 0.0, %v2975
        %v2977 = vpop.f32.mrb[0].mxu0
        %v2978 = vpop.f32.mrb[0].mxu0
        %v2979 = vpop.f32.mrb[0].mxu0
        %2980 = vdwg.mxu0
        %2981 = vmatprep.subr.bf16.mxu0 0
        %2982 = vmatpush1.bf16.xpose.msra.mxu0 %v490
        %2983 = vmatprep.subr.bf16.mxu0 0
        %2984 = vmatpush1.bf16.xpose.msra.mxu0 0
        %2985 = vmatprep.subr.bf16.mxu0 0
        %2986 = vmatpush1.bf16.xpose.msra.mxu0 0
        %2987 = vmatprep.subr.bf16.mxu0 0
        %2988 = vmatpush1.bf16.xpose.msra.mxu0 0
        %2989 = vmatprep.subr.bf16.mxu0 0
        %2990 = vmatpush1.bf16.xpose.msra.mxu0 0
        %2991 = vmatprep.subr.bf16.mxu0 0
        %2992 = vmatpush1.bf16.xpose.msra.mxu0 0
        %2993 = vmatprep.subr.bf16.mxu0 0
        %2994 = vmatpush1.bf16.xpose.msra.mxu0 0
        %2995 = vmatprep.subr.bf16.mxu0 0
        %2996 = vmatpush1.bf16.xpose.msra.mxu0 0
        %2997 = vmatprep.subr.bf16.mxu0 0
        %2998 = vmatpush1.bf16.xpose.msra.mxu0 0
        %2999 = vmatprep.subr.bf16.mxu0 0
        %3000 = vmatpush1.bf16.xpose.msra.mxu0 0
        %3001 = vmatprep.subr.bf16.mxu0 0
        %3002 = vmatpush1.bf16.xpose.msra.mxu0 0
        %3003 = vmatprep.subr.bf16.mxu0 0
        %3004 = vmatpush1.bf16.xpose.msra.mxu0 0
        %3005 = vmatprep.subr.bf16.mxu0 0
        %3006 = vmatpush1.bf16.xpose.msra.mxu0 0
        %3007 = vmatprep.subr.bf16.mxu0 0
        %3008 = vmatpush1.bf16.xpose.msra.mxu0 0
        %3009 = vmatprep.subr.bf16.mxu0 0
        %3010 = vmatpush1.bf16.xpose.msra.mxu0 0
        %3011 = vmatprep.subr.bf16.mxu0 0
        %3012 = vmatpush1.bf16.xpose.msra.mxu0 0
        %3013 = vmatprep.mubr.bf16.mxu0 0
        %3014 = vmatmul.mubr.bf16.gmra.mrb[0].mxu0 %v522
        %v3015 = vpop.f32.mrb[0].mxu0
        %v3016 = vadd.f32 0.0, %v3015
        %v3017 = vpop.f32.mrb[0].mxu0
        %v3018 = vpop.f32.mrb[0].mxu0
        %v3019 = vpop.f32.mrb[0].mxu0
        %3020 = vdwg.mxu0
        %3021 = vmatprep.subr.bf16.mxu0 0
        %3022 = vmatpush1.bf16.xpose.msra.mxu0 %v491
        %3023 = vmatprep.subr.bf16.mxu0 0
        %3024 = vmatpush1.bf16.xpose.msra.mxu0 0
        %3025 = vmatprep.subr.bf16.mxu0 0
        %3026 = vmatpush1.bf16.xpose.msra.mxu0 0
        %3027 = vmatprep.subr.bf16.mxu0 0
        %3028 = vmatpush1.bf16.xpose.msra.mxu0 0
        %3029 = vmatprep.subr.bf16.mxu0 0
        %3030 = vmatpush1.bf16.xpose.msra.mxu0 0
        %3031 = vmatprep.subr.bf16.mxu0 0
        %3032 = vmatpush1.bf16.xpose.msra.mxu0 0
        %3033 = vmatprep.subr.bf16.mxu0 0
        %3034 = vmatpush1.bf16.xpose.msra.mxu0 0
        %3035 = vmatprep.subr.bf16.mxu0 0
        %3036 = vmatpush1.bf16.xpose.msra.mxu0 0
        %3037 = vmatprep.subr.bf16.mxu0 0
        %3038 = vmatpush1.bf16.xpose.msra.mxu0 0
        %3039 = vmatprep.subr.bf16.mxu0 0
        %3040 = vmatpush1.bf16.xpose.msra.mxu0 0
        %3041 = vmatprep.subr.bf16.mxu0 0
        %3042 = vmatpush1.bf16.xpose.msra.mxu0 0
        %3043 = vmatprep.subr.bf16.mxu0 0
        %3044 = vmatpush1.bf16.xpose.msra.mxu0 0
        %3045 = vmatprep.subr.bf16.mxu0 0
        %3046 = vmatpush1.bf16.xpose.msra.mxu0 0
        %3047 = vmatprep.subr.bf16.mxu0 0
        %3048 = vmatpush1.bf16.xpose.msra.mxu0 0
        %3049 = vmatprep.subr.bf16.mxu0 0
        %3050 = vmatpush1.bf16.xpose.msra.mxu0 0
        %3051 = vmatprep.subr.bf16.mxu0 0
        %3052 = vmatpush1.bf16.xpose.msra.mxu0 0
        %3053 = vmatprep.mubr.bf16.mxu0 0
        %3054 = vmatmul.mubr.bf16.gmra.mrb[0].mxu0 %v523
        %v3055 = vpop.f32.mrb[0].mxu0
        %v3056 = vadd.f32 0.0, %v3055
        %v3057 = vpop.f32.mrb[0].mxu0
        %v3058 = vpop.f32.mrb[0].mxu0
        %v3059 = vpop.f32.mrb[0].mxu0
        %3060 = vdwg.mxu0
        %3061 = vmatprep.subr.bf16.mxu0 0
        %3062 = vmatpush1.bf16.xpose.msra.mxu0 %v492
        %3063 = vmatprep.subr.bf16.mxu0 0
        %3064 = vmatpush1.bf16.xpose.msra.mxu0 0
        %3065 = vmatprep.subr.bf16.mxu0 0
        %3066 = vmatpush1.bf16.xpose.msra.mxu0 0
        %3067 = vmatprep.subr.bf16.mxu0 0
        %3068 = vmatpush1.bf16.xpose.msra.mxu0 0
        %3069 = vmatprep.subr.bf16.mxu0 0
        %3070 = vmatpush1.bf16.xpose.msra.mxu0 0
        %3071 = vmatprep.subr.bf16.mxu0 0
        %3072 = vmatpush1.bf16.xpose.msra.mxu0 0
        %3073 = vmatprep.subr.bf16.mxu0 0
        %3074 = vmatpush1.bf16.xpose.msra.mxu0 0
        %3075 = vmatprep.subr.bf16.mxu0 0
        %3076 = vmatpush1.bf16.xpose.msra.mxu0 0
        %3077 = vmatprep.subr.bf16.mxu0 0
        %3078 = vmatpush1.bf16.xpose.msra.mxu0 0
        %3079 = vmatprep.subr.bf16.mxu0 0
        %3080 = vmatpush1.bf16.xpose.msra.mxu0 0
        %3081 = vmatprep.subr.bf16.mxu0 0
        %3082 = vmatpush1.bf16.xpose.msra.mxu0 0
        %3083 = vmatprep.subr.bf16.mxu0 0
        %3084 = vmatpush1.bf16.xpose.msra.mxu0 0
        %3085 = vmatprep.subr.bf16.mxu0 0
        %3086 = vmatpush1.bf16.xpose.msra.mxu0 0
        %3087 = vmatprep.subr.bf16.mxu0 0
        %3088 = vmatpush1.bf16.xpose.msra.mxu0 0
        %3089 = vmatprep.subr.bf16.mxu0 0
        %3090 = vmatpush1.bf16.xpose.msra.mxu0 0
        %3091 = vmatprep.subr.bf16.mxu0 0
        %3092 = vmatpush1.bf16.xpose.msra.mxu0 0
        %3093 = vmatprep.mubr.bf16.mxu0 0
        %3094 = vmatmul.mubr.bf16.gmra.mrb[0].mxu0 %v524
        %v3095 = vpop.f32.mrb[0].mxu0
        %v3096 = vadd.f32 0.0, %v3095
        %v3097 = vpop.f32.mrb[0].mxu0
        %v3098 = vpop.f32.mrb[0].mxu0
        %v3099 = vpop.f32.mrb[0].mxu0
        %3100 = vdwg.mxu0
        %v3133 = vunpack.c.l.b16 %v429
        %v3134 = vunpack.c.l.b16 %v430
        %v3135 = vunpack.c.l.b16 %v431
        %v3136 = vunpack.c.l.b16 %v432
        %v3137 = vunpack.c.l.b16 %v433
        %v3138 = vunpack.c.l.b16 %v434
        %v3139 = vunpack.c.l.b16 %v435
        %v3140 = vunpack.c.l.b16 %v436
        %v3141 = vunpack.c.l.b16 %v437
        %v3142 = vunpack.c.l.b16 %v438
        %v3143 = vunpack.c.l.b16 %v439
        %v3144 = vunpack.c.l.b16 %v440
        %v3145 = vunpack.c.l.b16 %v441
        %v3146 = vunpack.c.l.b16 %v442
        %v3147 = vunpack.c.l.b16 %v443
        %v3148 = vunpack.c.l.b16 %v444
        %v3149 = vunpack.c.l.b16 %v445
        %v3150 = vunpack.c.l.b16 %v446
        %v3151 = vunpack.c.l.b16 %v447
        %v3152 = vunpack.c.l.b16 %v448
        %v3153 = vunpack.c.l.b16 %v449
        %v3154 = vunpack.c.l.b16 %v450
        %v3155 = vunpack.c.l.b16 %v451
        %v3156 = vunpack.c.l.b16 %v452
        %v3157 = vunpack.c.l.b16 %v453
        %v3158 = vunpack.c.l.b16 %v454
        %v3159 = vunpack.c.l.b16 %v455
        %v3160 = vunpack.c.l.b16 %v456
        %v3161 = vunpack.c.l.b16 %v457
        %v3162 = vunpack.c.l.b16 %v458
        %v3163 = vunpack.c.l.b16 %v459
        %v3164 = vunpack.c.l.b16 %v460
        %v3165 = vpack.c.b16 %v3134, %v3133
        %v3166 = vpack.c.b16 %v3136, %v3135
        %v3167 = vpack.c.b16 %v3138, %v3137
        %v3168 = vpack.c.b16 %v3140, %v3139
        %v3169 = vpack.c.b16 %v3142, %v3141
        %v3170 = vpack.c.b16 %v3144, %v3143
        %v3171 = vpack.c.b16 %v3146, %v3145
        %v3172 = vpack.c.b16 %v3148, %v3147
        %v3173 = vpack.c.b16 %v3150, %v3149
        %v3174 = vpack.c.b16 %v3152, %v3151
        %v3175 = vpack.c.b16 %v3154, %v3153
        %v3176 = vpack.c.b16 %v3156, %v3155
        %v3177 = vpack.c.b16 %v3158, %v3157
        %v3178 = vpack.c.b16 %v3160, %v3159
        %v3179 = vpack.c.b16 %v3162, %v3161
        %v3180 = vpack.c.b16 %v3164, %v3163
        %v3213 = vunpack.c.l.b16 %v525
        %v3214 = vunpack.c.l.b16 %v526
        %v3215 = vunpack.c.l.b16 %v527
        %v3216 = vunpack.c.l.b16 %v528
        %v3217 = vunpack.c.l.b16 %v529
        %v3218 = vunpack.c.l.b16 %v530
        %v3219 = vunpack.c.l.b16 %v531
        %v3220 = vunpack.c.l.b16 %v532
        %v3221 = vunpack.c.l.b16 %v533
        %v3222 = vunpack.c.l.b16 %v534
        %v3223 = vunpack.c.l.b16 %v535
        %v3224 = vunpack.c.l.b16 %v536
        %v3225 = vunpack.c.l.b16 %v537
        %v3226 = vunpack.c.l.b16 %v538
        %v3227 = vunpack.c.l.b16 %v539
        %v3228 = vunpack.c.l.b16 %v540
        %v3229 = vpack.c.b16 %v3214, %v3213
        %v3230 = vpack.c.b16 %v3216, %v3215
        %v3231 = vpack.c.b16 %v3218, %v3217
        %v3232 = vpack.c.b16 %v3220, %v3219
        %v3233 = vpack.c.b16 %v3222, %v3221
        %v3234 = vpack.c.b16 %v3224, %v3223
        %v3235 = vpack.c.b16 %v3226, %v3225
        %v3236 = vpack.c.b16 %v3228, %v3227
        %3245 = vmatprep.subr.bf16.mxu0 0
        %3246 = vmatpush1.bf16.msra.mxu0 %v3229
        %3247 = vmatprep.subr.bf16.mxu0 0
        %3248 = vmatpush1.bf16.msra.mxu0 %v3230
        %3249 = vmatprep.subr.bf16.mxu0 0
        %3250 = vmatpush1.bf16.msra.mxu0 %v3231
        %3251 = vmatprep.subr.bf16.mxu0 0
        %3252 = vmatpush1.bf16.msra.mxu0 %v3232
        %3253 = vmatprep.subr.bf16.mxu0 0
        %3254 = vmatpush1.bf16.msra.mxu0 %v3233
        %3255 = vmatprep.subr.bf16.mxu0 0
        %3256 = vmatpush1.bf16.msra.mxu0 %v3234
        %3257 = vmatprep.subr.bf16.mxu0 0
        %3258 = vmatpush1.bf16.msra.mxu0 %v3235
        %3259 = vmatprep.subr.bf16.mxu0 0
        %3260 = vmatpush1.bf16.msra.mxu0 %v3236
        %3261 = vmatprep.subr.bf16.mxu0 0
        %3262 = vmatpush1.bf16.msra.mxu0 0
        %3263 = vmatprep.subr.bf16.mxu0 0
        %3264 = vmatpush1.bf16.msra.mxu0 0
        %3265 = vmatprep.subr.bf16.mxu0 0
        %3266 = vmatpush1.bf16.msra.mxu0 0
        %3267 = vmatprep.subr.bf16.mxu0 0
        %3268 = vmatpush1.bf16.msra.mxu0 0
        %3269 = vmatprep.subr.bf16.mxu0 0
        %3270 = vmatpush1.bf16.msra.mxu0 0
        %3271 = vmatprep.subr.bf16.mxu0 0
        %3272 = vmatpush1.bf16.msra.mxu0 0
        %3273 = vmatprep.subr.bf16.mxu0 0
        %3274 = vmatpush1.bf16.msra.mxu0 0
        %3275 = vmatprep.subr.bf16.mxu0 0
        %3276 = vmatpush1.bf16.msra.mxu0 0
        %3277 = vmatprep.mubr.bf16.mxu0 0
        %3278 = vmatmul.mubr.bf16.gmra.mrb[0].mxu0 %v3165
        %v3279 = vpop.f32.mrb[0].mxu0
        %v3280 = vadd.f32 0.0, %v3279
        %v3281 = vpop.f32.mrb[0].mxu0
        %v3282 = vpop.f32.mrb[0].mxu0
        %v3283 = vadd.f32 0.0, %v3282
        %v3284 = vpop.f32.mrb[0].mxu0
        %3285 = vmatprep.mubr.bf16.mxu0 0
        %3286 = vmatmul.mubr.bf16.gmra.mrb[0].mxu0 %v3166
        %v3287 = vpop.f32.mrb[0].mxu0
        %v3288 = vadd.f32 0.0, %v3287
        %v3289 = vpop.f32.mrb[0].mxu0
        %v3290 = vpop.f32.mrb[0].mxu0
        %v3291 = vadd.f32 0.0, %v3290
        %v3292 = vpop.f32.mrb[0].mxu0
        %3293 = vmatprep.mubr.bf16.mxu0 0
        %3294 = vmatmul.mubr.bf16.gmra.mrb[0].mxu0 %v3167
        %v3295 = vpop.f32.mrb[0].mxu0
        %v3296 = vadd.f32 0.0, %v3295
        %v3297 = vpop.f32.mrb[0].mxu0
        %v3298 = vpop.f32.mrb[0].mxu0
        %v3299 = vadd.f32 0.0, %v3298
        %v3300 = vpop.f32.mrb[0].mxu0
        %3301 = vmatprep.mubr.bf16.mxu0 0
        %3302 = vmatmul.mubr.bf16.gmra.mrb[0].mxu0 %v3168
        %v3303 = vpop.f32.mrb[0].mxu0
        %v3304 = vadd.f32 0.0, %v3303
        %v3305 = vpop.f32.mrb[0].mxu0
        %v3306 = vpop.f32.mrb[0].mxu0
        %v3307 = vadd.f32 0.0, %v3306
        %v3308 = vpop.f32.mrb[0].mxu0
        %3309 = vmatprep.mubr.bf16.mxu0 0
        %3310 = vmatmul.mubr.bf16.gmra.mrb[0].mxu0 %v3169
        %v3311 = vpop.f32.mrb[0].mxu0
        %v3312 = vadd.f32 0.0, %v3311
        %v3313 = vpop.f32.mrb[0].mxu0
        %v3314 = vpop.f32.mrb[0].mxu0
        %v3315 = vadd.f32 0.0, %v3314
        %v3316 = vpop.f32.mrb[0].mxu0
        %3317 = vmatprep.mubr.bf16.mxu0 0
        %3318 = vmatmul.mubr.bf16.gmra.mrb[0].mxu0 %v3170
        %v3319 = vpop.f32.mrb[0].mxu0
        %v3320 = vadd.f32 0.0, %v3319
        %v3321 = vpop.f32.mrb[0].mxu0
        %v3322 = vpop.f32.mrb[0].mxu0
        %v3323 = vadd.f32 0.0, %v3322
        %v3324 = vpop.f32.mrb[0].mxu0
        %3325 = vmatprep.mubr.bf16.mxu0 0
        %3326 = vmatmul.mubr.bf16.gmra.mrb[0].mxu0 %v3171
        %v3327 = vpop.f32.mrb[0].mxu0
        %v3328 = vadd.f32 0.0, %v3327
        %v3329 = vpop.f32.mrb[0].mxu0
        %v3330 = vpop.f32.mrb[0].mxu0
        %v3331 = vadd.f32 0.0, %v3330
        %v3332 = vpop.f32.mrb[0].mxu0
        %3333 = vmatprep.mubr.bf16.mxu0 0
        %3334 = vmatmul.mubr.bf16.gmra.mrb[0].mxu0 %v3172
        %v3335 = vpop.f32.mrb[0].mxu0
        %v3336 = vadd.f32 0.0, %v3335
        %v3337 = vpop.f32.mrb[0].mxu0
        %v3338 = vpop.f32.mrb[0].mxu0
        %v3339 = vadd.f32 0.0, %v3338
        %v3340 = vpop.f32.mrb[0].mxu0
        %3341 = vmatprep.mubr.bf16.mxu0 0
        %3342 = vmatmul.mubr.bf16.gmra.mrb[0].mxu0 %v3173
        %v3343 = vpop.f32.mrb[0].mxu0
        %v3344 = vadd.f32 0.0, %v3343
        %v3345 = vpop.f32.mrb[0].mxu0
        %v3346 = vpop.f32.mrb[0].mxu0
        %v3347 = vadd.f32 0.0, %v3346
        %v3348 = vpop.f32.mrb[0].mxu0
        %3349 = vmatprep.mubr.bf16.mxu0 0
        %3350 = vmatmul.mubr.bf16.gmra.mrb[0].mxu0 %v3174
        %v3351 = vpop.f32.mrb[0].mxu0
        %v3352 = vadd.f32 0.0, %v3351
        %v3353 = vpop.f32.mrb[0].mxu0
        %v3354 = vpop.f32.mrb[0].mxu0
        %v3355 = vadd.f32 0.0, %v3354
        %v3356 = vpop.f32.mrb[0].mxu0
        %3357 = vmatprep.mubr.bf16.mxu0 0
        %3358 = vmatmul.mubr.bf16.gmra.mrb[0].mxu0 %v3175
        %v3359 = vpop.f32.mrb[0].mxu0
        %v3360 = vadd.f32 0.0, %v3359
        %v3361 = vpop.f32.mrb[0].mxu0
        %v3362 = vpop.f32.mrb[0].mxu0
        %v3363 = vadd.f32 0.0, %v3362
        %v3364 = vpop.f32.mrb[0].mxu0
        %3365 = vmatprep.mubr.bf16.mxu0 0
        %3366 = vmatmul.mubr.bf16.gmra.mrb[0].mxu0 %v3176
        %v3367 = vpop.f32.mrb[0].mxu0
        %v3368 = vadd.f32 0.0, %v3367
        %v3369 = vpop.f32.mrb[0].mxu0
        %v3370 = vpop.f32.mrb[0].mxu0
        %v3371 = vadd.f32 0.0, %v3370
        %v3372 = vpop.f32.mrb[0].mxu0
        %3373 = vmatprep.mubr.bf16.mxu0 0
        %3374 = vmatmul.mubr.bf16.gmra.mrb[0].mxu0 %v3177
        %v3375 = vpop.f32.mrb[0].mxu0
        %v3376 = vadd.f32 0.0, %v3375
        %v3377 = vpop.f32.mrb[0].mxu0
        %v3378 = vpop.f32.mrb[0].mxu0
        %v3379 = vadd.f32 0.0, %v3378
        %v3380 = vpop.f32.mrb[0].mxu0
        %3381 = vmatprep.mubr.bf16.mxu0 0
        %3382 = vmatmul.mubr.bf16.gmra.mrb[0].mxu0 %v3178
        %v3383 = vpop.f32.mrb[0].mxu0
        %v3384 = vadd.f32 0.0, %v3383
        %v3385 = vpop.f32.mrb[0].mxu0
        %v3386 = vpop.f32.mrb[0].mxu0
        %v3387 = vadd.f32 0.0, %v3386
        %v3388 = vpop.f32.mrb[0].mxu0
        %3389 = vmatprep.mubr.bf16.mxu0 0
        %3390 = vmatmul.mubr.bf16.gmra.mrb[0].mxu0 %v3179
        %v3391 = vpop.f32.mrb[0].mxu0
        %v3392 = vadd.f32 0.0, %v3391
        %v3393 = vpop.f32.mrb[0].mxu0
        %v3394 = vpop.f32.mrb[0].mxu0
        %v3395 = vadd.f32 0.0, %v3394
        %v3396 = vpop.f32.mrb[0].mxu0
        %3397 = vmatprep.mubr.bf16.mxu0 0
        %3398 = vmatmul.mubr.bf16.gmra.mrb[0].mxu0 %v3180
        %v3399 = vpop.f32.mrb[0].mxu0
        %v3400 = vadd.f32 0.0, %v3399
        %v3401 = vpop.f32.mrb[0].mxu0
        %v3402 = vpop.f32.mrb[0].mxu0
        %v3403 = vadd.f32 0.0, %v3402
        %v3404 = vpop.f32.mrb[0].mxu0
        %3405 = vdwg.mxu0
        %v3438 = vunpack.c.l.b16 %v461
        %v3439 = vunpack.c.l.b16 %v462
        %v3440 = vunpack.c.l.b16 %v463
        %v3441 = vunpack.c.l.b16 %v464
        %v3442 = vunpack.c.l.b16 %v465
        %v3443 = vunpack.c.l.b16 %v466
        %v3444 = vunpack.c.l.b16 %v467
        %v3445 = vunpack.c.l.b16 %v468
        %v3446 = vunpack.c.l.b16 %v469
        %v3447 = vunpack.c.l.b16 %v470
        %v3448 = vunpack.c.l.b16 %v471
        %v3449 = vunpack.c.l.b16 %v472
        %v3450 = vunpack.c.l.b16 %v473
        %v3451 = vunpack.c.l.b16 %v474
        %v3452 = vunpack.c.l.b16 %v475
        %v3453 = vunpack.c.l.b16 %v476
        %v3454 = vunpack.c.l.b16 %v477
        %v3455 = vunpack.c.l.b16 %v478
        %v3456 = vunpack.c.l.b16 %v479
        %v3457 = vunpack.c.l.b16 %v480
        %v3458 = vunpack.c.l.b16 %v481
        %v3459 = vunpack.c.l.b16 %v482
        %v3460 = vunpack.c.l.b16 %v483
        %v3461 = vunpack.c.l.b16 %v484
        %v3462 = vunpack.c.l.b16 %v485
        %v3463 = vunpack.c.l.b16 %v486
        %v3464 = vunpack.c.l.b16 %v487
        %v3465 = vunpack.c.l.b16 %v488
        %v3466 = vunpack.c.l.b16 %v489
        %v3467 = vunpack.c.l.b16 %v490
        %v3468 = vunpack.c.l.b16 %v491
        %v3469 = vunpack.c.l.b16 %v492
        %v3470 = vpack.c.b16 %v3439, %v3438
        %v3471 = vpack.c.b16 %v3441, %v3440
        %v3472 = vpack.c.b16 %v3443, %v3442
        %v3473 = vpack.c.b16 %v3445, %v3444
        %v3474 = vpack.c.b16 %v3447, %v3446
        %v3475 = vpack.c.b16 %v3449, %v3448
        %v3476 = vpack.c.b16 %v3451, %v3450
        %v3477 = vpack.c.b16 %v3453, %v3452
        %v3478 = vpack.c.b16 %v3455, %v3454
        %v3479 = vpack.c.b16 %v3457, %v3456
        %v3480 = vpack.c.b16 %v3459, %v3458
        %v3481 = vpack.c.b16 %v3461, %v3460
        %v3482 = vpack.c.b16 %v3463, %v3462
        %v3483 = vpack.c.b16 %v3465, %v3464
        %v3484 = vpack.c.b16 %v3467, %v3466
        %v3485 = vpack.c.b16 %v3469, %v3468
        %3502 = vmatprep.subr.bf16.mxu0 0
        %3503 = vmatpush1.bf16.msra.mxu0 %v3229
        %3504 = vmatprep.subr.bf16.mxu0 0
        %3505 = vmatpush1.bf16.msra.mxu0 %v3230
        %3506 = vmatprep.subr.bf16.mxu0 0
        %3507 = vmatpush1.bf16.msra.mxu0 %v3231
        %3508 = vmatprep.subr.bf16.mxu0 0
        %3509 = vmatpush1.bf16.msra.mxu0 %v3232
        %3510 = vmatprep.subr.bf16.mxu0 0
        %3511 = vmatpush1.bf16.msra.mxu0 %v3233
        %3512 = vmatprep.subr.bf16.mxu0 0
        %3513 = vmatpush1.bf16.msra.mxu0 %v3234
        %3514 = vmatprep.subr.bf16.mxu0 0
        %3515 = vmatpush1.bf16.msra.mxu0 %v3235
        %3516 = vmatprep.subr.bf16.mxu0 0
        %3517 = vmatpush1.bf16.msra.mxu0 %v3236
        %3518 = vmatprep.subr.bf16.mxu0 0
        %3519 = vmatpush1.bf16.msra.mxu0 0
        %3520 = vmatprep.subr.bf16.mxu0 0
        %3521 = vmatpush1.bf16.msra.mxu0 0
        %3522 = vmatprep.subr.bf16.mxu0 0
        %3523 = vmatpush1.bf16.msra.mxu0 0
        %3524 = vmatprep.subr.bf16.mxu0 0
        %3525 = vmatpush1.bf16.msra.mxu0 0
        %3526 = vmatprep.subr.bf16.mxu0 0
        %3527 = vmatpush1.bf16.msra.mxu0 0
        %3528 = vmatprep.subr.bf16.mxu0 0
        %3529 = vmatpush1.bf16.msra.mxu0 0
        %3530 = vmatprep.subr.bf16.mxu0 0
        %3531 = vmatpush1.bf16.msra.mxu0 0
        %3532 = vmatprep.subr.bf16.mxu0 0
        %3533 = vmatpush1.bf16.msra.mxu0 0
        %3534 = vmatprep.mubr.bf16.mxu0 0
        %3535 = vmatmul.mubr.bf16.gmra.mrb[0].mxu0 %v3470
        %v3536 = vpop.f32.mrb[0].mxu0
        %v3537 = vadd.f32 0.0, %v3536
        %v3538 = vpop.f32.mrb[0].mxu0
        %v3539 = vpop.f32.mrb[0].mxu0
        %v3540 = vadd.f32 0.0, %v3539
        %v3541 = vpop.f32.mrb[0].mxu0
        %3542 = vmatprep.mubr.bf16.mxu0 0
        %3543 = vmatmul.mubr.bf16.gmra.mrb[0].mxu0 %v3471
        %v3544 = vpop.f32.mrb[0].mxu0
        %v3545 = vadd.f32 0.0, %v3544
        %v3546 = vpop.f32.mrb[0].mxu0
        %v3547 = vpop.f32.mrb[0].mxu0
        %v3548 = vadd.f32 0.0, %v3547
        %v3549 = vpop.f32.mrb[0].mxu0
        %3550 = vmatprep.mubr.bf16.mxu0 0
        %3551 = vmatmul.mubr.bf16.gmra.mrb[0].mxu0 %v3472
        %v3552 = vpop.f32.mrb[0].mxu0
        %v3553 = vadd.f32 0.0, %v3552
        %v3554 = vpop.f32.mrb[0].mxu0
        %v3555 = vpop.f32.mrb[0].mxu0
        %v3556 = vadd.f32 0.0, %v3555
        %v3557 = vpop.f32.mrb[0].mxu0
        %3558 = vmatprep.mubr.bf16.mxu0 0
        %3559 = vmatmul.mubr.bf16.gmra.mrb[0].mxu0 %v3473
        %v3560 = vpop.f32.mrb[0].mxu0
        %v3561 = vadd.f32 0.0, %v3560
        %v3562 = vpop.f32.mrb[0].mxu0
        %v3563 = vpop.f32.mrb[0].mxu0
        %v3564 = vadd.f32 0.0, %v3563
        %v3565 = vpop.f32.mrb[0].mxu0
        %3566 = vmatprep.mubr.bf16.mxu0 0
        %3567 = vmatmul.mubr.bf16.gmra.mrb[0].mxu0 %v3474
        %v3568 = vpop.f32.mrb[0].mxu0
        %v3569 = vadd.f32 0.0, %v3568
        %v3570 = vpop.f32.mrb[0].mxu0
        %v3571 = vpop.f32.mrb[0].mxu0
        %v3572 = vadd.f32 0.0, %v3571
        %v3573 = vpop.f32.mrb[0].mxu0
        %3574 = vmatprep.mubr.bf16.mxu0 0
        %3575 = vmatmul.mubr.bf16.gmra.mrb[0].mxu0 %v3475
        %v3576 = vpop.f32.mrb[0].mxu0
        %v3577 = vadd.f32 0.0, %v3576
        %v3578 = vpop.f32.mrb[0].mxu0
        %v3579 = vpop.f32.mrb[0].mxu0
        %v3580 = vadd.f32 0.0, %v3579
        %v3581 = vpop.f32.mrb[0].mxu0
        %3582 = vmatprep.mubr.bf16.mxu0 0
        %3583 = vmatmul.mubr.bf16.gmra.mrb[0].mxu0 %v3476
        %v3584 = vpop.f32.mrb[0].mxu0
        %v3585 = vadd.f32 0.0, %v3584
        %v3586 = vpop.f32.mrb[0].mxu0
        %v3587 = vpop.f32.mrb[0].mxu0
        %v3588 = vadd.f32 0.0, %v3587
        %v3589 = vpop.f32.mrb[0].mxu0
        %3590 = vmatprep.mubr.bf16.mxu0 0
        %3591 = vmatmul.mubr.bf16.gmra.mrb[0].mxu0 %v3477
        %v3592 = vpop.f32.mrb[0].mxu0
        %v3593 = vadd.f32 0.0, %v3592
        %v3594 = vpop.f32.mrb[0].mxu0
        %v3595 = vpop.f32.mrb[0].mxu0
        %v3596 = vadd.f32 0.0, %v3595
        %v3597 = vpop.f32.mrb[0].mxu0
        %3598 = vmatprep.mubr.bf16.mxu0 0
        %3599 = vmatmul.mubr.bf16.gmra.mrb[0].mxu0 %v3478
        %v3600 = vpop.f32.mrb[0].mxu0
        %v3601 = vadd.f32 0.0, %v3600
        %v3602 = vpop.f32.mrb[0].mxu0
        %v3603 = vpop.f32.mrb[0].mxu0
        %v3604 = vadd.f32 0.0, %v3603
        %v3605 = vpop.f32.mrb[0].mxu0
        %3606 = vmatprep.mubr.bf16.mxu0 0
        %3607 = vmatmul.mubr.bf16.gmra.mrb[0].mxu0 %v3479
        %v3608 = vpop.f32.mrb[0].mxu0
        %v3609 = vadd.f32 0.0, %v3608
        %v3610 = vpop.f32.mrb[0].mxu0
        %v3611 = vpop.f32.mrb[0].mxu0
        %v3612 = vadd.f32 0.0, %v3611
        %v3613 = vpop.f32.mrb[0].mxu0
        %3614 = vmatprep.mubr.bf16.mxu0 0
        %3615 = vmatmul.mubr.bf16.gmra.mrb[0].mxu0 %v3480
        %v3616 = vpop.f32.mrb[0].mxu0
        %v3617 = vadd.f32 0.0, %v3616
        %v3618 = vpop.f32.mrb[0].mxu0
        %v3619 = vpop.f32.mrb[0].mxu0
        %v3620 = vadd.f32 0.0, %v3619
        %v3621 = vpop.f32.mrb[0].mxu0
        %3622 = vmatprep.mubr.bf16.mxu0 0
        %3623 = vmatmul.mubr.bf16.gmra.mrb[0].mxu0 %v3481
        %v3624 = vpop.f32.mrb[0].mxu0
        %v3625 = vadd.f32 0.0, %v3624
        %v3626 = vpop.f32.mrb[0].mxu0
        %v3627 = vpop.f32.mrb[0].mxu0
        %v3628 = vadd.f32 0.0, %v3627
        %v3629 = vpop.f32.mrb[0].mxu0
        %3630 = vmatprep.mubr.bf16.mxu0 0
        %3631 = vmatmul.mubr.bf16.gmra.mrb[0].mxu0 %v3482
        %v3632 = vpop.f32.mrb[0].mxu0
        %v3633 = vadd.f32 0.0, %v3632
        %v3634 = vpop.f32.mrb[0].mxu0
        %v3635 = vpop.f32.mrb[0].mxu0
        %v3636 = vadd.f32 0.0, %v3635
        %v3637 = vpop.f32.mrb[0].mxu0
        %3638 = vmatprep.mubr.bf16.mxu0 0
        %3639 = vmatmul.mubr.bf16.gmra.mrb[0].mxu0 %v3483
        %v3640 = vpop.f32.mrb[0].mxu0
        %v3641 = vadd.f32 0.0, %v3640
        %v3642 = vpop.f32.mrb[0].mxu0
        %v3643 = vpop.f32.mrb[0].mxu0
        %v3644 = vadd.f32 0.0, %v3643
        %v3645 = vpop.f32.mrb[0].mxu0
        %3646 = vmatprep.mubr.bf16.mxu0 0
        %3647 = vmatmul.mubr.bf16.gmra.mrb[0].mxu0 %v3484
        %v3648 = vpop.f32.mrb[0].mxu0
        %v3649 = vadd.f32 0.0, %v3648
        %v3650 = vpop.f32.mrb[0].mxu0
        %v3651 = vpop.f32.mrb[0].mxu0
        %v3652 = vadd.f32 0.0, %v3651
        %v3653 = vpop.f32.mrb[0].mxu0
        %3654 = vmatprep.mubr.bf16.mxu0 0
        %3655 = vmatmul.mubr.bf16.gmra.mrb[0].mxu0 %v3485
        %v3656 = vpop.f32.mrb[0].mxu0
        %v3657 = vadd.f32 0.0, %v3656
        %v3658 = vpop.f32.mrb[0].mxu0
        %v3659 = vpop.f32.mrb[0].mxu0
        %v3660 = vadd.f32 0.0, %v3659
        %v3661 = vpop.f32.mrb[0].mxu0
        %3662 = vdwg.mxu0
        %v3695 = vcombine.low %v493, %v494
        %v3696 = vcombine.low %v495, %v496
        %v3697 = vcombine.low %v497, %v498
        %v3698 = vcombine.low %v499, %v500
        %v3700 = vunpack.c.l.s4 1966171168
        %v3701 = vunpack.c.0.s8 %v3700
        %v3702 = vlaneseq
        %v3703 = vshrl.u32 %v3702, 7
        %v3704 = vsub.s32 %v3701, %v3703
        %v3705 = vrot.slane %v3695, %v3704
        %v3707 = vunpack.c.l.s4 1966171168
        %v3708 = vunpack.c.0.s8 %v3707
        %v3709 = vlaneseq
        %v3710 = vshrl.u32 %v3709, 7
        %v3711 = vsub.s32 %v3708, %v3710
        %v3712 = vrot.slane %v3696, %v3711
        %v3714 = vunpack.c.l.s4 1966171168
        %v3715 = vunpack.c.0.s8 %v3714
        %v3716 = vlaneseq
        %v3717 = vshrl.u32 %v3716, 7
        %v3718 = vsub.s32 %v3715, %v3717
        %v3719 = vrot.slane %v3697, %v3718
        %v3721 = vunpack.c.l.s4 1966171168
        %v3722 = vunpack.c.0.s8 %v3721
        %v3723 = vlaneseq
        %v3724 = vshrl.u32 %v3723, 7
        %v3725 = vsub.s32 %v3722, %v3724
        %v3726 = vrot.slane %v3698, %v3725
        %v3727 = vcombine.low %v3705, %v3712
        %v3728 = vcombine.low %v3719, %v3726
        %v3730 = vunpack.c.l.s4 1966171168
        %v3731 = vunpack.c.0.s8 %v3730
        %v3732 = vlaneseq
        %v3733 = vshrl.u32 %v3732, 7
        %v3734 = vsub.s32 %v3731, %v3733
        %v3735 = vrot.slane %v3727, %v3734
        %v3737 = vunpack.c.l.s4 1966171168
        %v3738 = vunpack.c.0.s8 %v3737
        %v3739 = vlaneseq
        %v3740 = vshrl.u32 %v3739, 7
        %v3741 = vsub.s32 %v3738, %v3740
        %v3742 = vrot.slane %v3728, %v3741
        %v3743 = vcombine.low %v3735, %v3742
        %v3744 = vcombine.low %v501, %v502
        %v3745 = vcombine.low %v503, %v504
        %v3746 = vcombine.low %v505, %v506
        %v3747 = vcombine.low %v507, %v508
        %v3749 = vunpack.c.l.s4 1966171168
        %v3750 = vunpack.c.0.s8 %v3749
        %v3751 = vlaneseq
        %v3752 = vshrl.u32 %v3751, 7
        %v3753 = vsub.s32 %v3750, %v3752
        %v3754 = vrot.slane %v3744, %v3753
        %v3756 = vunpack.c.l.s4 1966171168
        %v3757 = vunpack.c.0.s8 %v3756
        %v3758 = vlaneseq
        %v3759 = vshrl.u32 %v3758, 7
        %v3760 = vsub.s32 %v3757, %v3759
        %v3761 = vrot.slane %v3745, %v3760
        %v3763 = vunpack.c.l.s4 1966171168
        %v3764 = vunpack.c.0.s8 %v3763
        %v3765 = vlaneseq
        %v3766 = vshrl.u32 %v3765, 7
        %v3767 = vsub.s32 %v3764, %v3766
        %v3768 = vrot.slane %v3746, %v3767
        %v3770 = vunpack.c.l.s4 1966171168
        %v3771 = vunpack.c.0.s8 %v3770
        %v3772 = vlaneseq
        %v3773 = vshrl.u32 %v3772, 7
        %v3774 = vsub.s32 %v3771, %v3773
        %v3775 = vrot.slane %v3747, %v3774
        %v3776 = vcombine.low %v3754, %v3761
        %v3777 = vcombine.low %v3768, %v3775
        %v3779 = vunpack.c.l.s4 1966171168
        %v3780 = vunpack.c.0.s8 %v3779
        %v3781 = vlaneseq
        %v3782 = vshrl.u32 %v3781, 7
        %v3783 = vsub.s32 %v3780, %v3782
        %v3784 = vrot.slane %v3776, %v3783
        %v3786 = vunpack.c.l.s4 1966171168
        %v3787 = vunpack.c.0.s8 %v3786
        %v3788 = vlaneseq
        %v3789 = vshrl.u32 %v3788, 7
        %v3790 = vsub.s32 %v3787, %v3789
        %v3791 = vrot.slane %v3777, %v3790
        %v3792 = vcombine.low %v3784, %v3791
        %v3793 = vcombine.low %v509, %v510
        %v3794 = vcombine.low %v511, %v512
        %v3795 = vcombine.low %v513, %v514
        %v3796 = vcombine.low %v515, %v516
        %v3798 = vunpack.c.l.s4 1966171168
        %v3799 = vunpack.c.0.s8 %v3798
        %v3800 = vlaneseq
        %v3801 = vshrl.u32 %v3800, 7
        %v3802 = vsub.s32 %v3799, %v3801
        %v3803 = vrot.slane %v3793, %v3802
        %v3805 = vunpack.c.l.s4 1966171168
        %v3806 = vunpack.c.0.s8 %v3805
        %v3807 = vlaneseq
        %v3808 = vshrl.u32 %v3807, 7
        %v3809 = vsub.s32 %v3806, %v3808
        %v3810 = vrot.slane %v3794, %v3809
        %v3812 = vunpack.c.l.s4 1966171168
        %v3813 = vunpack.c.0.s8 %v3812
        %v3814 = vlaneseq
        %v3815 = vshrl.u32 %v3814, 7
        %v3816 = vsub.s32 %v3813, %v3815
        %v3817 = vrot.slane %v3795, %v3816
        %v3819 = vunpack.c.l.s4 1966171168
        %v3820 = vunpack.c.0.s8 %v3819
        %v3821 = vlaneseq
        %v3822 = vshrl.u32 %v3821, 7
        %v3823 = vsub.s32 %v3820, %v3822
        %v3824 = vrot.slane %v3796, %v3823
        %v3825 = vcombine.low %v3803, %v3810
        %v3826 = vcombine.low %v3817, %v3824
        %v3828 = vunpack.c.l.s4 1966171168
        %v3829 = vunpack.c.0.s8 %v3828
        %v3830 = vlaneseq
        %v3831 = vshrl.u32 %v3830, 7
        %v3832 = vsub.s32 %v3829, %v3831
        %v3833 = vrot.slane %v3825, %v3832
        %v3835 = vunpack.c.l.s4 1966171168
        %v3836 = vunpack.c.0.s8 %v3835
        %v3837 = vlaneseq
        %v3838 = vshrl.u32 %v3837, 7
        %v3839 = vsub.s32 %v3836, %v3838
        %v3840 = vrot.slane %v3826, %v3839
        %v3841 = vcombine.low %v3833, %v3840
        %v3842 = vcombine.low %v517, %v518
        %v3843 = vcombine.low %v519, %v520
        %v3844 = vcombine.low %v521, %v522
        %v3845 = vcombine.low %v523, %v524
        %v3847 = vunpack.c.l.s4 1966171168
        %v3848 = vunpack.c.0.s8 %v3847
        %v3849 = vlaneseq
        %v3850 = vshrl.u32 %v3849, 7
        %v3851 = vsub.s32 %v3848, %v3850
        %v3852 = vrot.slane %v3842, %v3851
        %v3854 = vunpack.c.l.s4 1966171168
        %v3855 = vunpack.c.0.s8 %v3854
        %v3856 = vlaneseq
        %v3857 = vshrl.u32 %v3856, 7
        %v3858 = vsub.s32 %v3855, %v3857
        %v3859 = vrot.slane %v3843, %v3858
        %v3861 = vunpack.c.l.s4 1966171168
        %v3862 = vunpack.c.0.s8 %v3861
        %v3863 = vlaneseq
        %v3864 = vshrl.u32 %v3863, 7
        %v3865 = vsub.s32 %v3862, %v3864
        %v3866 = vrot.slane %v3844, %v3865
        %v3868 = vunpack.c.l.s4 1966171168
        %v3869 = vunpack.c.0.s8 %v3868
        %v3870 = vlaneseq
        %v3871 = vshrl.u32 %v3870, 7
        %v3872 = vsub.s32 %v3869, %v3871
        %v3873 = vrot.slane %v3845, %v3872
        %v3874 = vcombine.low %v3852, %v3859
        %v3875 = vcombine.low %v3866, %v3873
        %v3877 = vunpack.c.l.s4 1966171168
        %v3878 = vunpack.c.0.s8 %v3877
        %v3879 = vlaneseq
        %v3880 = vshrl.u32 %v3879, 7
        %v3881 = vsub.s32 %v3878, %v3880
        %v3882 = vrot.slane %v3874, %v3881
        %v3884 = vunpack.c.l.s4 1966171168
        %v3885 = vunpack.c.0.s8 %v3884
        %v3886 = vlaneseq
        %v3887 = vshrl.u32 %v3886, 7
        %v3888 = vsub.s32 %v3885, %v3887
        %v3889 = vrot.slane %v3875, %v3888
        %v3890 = vcombine.low %v3882, %v3889
        %3895 = vmatprep.subr.bf16.mxu0 0
        %3896 = vmatpush1.bf16.msra.mxu0 %v3229
        %3897 = vmatprep.subr.bf16.mxu0 0
        %3898 = vmatpush1.bf16.msra.mxu0 %v3230
        %3899 = vmatprep.subr.bf16.mxu0 0
        %3900 = vmatpush1.bf16.msra.mxu0 %v3231
        %3901 = vmatprep.subr.bf16.mxu0 0
        %3902 = vmatpush1.bf16.msra.mxu0 %v3232
        %3903 = vmatprep.subr.bf16.mxu0 0
        %3904 = vmatpush1.bf16.msra.mxu0 %v3233
        %3905 = vmatprep.subr.bf16.mxu0 0
        %3906 = vmatpush1.bf16.msra.mxu0 %v3234
        %3907 = vmatprep.subr.bf16.mxu0 0
        %3908 = vmatpush1.bf16.msra.mxu0 %v3235
        %3909 = vmatprep.subr.bf16.mxu0 0
        %3910 = vmatpush1.bf16.msra.mxu0 %v3236
        %3911 = vmatprep.subr.bf16.mxu0 0
        %3912 = vmatpush1.bf16.msra.mxu0 0
        %3913 = vmatprep.subr.bf16.mxu0 0
        %3914 = vmatpush1.bf16.msra.mxu0 0
        %3915 = vmatprep.subr.bf16.mxu0 0
        %3916 = vmatpush1.bf16.msra.mxu0 0
        %3917 = vmatprep.subr.bf16.mxu0 0
        %3918 = vmatpush1.bf16.msra.mxu0 0
        %3919 = vmatprep.subr.bf16.mxu0 0
        %3920 = vmatpush1.bf16.msra.mxu0 0
        %3921 = vmatprep.subr.bf16.mxu0 0
        %3922 = vmatpush1.bf16.msra.mxu0 0
        %3923 = vmatprep.subr.bf16.mxu0 0
        %3924 = vmatpush1.bf16.msra.mxu0 0
        %3925 = vmatprep.subr.bf16.mxu0 0
        %3926 = vmatpush1.bf16.msra.mxu0 0
        %3927 = vmatprep.mubr.bf16.mxu0 0
        %3928 = vmatmul.mubr.bf16.gmra.mrb[0].mxu0 %v3743
        %v3929 = vpop.f32.mrb[0].mxu0
        %v3930 = vadd.f32 0.0, %v3929
        %v3931 = vpop.f32.mrb[0].mxu0
        %v3932 = vpop.f32.mrb[0].mxu0
        %v3933 = vadd.f32 0.0, %v3932
        %v3934 = vpop.f32.mrb[0].mxu0
        %3935 = vmatprep.mubr.bf16.mxu0 0
        %3936 = vmatmul.mubr.bf16.gmra.mrb[0].mxu0 %v3792
        %v3937 = vpop.f32.mrb[0].mxu0
        %v3938 = vadd.f32 0.0, %v3937
        %v3939 = vpop.f32.mrb[0].mxu0
        %v3940 = vpop.f32.mrb[0].mxu0
        %v3941 = vadd.f32 0.0, %v3940
        %v3942 = vpop.f32.mrb[0].mxu0
        %3943 = vmatprep.mubr.bf16.mxu0 0
        %3944 = vmatmul.mubr.bf16.gmra.mrb[0].mxu0 %v3841
        %v3945 = vpop.f32.mrb[0].mxu0
        %v3946 = vadd.f32 0.0, %v3945
        %v3947 = vpop.f32.mrb[0].mxu0
        %v3948 = vpop.f32.mrb[0].mxu0
        %v3949 = vadd.f32 0.0, %v3948
        %v3950 = vpop.f32.mrb[0].mxu0
        %3951 = vmatprep.mubr.bf16.mxu0 0
        %3952 = vmatmul.mubr.bf16.gmra.mrb[0].mxu0 %v3890
        %v3953 = vpop.f32.mrb[0].mxu0
        %v3954 = vadd.f32 0.0, %v3953
        %v3955 = vpop.f32.mrb[0].mxu0
        %v3956 = vpop.f32.mrb[0].mxu0
        %v3957 = vadd.f32 0.0, %v3956
        %v3958 = vpop.f32.mrb[0].mxu0
        %3959 = vdwg.mxu0
        %v3968 = vcombine.high %v3930, %v3930
        %v3970 = vunpack.c.l.s4 1983009808
        %v3971 = vunpack.c.0.s8 %v3970
        %v3972 = vlaneseq
        %v3973 = vshrl.u32 %v3972, 7
        %v3974 = vsub.s32 %v3971, %v3973
        %v3975 = vrot.slane %v3930, %v3974
        %v3977 = vunpack.c.l.s4 1983009808
        %v3978 = vunpack.c.0.s8 %v3977
        %v3979 = vlaneseq
        %v3980 = vshrl.u32 %v3979, 7
        %v3981 = vsub.s32 %v3978, %v3980
        %v3982 = vrot.slane %v3968, %v3981
        %v3983 = vcombine.high %v3975, %v3975
        %v3984 = vcombine.high %v3982, %v3982
        %v3985 = vcombine.high %v3933, %v3933
        %v3987 = vunpack.c.l.s4 1983009808
        %v3988 = vunpack.c.0.s8 %v3987
        %v3989 = vlaneseq
        %v3990 = vshrl.u32 %v3989, 7
        %v3991 = vsub.s32 %v3988, %v3990
        %v3992 = vrot.slane %v3933, %v3991
        %v3994 = vunpack.c.l.s4 1983009808
        %v3995 = vunpack.c.0.s8 %v3994
        %v3996 = vlaneseq
        %v3997 = vshrl.u32 %v3996, 7
        %v3998 = vsub.s32 %v3995, %v3997
        %v3999 = vrot.slane %v3985, %v3998
        %v4000 = vcombine.high %v3992, %v3992
        %v4001 = vcombine.high %v3999, %v3999
        %v4002 = vcombine.high %v3938, %v3938
        %v4004 = vunpack.c.l.s4 1983009808
        %v4005 = vunpack.c.0.s8 %v4004
        %v4006 = vlaneseq
        %v4007 = vshrl.u32 %v4006, 7
        %v4008 = vsub.s32 %v4005, %v4007
        %v4009 = vrot.slane %v3938, %v4008
        %v4011 = vunpack.c.l.s4 1983009808
        %v4012 = vunpack.c.0.s8 %v4011
        %v4013 = vlaneseq
        %v4014 = vshrl.u32 %v4013, 7
        %v4015 = vsub.s32 %v4012, %v4014
        %v4016 = vrot.slane %v4002, %v4015
        %v4017 = vcombine.high %v4009, %v4009
        %v4018 = vcombine.high %v4016, %v4016
        %v4019 = vcombine.high %v3941, %v3941
        %v4021 = vunpack.c.l.s4 1983009808
        %v4022 = vunpack.c.0.s8 %v4021
        %v4023 = vlaneseq
        %v4024 = vshrl.u32 %v4023, 7
        %v4025 = vsub.s32 %v4022, %v4024
        %v4026 = vrot.slane %v3941, %v4025
        %v4028 = vunpack.c.l.s4 1983009808
        %v4029 = vunpack.c.0.s8 %v4028
        %v4030 = vlaneseq
        %v4031 = vshrl.u32 %v4030, 7
        %v4032 = vsub.s32 %v4029, %v4031
        %v4033 = vrot.slane %v4019, %v4032
        %v4034 = vcombine.high %v4026, %v4026
        %v4035 = vcombine.high %v4033, %v4033
        %v4036 = vcombine.high %v3946, %v3946
        %v4038 = vunpack.c.l.s4 1983009808
        %v4039 = vunpack.c.0.s8 %v4038
        %v4040 = vlaneseq
        %v4041 = vshrl.u32 %v4040, 7
        %v4042 = vsub.s32 %v4039, %v4041
        %v4043 = vrot.slane %v3946, %v4042
        %v4045 = vunpack.c.l.s4 1983009808
        %v4046 = vunpack.c.0.s8 %v4045
        %v4047 = vlaneseq
        %v4048 = vshrl.u32 %v4047, 7
        %v4049 = vsub.s32 %v4046, %v4048
        %v4050 = vrot.slane %v4036, %v4049
        %v4051 = vcombine.high %v4043, %v4043
        %v4052 = vcombine.high %v4050, %v4050
        %v4053 = vcombine.high %v3949, %v3949
        %v4055 = vunpack.c.l.s4 1983009808
        %v4056 = vunpack.c.0.s8 %v4055
        %v4057 = vlaneseq
        %v4058 = vshrl.u32 %v4057, 7
        %v4059 = vsub.s32 %v4056, %v4058
        %v4060 = vrot.slane %v3949, %v4059
        %v4062 = vunpack.c.l.s4 1983009808
        %v4063 = vunpack.c.0.s8 %v4062
        %v4064 = vlaneseq
        %v4065 = vshrl.u32 %v4064, 7
        %v4066 = vsub.s32 %v4063, %v4065
        %v4067 = vrot.slane %v4053, %v4066
        %v4068 = vcombine.high %v4060, %v4060
        %v4069 = vcombine.high %v4067, %v4067
        %v4070 = vcombine.high %v3954, %v3954
        %v4072 = vunpack.c.l.s4 1983009808
        %v4073 = vunpack.c.0.s8 %v4072
        %v4074 = vlaneseq
        %v4075 = vshrl.u32 %v4074, 7
        %v4076 = vsub.s32 %v4073, %v4075
        %v4077 = vrot.slane %v3954, %v4076
        %v4079 = vunpack.c.l.s4 1983009808
        %v4080 = vunpack.c.0.s8 %v4079
        %v4081 = vlaneseq
        %v4082 = vshrl.u32 %v4081, 7
        %v4083 = vsub.s32 %v4080, %v4082
        %v4084 = vrot.slane %v4070, %v4083
        %v4085 = vcombine.high %v4077, %v4077
        %v4086 = vcombine.high %v4084, %v4084
        %v4087 = vcombine.high %v3957, %v3957
        %v4089 = vunpack.c.l.s4 1983009808
        %v4090 = vunpack.c.0.s8 %v4089
        %v4091 = vlaneseq
        %v4092 = vshrl.u32 %v4091, 7
        %v4093 = vsub.s32 %v4090, %v4092
        %v4094 = vrot.slane %v3957, %v4093
        %v4096 = vunpack.c.l.s4 1983009808
        %v4097 = vunpack.c.0.s8 %v4096
        %v4098 = vlaneseq
        %v4099 = vshrl.u32 %v4098, 7
        %v4100 = vsub.s32 %v4097, %v4099
        %v4101 = vrot.slane %v4087, %v4100
        %v4102 = vcombine.high %v4094, %v4094
        %v4103 = vcombine.high %v4101, %v4101
        %v4104 = vmul.f32 %v576, %v576
        %v4105 = vmul.f32 %v616, %v616
        %v4106 = vmul.f32 %v656, %v656
        %v4107 = vmul.f32 %v696, %v696
        %v4108 = vmul.f32 %v736, %v736
        %v4109 = vmul.f32 %v776, %v776
        %v4110 = vmul.f32 %v816, %v816
        %v4111 = vmul.f32 %v856, %v856
        %v4112 = vmul.f32 %v896, %v896
        %v4113 = vmul.f32 %v936, %v936
        %v4114 = vmul.f32 %v976, %v976
        %v4115 = vmul.f32 %v1016, %v1016
        %v4116 = vmul.f32 %v1056, %v1056
        %v4117 = vmul.f32 %v1096, %v1096
        %v4118 = vmul.f32 %v1136, %v1136
        %v4119 = vmul.f32 %v1176, %v1176
        %v4120 = vmul.f32 %v1216, %v1216
        %v4121 = vmul.f32 %v1256, %v1256
        %v4122 = vmul.f32 %v1296, %v1296
        %v4123 = vmul.f32 %v1336, %v1336
        %v4124 = vmul.f32 %v1376, %v1376
        %v4125 = vmul.f32 %v1416, %v1416
        %v4126 = vmul.f32 %v1456, %v1456
        %v4127 = vmul.f32 %v1496, %v1496
        %v4128 = vmul.f32 %v1536, %v1536
        %v4129 = vmul.f32 %v1576, %v1576
        %v4130 = vmul.f32 %v1616, %v1616
        %v4131 = vmul.f32 %v1656, %v1656
        %v4132 = vmul.f32 %v1696, %v1696
        %v4133 = vmul.f32 %v1736, %v1736
        %v4134 = vmul.f32 %v1776, %v1776
        %v4135 = vmul.f32 %v1816, %v1816
        %v4168 = vrot.slane %v4105, 7
        %vm4169 = vcmask 1041409
        %v4170 = vsel %vm4169, %v4168, %v4104
        %v4171 = vrot.slane %v4106, 6
        %vm4172 = vcmask 1042434
        %v4173 = vsel %vm4172, %v4171, %v4170
        %v4174 = vrot.slane %v4107, 5
        %vm4175 = vcmask 1043459
        %v4176 = vsel %vm4175, %v4174, %v4173
        %v4177 = vrot.slane %v4109, 7
        %v4178 = vsel %vm4169, %v4177, %v4108
        %v4179 = vrot.slane %v4110, 6
        %v4180 = vsel %vm4172, %v4179, %v4178
        %v4181 = vrot.slane %v4111, 5
        %v4182 = vsel %vm4175, %v4181, %v4180
        %v4183 = vrot.slane %v4113, 7
        %v4184 = vsel %vm4169, %v4183, %v4112
        %v4185 = vrot.slane %v4114, 6
        %v4186 = vsel %vm4172, %v4185, %v4184
        %v4187 = vrot.slane %v4115, 5
        %v4188 = vsel %vm4175, %v4187, %v4186
        %v4189 = vrot.slane %v4117, 7
        %v4190 = vsel %vm4169, %v4189, %v4116
        %v4191 = vrot.slane %v4118, 6
        %v4192 = vsel %vm4172, %v4191, %v4190
        %v4193 = vrot.slane %v4119, 5
        %v4194 = vsel %vm4175, %v4193, %v4192
        %v4195 = vrot.slane %v4121, 7
        %v4196 = vsel %vm4169, %v4195, %v4120
        %v4197 = vrot.slane %v4122, 6
        %v4198 = vsel %vm4172, %v4197, %v4196
        %v4199 = vrot.slane %v4123, 5
        %v4200 = vsel %vm4175, %v4199, %v4198
        %v4201 = vrot.slane %v4125, 7
        %v4202 = vsel %vm4169, %v4201, %v4124
        %v4203 = vrot.slane %v4126, 6
        %v4204 = vsel %vm4172, %v4203, %v4202
        %v4205 = vrot.slane %v4127, 5
        %v4206 = vsel %vm4175, %v4205, %v4204
        %v4207 = vrot.slane %v4129, 7
        %v4208 = vsel %vm4169, %v4207, %v4128
        %v4209 = vrot.slane %v4130, 6
        %v4210 = vsel %vm4172, %v4209, %v4208
        %v4211 = vrot.slane %v4131, 5
        %v4212 = vsel %vm4175, %v4211, %v4210
        %v4213 = vrot.slane %v4133, 7
        %v4214 = vsel %vm4169, %v4213, %v4132
        %v4215 = vrot.slane %v4134, 6
        %v4216 = vsel %vm4172, %v4215, %v4214
        %v4217 = vrot.slane %v4135, 5
        %v4218 = vsel %vm4175, %v4217, %v4216
        %vm4227 = vcmask 60416
        %v4228 = vsel %vm4227, %v4176, 0.0
        %4229 = vadd.xlane.f32.xlu0 %v4228
        %v4230 = vpop.xlane.xlu0 %4229
        %v4231 = vsel %vm4227, %v4182, 0.0
        %4232 = vadd.xlane.f32.xlu0 %v4231
        %v4233 = vpop.xlane.xlu0 %4232
        %v4234 = vsel %vm4227, %v4188, 0.0
        %4235 = vadd.xlane.f32.xlu0 %v4234
        %v4236 = vpop.xlane.xlu0 %4235
        %v4237 = vsel %vm4227, %v4194, 0.0
        %4238 = vadd.xlane.f32.xlu0 %v4237
        %v4239 = vpop.xlane.xlu0 %4238
        %v4240 = vsel %vm4227, %v4200, 0.0
        %4241 = vadd.xlane.f32.xlu0 %v4240
        %v4242 = vpop.xlane.xlu0 %4241
        %v4243 = vsel %vm4227, %v4206, 0.0
        %4244 = vadd.xlane.f32.xlu0 %v4243
        %v4245 = vpop.xlane.xlu0 %4244
        %v4246 = vsel %vm4227, %v4212, 0.0
        %4247 = vadd.xlane.f32.xlu0 %v4246
        %v4248 = vpop.xlane.xlu0 %4247
        %v4249 = vsel %vm4227, %v4218, 0.0
        %4250 = vadd.xlane.f32.xlu0 %v4249
        %v4251 = vpop.xlane.xlu0 %4250
        %v4252 = vsel %vm4172, %v4168, %v4104
        %v4253 = vsel %vm4175, %v4171, %v4252
        %vm4254 = vcmask 1044484
        %v4255 = vsel %vm4254, %v4174, %v4253
        %v4256 = vsel %vm4172, %v4177, %v4108
        %v4257 = vsel %vm4175, %v4179, %v4256
        %v4258 = vsel %vm4254, %v4181, %v4257
        %v4259 = vsel %vm4172, %v4183, %v4112
        %v4260 = vsel %vm4175, %v4185, %v4259
        %v4261 = vsel %vm4254, %v4187, %v4260
        %v4262 = vsel %vm4172, %v4189, %v4116
        %v4263 = vsel %vm4175, %v4191, %v4262
        %v4264 = vsel %vm4254, %v4193, %v4263
        %v4265 = vsel %vm4172, %v4195, %v4120
        %v4266 = vsel %vm4175, %v4197, %v4265
        %v4267 = vsel %vm4254, %v4199, %v4266
        %v4268 = vsel %vm4172, %v4201, %v4124
        %v4269 = vsel %vm4175, %v4203, %v4268
        %v4270 = vsel %vm4254, %v4205, %v4269
        %v4271 = vsel %vm4172, %v4207, %v4128
        %v4272 = vsel %vm4175, %v4209, %v4271
        %v4273 = vsel %vm4254, %v4211, %v4272
        %v4274 = vsel %vm4172, %v4213, %v4132
        %v4275 = vsel %vm4175, %v4215, %v4274
        %v4276 = vsel %vm4254, %v4217, %v4275
        %vm4285 = vcmask 61441
        %v4286 = vsel %vm4285, %v4255, 0.0
        %4287 = vadd.xlane.f32.xlu0 %v4286
        %v4288 = vpop.xlane.xlu0 %4287
        %v4289 = vsel %vm4285, %v4258, 0.0
        %4290 = vadd.xlane.f32.xlu0 %v4289
        %v4291 = vpop.xlane.xlu0 %4290
        %v4292 = vsel %vm4285, %v4261, 0.0
        %4293 = vadd.xlane.f32.xlu0 %v4292
        %v4294 = vpop.xlane.xlu0 %4293
        %v4295 = vsel %vm4285, %v4264, 0.0
        %4296 = vadd.xlane.f32.xlu0 %v4295
        %v4297 = vpop.xlane.xlu0 %4296
        %v4298 = vsel %vm4285, %v4267, 0.0
        %4299 = vadd.xlane.f32.xlu0 %v4298
        %v4300 = vpop.xlane.xlu0 %4299
        %v4301 = vsel %vm4285, %v4270, 0.0
        %4302 = vadd.xlane.f32.xlu0 %v4301
        %v4303 = vpop.xlane.xlu0 %4302
        %v4304 = vsel %vm4285, %v4273, 0.0
        %4305 = vadd.xlane.f32.xlu0 %v4304
        %v4306 = vpop.xlane.xlu0 %4305
        %v4307 = vsel %vm4285, %v4276, 0.0
        %4308 = vadd.xlane.f32.xlu0 %v4307
        %v4309 = vpop.xlane.xlu0 %4308
        %v4310 = vmul.f32 %v1856, %v1856
        %v4311 = vmul.f32 %v1896, %v1896
        %v4312 = vmul.f32 %v1936, %v1936
        %v4313 = vmul.f32 %v1976, %v1976
        %v4314 = vmul.f32 %v2016, %v2016
        %v4315 = vmul.f32 %v2056, %v2056
        %v4316 = vmul.f32 %v2096, %v2096
        %v4317 = vmul.f32 %v2136, %v2136
        %v4318 = vmul.f32 %v2176, %v2176
        %v4319 = vmul.f32 %v2216, %v2216
        %v4320 = vmul.f32 %v2256, %v2256
        %v4321 = vmul.f32 %v2296, %v2296
        %v4322 = vmul.f32 %v2336, %v2336
        %v4323 = vmul.f32 %v2376, %v2376
        %v4324 = vmul.f32 %v2416, %v2416
        %v4325 = vmul.f32 %v2456, %v2456
        %v4326 = vmul.f32 %v2496, %v2496
        %v4327 = vmul.f32 %v2536, %v2536
        %v4328 = vmul.f32 %v2576, %v2576
        %v4329 = vmul.f32 %v2616, %v2616
        %v4330 = vmul.f32 %v2656, %v2656
        %v4331 = vmul.f32 %v2696, %v2696
        %v4332 = vmul.f32 %v2736, %v2736
        %v4333 = vmul.f32 %v2776, %v2776
        %v4334 = vmul.f32 %v2816, %v2816
        %v4335 = vmul.f32 %v2856, %v2856
        %v4336 = vmul.f32 %v2896, %v2896
        %v4337 = vmul.f32 %v2936, %v2936
        %v4338 = vmul.f32 %v2976, %v2976
        %v4339 = vmul.f32 %v3016, %v3016
        %v4340 = vmul.f32 %v3056, %v3056
        %v4341 = vmul.f32 %v3096, %v3096
        %v4374 = vrot.slane %v4311, 7
        %v4375 = vsel %vm4169, %v4374, %v4310
        %v4376 = vrot.slane %v4312, 6
        %v4377 = vsel %vm4172, %v4376, %v4375
        %v4378 = vrot.slane %v4313, 5
        %v4379 = vsel %vm4175, %v4378, %v4377
        %v4380 = vrot.slane %v4315, 7
        %v4381 = vsel %vm4169, %v4380, %v4314
        %v4382 = vrot.slane %v4316, 6
        %v4383 = vsel %vm4172, %v4382, %v4381
        %v4384 = vrot.slane %v4317, 5
        %v4385 = vsel %vm4175, %v4384, %v4383
        %v4386 = vrot.slane %v4319, 7
        %v4387 = vsel %vm4169, %v4386, %v4318
        %v4388 = vrot.slane %v4320, 6
        %v4389 = vsel %vm4172, %v4388, %v4387
        %v4390 = vrot.slane %v4321, 5
        %v4391 = vsel %vm4175, %v4390, %v4389
        %v4392 = vrot.slane %v4323, 7
        %v4393 = vsel %vm4169, %v4392, %v4322
        %v4394 = vrot.slane %v4324, 6
        %v4395 = vsel %vm4172, %v4394, %v4393
        %v4396 = vrot.slane %v4325, 5
        %v4397 = vsel %vm4175, %v4396, %v4395
        %v4398 = vrot.slane %v4327, 7
        %v4399 = vsel %vm4169, %v4398, %v4326
        %v4400 = vrot.slane %v4328, 6
        %v4401 = vsel %vm4172, %v4400, %v4399
        %v4402 = vrot.slane %v4329, 5
        %v4403 = vsel %vm4175, %v4402, %v4401
        %v4404 = vrot.slane %v4331, 7
        %v4405 = vsel %vm4169, %v4404, %v4330
        %v4406 = vrot.slane %v4332, 6
        %v4407 = vsel %vm4172, %v4406, %v4405
        %v4408 = vrot.slane %v4333, 5
        %v4409 = vsel %vm4175, %v4408, %v4407
        %v4410 = vrot.slane %v4335, 7
        %v4411 = vsel %vm4169, %v4410, %v4334
        %v4412 = vrot.slane %v4336, 6
        %v4413 = vsel %vm4172, %v4412, %v4411
        %v4414 = vrot.slane %v4337, 5
        %v4415 = vsel %vm4175, %v4414, %v4413
        %v4416 = vrot.slane %v4339, 7
        %v4417 = vsel %vm4169, %v4416, %v4338
        %v4418 = vrot.slane %v4340, 6
        %v4419 = vsel %vm4172, %v4418, %v4417
        %v4420 = vrot.slane %v4341, 5
        %v4421 = vsel %vm4175, %v4420, %v4419
        %v4430 = vsel %vm4227, %v4379, 0.0
        %4431 = vadd.xlane.f32.xlu0 %v4430
        %v4432 = vpop.xlane.xlu0 %4431
        %v4433 = vsel %vm4227, %v4385, 0.0
        %4434 = vadd.xlane.f32.xlu0 %v4433
        %v4435 = vpop.xlane.xlu0 %4434
        %v4436 = vsel %vm4227, %v4391, 0.0
        %4437 = vadd.xlane.f32.xlu0 %v4436
        %v4438 = vpop.xlane.xlu0 %4437
        %v4439 = vsel %vm4227, %v4397, 0.0
        %4440 = vadd.xlane.f32.xlu0 %v4439
        %v4441 = vpop.xlane.xlu0 %4440
        %v4442 = vsel %vm4227, %v4403, 0.0
        %4443 = vadd.xlane.f32.xlu0 %v4442
        %v4444 = vpop.xlane.xlu0 %4443
        %v4445 = vsel %vm4227, %v4409, 0.0
        %4446 = vadd.xlane.f32.xlu0 %v4445
        %v4447 = vpop.xlane.xlu0 %4446
        %v4448 = vsel %vm4227, %v4415, 0.0
        %4449 = vadd.xlane.f32.xlu0 %v4448
        %v4450 = vpop.xlane.xlu0 %4449
        %v4451 = vsel %vm4227, %v4421, 0.0
        %4452 = vadd.xlane.f32.xlu0 %v4451
        %v4453 = vpop.xlane.xlu0 %4452
        %v4454 = vsel %vm4172, %v4374, %v4310
        %v4455 = vsel %vm4175, %v4376, %v4454
        %v4456 = vsel %vm4254, %v4378, %v4455
        %v4457 = vsel %vm4172, %v4380, %v4314
        %v4458 = vsel %vm4175, %v4382, %v4457
        %v4459 = vsel %vm4254, %v4384, %v4458
        %v4460 = vsel %vm4172, %v4386, %v4318
        %v4461 = vsel %vm4175, %v4388, %v4460
        %v4462 = vsel %vm4254, %v4390, %v4461
        %v4463 = vsel %vm4172, %v4392, %v4322
        %v4464 = vsel %vm4175, %v4394, %v4463
        %v4465 = vsel %vm4254, %v4396, %v4464
        %v4466 = vsel %vm4172, %v4398, %v4326
        %v4467 = vsel %vm4175, %v4400, %v4466
        %v4468 = vsel %vm4254, %v4402, %v4467
        %v4469 = vsel %vm4172, %v4404, %v4330
        %v4470 = vsel %vm4175, %v4406, %v4469
        %v4471 = vsel %vm4254, %v4408, %v4470
        %v4472 = vsel %vm4172, %v4410, %v4334
        %v4473 = vsel %vm4175, %v4412, %v4472
        %v4474 = vsel %vm4254, %v4414, %v4473
        %v4475 = vsel %vm4172, %v4416, %v4338
        %v4476 = vsel %vm4175, %v4418, %v4475
        %v4477 = vsel %vm4254, %v4420, %v4476
        %v4486 = vsel %vm4285, %v4456, 0.0
        %4487 = vadd.xlane.f32.xlu0 %v4486
        %v4488 = vpop.xlane.xlu0 %4487
        %v4489 = vsel %vm4285, %v4459, 0.0
        %4490 = vadd.xlane.f32.xlu0 %v4489
        %v4491 = vpop.xlane.xlu0 %4490
        %v4492 = vsel %vm4285, %v4462, 0.0
        %4493 = vadd.xlane.f32.xlu0 %v4492
        %v4494 = vpop.xlane.xlu0 %4493
        %v4495 = vsel %vm4285, %v4465, 0.0
        %4496 = vadd.xlane.f32.xlu0 %v4495
        %v4497 = vpop.xlane.xlu0 %4496
        %v4498 = vsel %vm4285, %v4468, 0.0
        %4499 = vadd.xlane.f32.xlu0 %v4498
        %v4500 = vpop.xlane.xlu0 %4499
        %v4501 = vsel %vm4285, %v4471, 0.0
        %4502 = vadd.xlane.f32.xlu0 %v4501
        %v4503 = vpop.xlane.xlu0 %4502
        %v4504 = vsel %vm4285, %v4474, 0.0
        %4505 = vadd.xlane.f32.xlu0 %v4504
        %v4506 = vpop.xlane.xlu0 %4505
        %v4507 = vsel %vm4285, %v4477, 0.0
        %4508 = vadd.xlane.f32.xlu0 %v4507
        %v4509 = vpop.xlane.xlu0 %4508
        %4542 = vset.pattern.permute.xlu0 0
        %4543 = vperm.xlu0 %4542, %v3280
        %v4544 = vpop.permute.xlu0 %4543
        %4545 = vset.pattern.permute.xlu0 0
        %4546 = vperm.xlu0 %4545, %v3283
        %v4547 = vpop.permute.xlu0 %4546
        %4548 = vset.pattern.permute.xlu0 0
        %4549 = vperm.xlu0 %4548, %v3288
        %v4550 = vpop.permute.xlu0 %4549
        %4551 = vset.pattern.permute.xlu0 0
        %4552 = vperm.xlu0 %4551, %v3291
        %v4553 = vpop.permute.xlu0 %4552
        %4554 = vset.pattern.permute.xlu0 0
        %4555 = vperm.xlu0 %4554, %v3296
        %v4556 = vpop.permute.xlu0 %4555
        %4557 = vset.pattern.permute.xlu0 0
        %4558 = vperm.xlu0 %4557, %v3299
        %v4559 = vpop.permute.xlu0 %4558
        %4560 = vset.pattern.permute.xlu0 0
        %4561 = vperm.xlu0 %4560, %v3304
        %v4562 = vpop.permute.xlu0 %4561
        %4563 = vset.pattern.permute.xlu0 0
        %4564 = vperm.xlu0 %4563, %v3307
        %v4565 = vpop.permute.xlu0 %4564
        %4566 = vset.pattern.permute.xlu0 0
        %4567 = vperm.xlu0 %4566, %v3312
        %v4568 = vpop.permute.xlu0 %4567
        %4569 = vset.pattern.permute.xlu0 0
        %4570 = vperm.xlu0 %4569, %v3315
        %v4571 = vpop.permute.xlu0 %4570
        %4572 = vset.pattern.permute.xlu0 0
        %4573 = vperm.xlu0 %4572, %v3320
        %v4574 = vpop.permute.xlu0 %4573
        %4575 = vset.pattern.permute.xlu0 0
        %4576 = vperm.xlu0 %4575, %v3323
        %v4577 = vpop.permute.xlu0 %4576
        %4578 = vset.pattern.permute.xlu0 0
        %4579 = vperm.xlu0 %4578, %v3328
        %v4580 = vpop.permute.xlu0 %4579
        %4581 = vset.pattern.permute.xlu0 0
        %4582 = vperm.xlu0 %4581, %v3331
        %v4583 = vpop.permute.xlu0 %4582
        %4584 = vset.pattern.permute.xlu0 0
        %4585 = vperm.xlu0 %4584, %v3336
        %v4586 = vpop.permute.xlu0 %4585
        %4587 = vset.pattern.permute.xlu0 0
        %4588 = vperm.xlu0 %4587, %v3339
        %v4589 = vpop.permute.xlu0 %4588
        %4590 = vset.pattern.permute.xlu0 0
        %4591 = vperm.xlu0 %4590, %v3344
        %v4592 = vpop.permute.xlu0 %4591
        %4593 = vset.pattern.permute.xlu0 0
        %4594 = vperm.xlu0 %4593, %v3347
        %v4595 = vpop.permute.xlu0 %4594
        %4596 = vset.pattern.permute.xlu0 0
        %4597 = vperm.xlu0 %4596, %v3352
        %v4598 = vpop.permute.xlu0 %4597
        %4599 = vset.pattern.permute.xlu0 0
        %4600 = vperm.xlu0 %4599, %v3355
        %v4601 = vpop.permute.xlu0 %4600
        %4602 = vset.pattern.permute.xlu0 0
        %4603 = vperm.xlu0 %4602, %v3360
        %v4604 = vpop.permute.xlu0 %4603
        %4605 = vset.pattern.permute.xlu0 0
        %4606 = vperm.xlu0 %4605, %v3363
        %v4607 = vpop.permute.xlu0 %4606
        %4608 = vset.pattern.permute.xlu0 0
        %4609 = vperm.xlu0 %4608, %v3368
        %v4610 = vpop.permute.xlu0 %4609
        %4611 = vset.pattern.permute.xlu0 0
        %4612 = vperm.xlu0 %4611, %v3371
        %v4613 = vpop.permute.xlu0 %4612
        %4614 = vset.pattern.permute.xlu0 0
        %4615 = vperm.xlu0 %4614, %v3376
        %v4616 = vpop.permute.xlu0 %4615
        %4617 = vset.pattern.permute.xlu0 0
        %4618 = vperm.xlu0 %4617, %v3379
        %v4619 = vpop.permute.xlu0 %4618
        %4620 = vset.pattern.permute.xlu0 0
        %4621 = vperm.xlu0 %4620, %v3384
        %v4622 = vpop.permute.xlu0 %4621
        %4623 = vset.pattern.permute.xlu0 0
        %4624 = vperm.xlu0 %4623, %v3387
        %v4625 = vpop.permute.xlu0 %4624
        %4626 = vset.pattern.permute.xlu0 0
        %4627 = vperm.xlu0 %4626, %v3392
        %v4628 = vpop.permute.xlu0 %4627
        %4629 = vset.pattern.permute.xlu0 0
        %4630 = vperm.xlu0 %4629, %v3395
        %v4631 = vpop.permute.xlu0 %4630
        %4632 = vset.pattern.permute.xlu0 0
        %4633 = vperm.xlu0 %4632, %v3400
        %v4634 = vpop.permute.xlu0 %4633
        %4635 = vset.pattern.permute.xlu0 0
        %4636 = vperm.xlu0 %4635, %v3403
        %v4637 = vpop.permute.xlu0 %4636
        %v4638 = vlaneseq
        %v4639 = vand.u32 %v4638, 127
        %v4640 = vlaneseq
        %v4641 = vshrl.u32 %v4640, 7
        %v4642 = vsub.s32 %v4639, %v4641
        %v4643 = vrot.slane %v4544, %v4642
        %v4644 = vlaneseq
        %v4645 = vshrl.u32 %v4644, 7
        %v4646 = vsub.s32 %v4639, %v4645
        %v4647 = vrot.slane %v4547, %v4646
        %v4648 = vlaneseq
        %v4649 = vshrl.u32 %v4648, 7
        %v4650 = vsub.s32 %v4639, %v4649
        %v4651 = vrot.slane %v4550, %v4650
        %v4652 = vlaneseq
        %v4653 = vshrl.u32 %v4652, 7
        %v4654 = vsub.s32 %v4639, %v4653
        %v4655 = vrot.slane %v4553, %v4654
        %v4656 = vlaneseq
        %v4657 = vshrl.u32 %v4656, 7
        %v4658 = vsub.s32 %v4639, %v4657
        %v4659 = vrot.slane %v4556, %v4658
        %v4660 = vlaneseq
        %v4661 = vshrl.u32 %v4660, 7
        %v4662 = vsub.s32 %v4639, %v4661
        %v4663 = vrot.slane %v4559, %v4662
        %v4664 = vlaneseq
        %v4665 = vshrl.u32 %v4664, 7
        %v4666 = vsub.s32 %v4639, %v4665
        %v4667 = vrot.slane %v4562, %v4666
        %v4668 = vlaneseq
        %v4669 = vshrl.u32 %v4668, 7
        %v4670 = vsub.s32 %v4639, %v4669
        %v4671 = vrot.slane %v4565, %v4670
        %v4672 = vlaneseq
        %v4673 = vshrl.u32 %v4672, 7
        %v4674 = vsub.s32 %v4639, %v4673
        %v4675 = vrot.slane %v4568, %v4674
        %v4676 = vlaneseq
        %v4677 = vshrl.u32 %v4676, 7
        %v4678 = vsub.s32 %v4639, %v4677
        %v4679 = vrot.slane %v4571, %v4678
        %v4680 = vlaneseq
        %v4681 = vshrl.u32 %v4680, 7
        %v4682 = vsub.s32 %v4639, %v4681
        %v4683 = vrot.slane %v4574, %v4682
        %v4684 = vlaneseq
        %v4685 = vshrl.u32 %v4684, 7
        %v4686 = vsub.s32 %v4639, %v4685
        %v4687 = vrot.slane %v4577, %v4686
        %v4688 = vlaneseq
        %v4689 = vshrl.u32 %v4688, 7
        %v4690 = vsub.s32 %v4639, %v4689
        %v4691 = vrot.slane %v4580, %v4690
        %v4692 = vlaneseq
        %v4693 = vshrl.u32 %v4692, 7
        %v4694 = vsub.s32 %v4639, %v4693
        %v4695 = vrot.slane %v4583, %v4694
        %v4696 = vlaneseq
        %v4697 = vshrl.u32 %v4696, 7
        %v4698 = vsub.s32 %v4639, %v4697
        %v4699 = vrot.slane %v4586, %v4698
        %v4700 = vlaneseq
        %v4701 = vshrl.u32 %v4700, 7
        %v4702 = vsub.s32 %v4639, %v4701
        %v4703 = vrot.slane %v4589, %v4702
        %v4704 = vlaneseq
        %v4705 = vshrl.u32 %v4704, 7
        %v4706 = vsub.s32 %v4639, %v4705
        %v4707 = vrot.slane %v4592, %v4706
        %v4708 = vlaneseq
        %v4709 = vshrl.u32 %v4708, 7
        %v4710 = vsub.s32 %v4639, %v4709
        %v4711 = vrot.slane %v4595, %v4710
        %v4712 = vlaneseq
        %v4713 = vshrl.u32 %v4712, 7
        %v4714 = vsub.s32 %v4639, %v4713
        %v4715 = vrot.slane %v4598, %v4714
        %v4716 = vlaneseq
        %v4717 = vshrl.u32 %v4716, 7
        %v4718 = vsub.s32 %v4639, %v4717
        %v4719 = vrot.slane %v4601, %v4718
        %v4720 = vlaneseq
        %v4721 = vshrl.u32 %v4720, 7
        %v4722 = vsub.s32 %v4639, %v4721
        %v4723 = vrot.slane %v4604, %v4722
        %v4724 = vlaneseq
        %v4725 = vshrl.u32 %v4724, 7
        %v4726 = vsub.s32 %v4639, %v4725
        %v4727 = vrot.slane %v4607, %v4726
        %v4728 = vlaneseq
        %v4729 = vshrl.u32 %v4728, 7
        %v4730 = vsub.s32 %v4639, %v4729
        %v4731 = vrot.slane %v4610, %v4730
        %v4732 = vlaneseq
        %v4733 = vshrl.u32 %v4732, 7
        %v4734 = vsub.s32 %v4639, %v4733
        %v4735 = vrot.slane %v4613, %v4734
        %v4736 = vlaneseq
        %v4737 = vshrl.u32 %v4736, 7
        %v4738 = vsub.s32 %v4639, %v4737
        %v4739 = vrot.slane %v4616, %v4738
        %v4740 = vlaneseq
        %v4741 = vshrl.u32 %v4740, 7
        %v4742 = vsub.s32 %v4639, %v4741
        %v4743 = vrot.slane %v4619, %v4742
        %v4744 = vlaneseq
        %v4745 = vshrl.u32 %v4744, 7
        %v4746 = vsub.s32 %v4639, %v4745
        %v4747 = vrot.slane %v4622, %v4746
        %v4748 = vlaneseq
        %v4749 = vshrl.u32 %v4748, 7
        %v4750 = vsub.s32 %v4639, %v4749
        %v4751 = vrot.slane %v4625, %v4750
        %v4752 = vlaneseq
        %v4753 = vshrl.u32 %v4752, 7
        %v4754 = vsub.s32 %v4639, %v4753
        %v4755 = vrot.slane %v4628, %v4754
        %v4756 = vlaneseq
        %v4757 = vshrl.u32 %v4756, 7
        %v4758 = vsub.s32 %v4639, %v4757
        %v4759 = vrot.slane %v4631, %v4758
        %v4760 = vlaneseq
        %v4761 = vshrl.u32 %v4760, 7
        %v4762 = vsub.s32 %v4639, %v4761
        %v4763 = vrot.slane %v4634, %v4762
        %v4764 = vlaneseq
        %v4765 = vshrl.u32 %v4764, 7
        %v4766 = vsub.s32 %v4639, %v4765
        %v4767 = vrot.slane %v4637, %v4766
        %v4800 = vmul.f32 %v576, %v4643
        %v4801 = vmul.f32 %v616, %v4647
        %v4802 = vmul.f32 %v656, %v4651
        %v4803 = vmul.f32 %v696, %v4655
        %v4804 = vmul.f32 %v736, %v4659
        %v4805 = vmul.f32 %v776, %v4663
        %v4806 = vmul.f32 %v816, %v4667
        %v4807 = vmul.f32 %v856, %v4671
        %v4808 = vmul.f32 %v896, %v4675
        %v4809 = vmul.f32 %v936, %v4679
        %v4810 = vmul.f32 %v976, %v4683
        %v4811 = vmul.f32 %v1016, %v4687
        %v4812 = vmul.f32 %v1056, %v4691
        %v4813 = vmul.f32 %v1096, %v4695
        %v4814 = vmul.f32 %v1136, %v4699
        %v4815 = vmul.f32 %v1176, %v4703
        %v4816 = vmul.f32 %v1216, %v4707
        %v4817 = vmul.f32 %v1256, %v4711
        %v4818 = vmul.f32 %v1296, %v4715
        %v4819 = vmul.f32 %v1336, %v4719
        %v4820 = vmul.f32 %v1376, %v4723
        %v4821 = vmul.f32 %v1416, %v4727
        %v4822 = vmul.f32 %v1456, %v4731
        %v4823 = vmul.f32 %v1496, %v4735
        %v4824 = vmul.f32 %v1536, %v4739
        %v4825 = vmul.f32 %v1576, %v4743
        %v4826 = vmul.f32 %v1616, %v4747
        %v4827 = vmul.f32 %v1656, %v4751
        %v4828 = vmul.f32 %v1696, %v4755
        %v4829 = vmul.f32 %v1736, %v4759
        %v4830 = vmul.f32 %v1776, %v4763
        %v4831 = vmul.f32 %v1816, %v4767
        %v4864 = vrot.slane %v4801, 7
        %v4865 = vsel %vm4169, %v4864, %v4800
        %v4866 = vrot.slane %v4802, 6
        %v4867 = vsel %vm4172, %v4866, %v4865
        %v4868 = vrot.slane %v4803, 5
        %v4869 = vsel %vm4175, %v4868, %v4867
        %v4870 = vrot.slane %v4805, 7
        %v4871 = vsel %vm4169, %v4870, %v4804
        %v4872 = vrot.slane %v4806, 6
        %v4873 = vsel %vm4172, %v4872, %v4871
        %v4874 = vrot.slane %v4807, 5
        %v4875 = vsel %vm4175, %v4874, %v4873
        %v4876 = vrot.slane %v4809, 7
        %v4877 = vsel %vm4169, %v4876, %v4808
        %v4878 = vrot.slane %v4810, 6
        %v4879 = vsel %vm4172, %v4878, %v4877
        %v4880 = vrot.slane %v4811, 5
        %v4881 = vsel %vm4175, %v4880, %v4879
        %v4882 = vrot.slane %v4813, 7
        %v4883 = vsel %vm4169, %v4882, %v4812
        %v4884 = vrot.slane %v4814, 6
        %v4885 = vsel %vm4172, %v4884, %v4883
        %v4886 = vrot.slane %v4815, 5
        %v4887 = vsel %vm4175, %v4886, %v4885
        %v4888 = vrot.slane %v4817, 7
        %v4889 = vsel %vm4169, %v4888, %v4816
        %v4890 = vrot.slane %v4818, 6
        %v4891 = vsel %vm4172, %v4890, %v4889
        %v4892 = vrot.slane %v4819, 5
        %v4893 = vsel %vm4175, %v4892, %v4891
        %v4894 = vrot.slane %v4821, 7
        %v4895 = vsel %vm4169, %v4894, %v4820
        %v4896 = vrot.slane %v4822, 6
        %v4897 = vsel %vm4172, %v4896, %v4895
        %v4898 = vrot.slane %v4823, 5
        %v4899 = vsel %vm4175, %v4898, %v4897
        %v4900 = vrot.slane %v4825, 7
        %v4901 = vsel %vm4169, %v4900, %v4824
        %v4902 = vrot.slane %v4826, 6
        %v4903 = vsel %vm4172, %v4902, %v4901
        %v4904 = vrot.slane %v4827, 5
        %v4905 = vsel %vm4175, %v4904, %v4903
        %v4906 = vrot.slane %v4829, 7
        %v4907 = vsel %vm4169, %v4906, %v4828
        %v4908 = vrot.slane %v4830, 6
        %v4909 = vsel %vm4172, %v4908, %v4907
        %v4910 = vrot.slane %v4831, 5
        %v4911 = vsel %vm4175, %v4910, %v4909
        %v4920 = vsel %vm4227, %v4869, 0.0
        %4921 = vadd.xlane.f32.xlu0 %v4920
        %v4922 = vpop.xlane.xlu0 %4921
        %v4923 = vsel %vm4227, %v4875, 0.0
        %4924 = vadd.xlane.f32.xlu0 %v4923
        %v4925 = vpop.xlane.xlu0 %4924
        %v4926 = vsel %vm4227, %v4881, 0.0
        %4927 = vadd.xlane.f32.xlu0 %v4926
        %v4928 = vpop.xlane.xlu0 %4927
        %v4929 = vsel %vm4227, %v4887, 0.0
        %4930 = vadd.xlane.f32.xlu0 %v4929
        %v4931 = vpop.xlane.xlu0 %4930
        %v4932 = vsel %vm4227, %v4893, 0.0
        %4933 = vadd.xlane.f32.xlu0 %v4932
        %v4934 = vpop.xlane.xlu0 %4933
        %v4935 = vsel %vm4227, %v4899, 0.0
        %4936 = vadd.xlane.f32.xlu0 %v4935
        %v4937 = vpop.xlane.xlu0 %4936
        %v4938 = vsel %vm4227, %v4905, 0.0
        %4939 = vadd.xlane.f32.xlu0 %v4938
        %v4940 = vpop.xlane.xlu0 %4939
        %v4941 = vsel %vm4227, %v4911, 0.0
        %4942 = vadd.xlane.f32.xlu0 %v4941
        %v4943 = vpop.xlane.xlu0 %4942
        %4976 = vset.pattern.permute.xlu0 1
        %4977 = vperm.xlu0 %4976, %v3537
        %v4978 = vpop.permute.xlu0 %4977
        %4979 = vset.pattern.permute.xlu0 1
        %4980 = vperm.xlu0 %4979, %v3540
        %v4981 = vpop.permute.xlu0 %4980
        %4982 = vset.pattern.permute.xlu0 1
        %4983 = vperm.xlu0 %4982, %v3545
        %v4984 = vpop.permute.xlu0 %4983
        %4985 = vset.pattern.permute.xlu0 1
        %4986 = vperm.xlu0 %4985, %v3548
        %v4987 = vpop.permute.xlu0 %4986
        %4988 = vset.pattern.permute.xlu0 1
        %4989 = vperm.xlu0 %4988, %v3553
        %v4990 = vpop.permute.xlu0 %4989
        %4991 = vset.pattern.permute.xlu0 1
        %4992 = vperm.xlu0 %4991, %v3556
        %v4993 = vpop.permute.xlu0 %4992
        %4994 = vset.pattern.permute.xlu0 1
        %4995 = vperm.xlu0 %4994, %v3561
        %v4996 = vpop.permute.xlu0 %4995
        %4997 = vset.pattern.permute.xlu0 1
        %4998 = vperm.xlu0 %4997, %v3564
        %v4999 = vpop.permute.xlu0 %4998
        %5000 = vset.pattern.permute.xlu0 1
        %5001 = vperm.xlu0 %5000, %v3569
        %v5002 = vpop.permute.xlu0 %5001
        %5003 = vset.pattern.permute.xlu0 1
        %5004 = vperm.xlu0 %5003, %v3572
        %v5005 = vpop.permute.xlu0 %5004
        %5006 = vset.pattern.permute.xlu0 1
        %5007 = vperm.xlu0 %5006, %v3577
        %v5008 = vpop.permute.xlu0 %5007
        %5009 = vset.pattern.permute.xlu0 1
        %5010 = vperm.xlu0 %5009, %v3580
        %v5011 = vpop.permute.xlu0 %5010
        %5012 = vset.pattern.permute.xlu0 1
        %5013 = vperm.xlu0 %5012, %v3585
        %v5014 = vpop.permute.xlu0 %5013
        %5015 = vset.pattern.permute.xlu0 1
        %5016 = vperm.xlu0 %5015, %v3588
        %v5017 = vpop.permute.xlu0 %5016
        %5018 = vset.pattern.permute.xlu0 1
        %5019 = vperm.xlu0 %5018, %v3593
        %v5020 = vpop.permute.xlu0 %5019
        %5021 = vset.pattern.permute.xlu0 1
        %5022 = vperm.xlu0 %5021, %v3596
        %v5023 = vpop.permute.xlu0 %5022
        %5024 = vset.pattern.permute.xlu0 1
        %5025 = vperm.xlu0 %5024, %v3601
        %v5026 = vpop.permute.xlu0 %5025
        %5027 = vset.pattern.permute.xlu0 1
        %5028 = vperm.xlu0 %5027, %v3604
        %v5029 = vpop.permute.xlu0 %5028
        %5030 = vset.pattern.permute.xlu0 1
        %5031 = vperm.xlu0 %5030, %v3609
        %v5032 = vpop.permute.xlu0 %5031
        %5033 = vset.pattern.permute.xlu0 1
        %5034 = vperm.xlu0 %5033, %v3612
        %v5035 = vpop.permute.xlu0 %5034
        %5036 = vset.pattern.permute.xlu0 1
        %5037 = vperm.xlu0 %5036, %v3617
        %v5038 = vpop.permute.xlu0 %5037
        %5039 = vset.pattern.permute.xlu0 1
        %5040 = vperm.xlu0 %5039, %v3620
        %v5041 = vpop.permute.xlu0 %5040
        %5042 = vset.pattern.permute.xlu0 1
        %5043 = vperm.xlu0 %5042, %v3625
        %v5044 = vpop.permute.xlu0 %5043
        %5045 = vset.pattern.permute.xlu0 1
        %5046 = vperm.xlu0 %5045, %v3628
        %v5047 = vpop.permute.xlu0 %5046
        %5048 = vset.pattern.permute.xlu0 1
        %5049 = vperm.xlu0 %5048, %v3633
        %v5050 = vpop.permute.xlu0 %5049
        %5051 = vset.pattern.permute.xlu0 1
        %5052 = vperm.xlu0 %5051, %v3636
        %v5053 = vpop.permute.xlu0 %5052
        %5054 = vset.pattern.permute.xlu0 1
        %5055 = vperm.xlu0 %5054, %v3641
        %v5056 = vpop.permute.xlu0 %5055
        %5057 = vset.pattern.permute.xlu0 1
        %5058 = vperm.xlu0 %5057, %v3644
        %v5059 = vpop.permute.xlu0 %5058
        %5060 = vset.pattern.permute.xlu0 1
        %5061 = vperm.xlu0 %5060, %v3649
        %v5062 = vpop.permute.xlu0 %5061
        %5063 = vset.pattern.permute.xlu0 1
        %5064 = vperm.xlu0 %5063, %v3652
        %v5065 = vpop.permute.xlu0 %5064
        %5066 = vset.pattern.permute.xlu0 1
        %5067 = vperm.xlu0 %5066, %v3657
        %v5068 = vpop.permute.xlu0 %5067
        %5069 = vset.pattern.permute.xlu0 1
        %5070 = vperm.xlu0 %5069, %v3660
        %v5071 = vpop.permute.xlu0 %5070
        %v5072 = vlaneseq
        %v5073 = vshrl.u32 %v5072, 7
        %v5074 = vsub.s32 %v4639, %v5073
        %v5075 = vrot.slane %v4978, %v5074
        %v5076 = vlaneseq
        %v5077 = vshrl.u32 %v5076, 7
        %v5078 = vsub.s32 %v4639, %v5077
        %v5079 = vrot.slane %v4981, %v5078
        %v5080 = vlaneseq
        %v5081 = vshrl.u32 %v5080, 7
        %v5082 = vsub.s32 %v4639, %v5081
        %v5083 = vrot.slane %v4984, %v5082
        %v5084 = vlaneseq
        %v5085 = vshrl.u32 %v5084, 7
        %v5086 = vsub.s32 %v4639, %v5085
        %v5087 = vrot.slane %v4987, %v5086
        %v5088 = vlaneseq
        %v5089 = vshrl.u32 %v5088, 7
        %v5090 = vsub.s32 %v4639, %v5089
        %v5091 = vrot.slane %v4990, %v5090
        %v5092 = vlaneseq
        %v5093 = vshrl.u32 %v5092, 7
        %v5094 = vsub.s32 %v4639, %v5093
        %v5095 = vrot.slane %v4993, %v5094
        %v5096 = vlaneseq
        %v5097 = vshrl.u32 %v5096, 7
        %v5098 = vsub.s32 %v4639, %v5097
        %v5099 = vrot.slane %v4996, %v5098
        %v5100 = vlaneseq
        %v5101 = vshrl.u32 %v5100, 7
        %v5102 = vsub.s32 %v4639, %v5101
        %v5103 = vrot.slane %v4999, %v5102
        %v5104 = vlaneseq
        %v5105 = vshrl.u32 %v5104, 7
        %v5106 = vsub.s32 %v4639, %v5105
        %v5107 = vrot.slane %v5002, %v5106
        %v5108 = vlaneseq
        %v5109 = vshrl.u32 %v5108, 7
        %v5110 = vsub.s32 %v4639, %v5109
        %v5111 = vrot.slane %v5005, %v5110
        %v5112 = vlaneseq
        %v5113 = vshrl.u32 %v5112, 7
        %v5114 = vsub.s32 %v4639, %v5113
        %v5115 = vrot.slane %v5008, %v5114
        %v5116 = vlaneseq
        %v5117 = vshrl.u32 %v5116, 7
        %v5118 = vsub.s32 %v4639, %v5117
        %v5119 = vrot.slane %v5011, %v5118
        %v5120 = vlaneseq
        %v5121 = vshrl.u32 %v5120, 7
        %v5122 = vsub.s32 %v4639, %v5121
        %v5123 = vrot.slane %v5014, %v5122
        %v5124 = vlaneseq
        %v5125 = vshrl.u32 %v5124, 7
        %v5126 = vsub.s32 %v4639, %v5125
        %v5127 = vrot.slane %v5017, %v5126
        %v5128 = vlaneseq
        %v5129 = vshrl.u32 %v5128, 7
        %v5130 = vsub.s32 %v4639, %v5129
        %v5131 = vrot.slane %v5020, %v5130
        %v5132 = vlaneseq
        %v5133 = vshrl.u32 %v5132, 7
        %v5134 = vsub.s32 %v4639, %v5133
        %v5135 = vrot.slane %v5023, %v5134
        %v5136 = vlaneseq
        %v5137 = vshrl.u32 %v5136, 7
        %v5138 = vsub.s32 %v4639, %v5137
        %v5139 = vrot.slane %v5026, %v5138
        %v5140 = vlaneseq
        %v5141 = vshrl.u32 %v5140, 7
        %v5142 = vsub.s32 %v4639, %v5141
        %v5143 = vrot.slane %v5029, %v5142
        %v5144 = vlaneseq
        %v5145 = vshrl.u32 %v5144, 7
        %v5146 = vsub.s32 %v4639, %v5145
        %v5147 = vrot.slane %v5032, %v5146
        %v5148 = vlaneseq
        %v5149 = vshrl.u32 %v5148, 7
        %v5150 = vsub.s32 %v4639, %v5149
        %v5151 = vrot.slane %v5035, %v5150
        %v5152 = vlaneseq
        %v5153 = vshrl.u32 %v5152, 7
        %v5154 = vsub.s32 %v4639, %v5153
        %v5155 = vrot.slane %v5038, %v5154
        %v5156 = vlaneseq
        %v5157 = vshrl.u32 %v5156, 7
        %v5158 = vsub.s32 %v4639, %v5157
        %v5159 = vrot.slane %v5041, %v5158
        %v5160 = vlaneseq
        %v5161 = vshrl.u32 %v5160, 7
        %v5162 = vsub.s32 %v4639, %v5161
        %v5163 = vrot.slane %v5044, %v5162
        %v5164 = vlaneseq
        %v5165 = vshrl.u32 %v5164, 7
        %v5166 = vsub.s32 %v4639, %v5165
        %v5167 = vrot.slane %v5047, %v5166
        %v5168 = vlaneseq
        %v5169 = vshrl.u32 %v5168, 7
        %v5170 = vsub.s32 %v4639, %v5169
        %v5171 = vrot.slane %v5050, %v5170
        %v5172 = vlaneseq
        %v5173 = vshrl.u32 %v5172, 7
        %v5174 = vsub.s32 %v4639, %v5173
        %v5175 = vrot.slane %v5053, %v5174
        %v5176 = vlaneseq
        %v5177 = vshrl.u32 %v5176, 7
        %v5178 = vsub.s32 %v4639, %v5177
        %v5179 = vrot.slane %v5056, %v5178
        %v5180 = vlaneseq
        %v5181 = vshrl.u32 %v5180, 7
        %v5182 = vsub.s32 %v4639, %v5181
        %v5183 = vrot.slane %v5059, %v5182
        %v5184 = vlaneseq
        %v5185 = vshrl.u32 %v5184, 7
        %v5186 = vsub.s32 %v4639, %v5185
        %v5187 = vrot.slane %v5062, %v5186
        %v5188 = vlaneseq
        %v5189 = vshrl.u32 %v5188, 7
        %v5190 = vsub.s32 %v4639, %v5189
        %v5191 = vrot.slane %v5065, %v5190
        %v5192 = vlaneseq
        %v5193 = vshrl.u32 %v5192, 7
        %v5194 = vsub.s32 %v4639, %v5193
        %v5195 = vrot.slane %v5068, %v5194
        %v5196 = vlaneseq
        %v5197 = vshrl.u32 %v5196, 7
        %v5198 = vsub.s32 %v4639, %v5197
        %v5199 = vrot.slane %v5071, %v5198
        %v5232 = vmul.f32 %v1856, %v5075
        %v5233 = vmul.f32 %v1896, %v5079
        %v5234 = vmul.f32 %v1936, %v5083
        %v5235 = vmul.f32 %v1976, %v5087
        %v5236 = vmul.f32 %v2016, %v5091
        %v5237 = vmul.f32 %v2056, %v5095
        %v5238 = vmul.f32 %v2096, %v5099
        %v5239 = vmul.f32 %v2136, %v5103
        %v5240 = vmul.f32 %v2176, %v5107
        %v5241 = vmul.f32 %v2216, %v5111
        %v5242 = vmul.f32 %v2256, %v5115
        %v5243 = vmul.f32 %v2296, %v5119
        %v5244 = vmul.f32 %v2336, %v5123
        %v5245 = vmul.f32 %v2376, %v5127
        %v5246 = vmul.f32 %v2416, %v5131
        %v5247 = vmul.f32 %v2456, %v5135
        %v5248 = vmul.f32 %v2496, %v5139
        %v5249 = vmul.f32 %v2536, %v5143
        %v5250 = vmul.f32 %v2576, %v5147
        %v5251 = vmul.f32 %v2616, %v5151
        %v5252 = vmul.f32 %v2656, %v5155
        %v5253 = vmul.f32 %v2696, %v5159
        %v5254 = vmul.f32 %v2736, %v5163
        %v5255 = vmul.f32 %v2776, %v5167
        %v5256 = vmul.f32 %v2816, %v5171
        %v5257 = vmul.f32 %v2856, %v5175
        %v5258 = vmul.f32 %v2896, %v5179
        %v5259 = vmul.f32 %v2936, %v5183
        %v5260 = vmul.f32 %v2976, %v5187
        %v5261 = vmul.f32 %v3016, %v5191
        %v5262 = vmul.f32 %v3056, %v5195
        %v5263 = vmul.f32 %v3096, %v5199
        %v5296 = vrot.slane %v5233, 7
        %v5297 = vsel %vm4169, %v5296, %v5232
        %v5298 = vrot.slane %v5234, 6
        %v5299 = vsel %vm4172, %v5298, %v5297
        %v5300 = vrot.slane %v5235, 5
        %v5301 = vsel %vm4175, %v5300, %v5299
        %v5302 = vrot.slane %v5237, 7
        %v5303 = vsel %vm4169, %v5302, %v5236
        %v5304 = vrot.slane %v5238, 6
        %v5305 = vsel %vm4172, %v5304, %v5303
        %v5306 = vrot.slane %v5239, 5
        %v5307 = vsel %vm4175, %v5306, %v5305
        %v5308 = vrot.slane %v5241, 7
        %v5309 = vsel %vm4169, %v5308, %v5240
        %v5310 = vrot.slane %v5242, 6
        %v5311 = vsel %vm4172, %v5310, %v5309
        %v5312 = vrot.slane %v5243, 5
        %v5313 = vsel %vm4175, %v5312, %v5311
        %v5314 = vrot.slane %v5245, 7
        %v5315 = vsel %vm4169, %v5314, %v5244
        %v5316 = vrot.slane %v5246, 6
        %v5317 = vsel %vm4172, %v5316, %v5315
        %v5318 = vrot.slane %v5247, 5
        %v5319 = vsel %vm4175, %v5318, %v5317
        %v5320 = vrot.slane %v5249, 7
        %v5321 = vsel %vm4169, %v5320, %v5248
        %v5322 = vrot.slane %v5250, 6
        %v5323 = vsel %vm4172, %v5322, %v5321
        %v5324 = vrot.slane %v5251, 5
        %v5325 = vsel %vm4175, %v5324, %v5323
        %v5326 = vrot.slane %v5253, 7
        %v5327 = vsel %vm4169, %v5326, %v5252
        %v5328 = vrot.slane %v5254, 6
        %v5329 = vsel %vm4172, %v5328, %v5327
        %v5330 = vrot.slane %v5255, 5
        %v5331 = vsel %vm4175, %v5330, %v5329
        %v5332 = vrot.slane %v5257, 7
        %v5333 = vsel %vm4169, %v5332, %v5256
        %v5334 = vrot.slane %v5258, 6
        %v5335 = vsel %vm4172, %v5334, %v5333
        %v5336 = vrot.slane %v5259, 5
        %v5337 = vsel %vm4175, %v5336, %v5335
        %v5338 = vrot.slane %v5261, 7
        %v5339 = vsel %vm4169, %v5338, %v5260
        %v5340 = vrot.slane %v5262, 6
        %v5341 = vsel %vm4172, %v5340, %v5339
        %v5342 = vrot.slane %v5263, 5
        %v5343 = vsel %vm4175, %v5342, %v5341
        %v5352 = vsel %vm4227, %v5301, 0.0
        %5353 = vadd.xlane.f32.xlu0 %v5352
        %v5354 = vpop.xlane.xlu0 %5353
        %v5355 = vsel %vm4227, %v5307, 0.0
        %5356 = vadd.xlane.f32.xlu0 %v5355
        %v5357 = vpop.xlane.xlu0 %5356
        %v5358 = vsel %vm4227, %v5313, 0.0
        %5359 = vadd.xlane.f32.xlu0 %v5358
        %v5360 = vpop.xlane.xlu0 %5359
        %v5361 = vsel %vm4227, %v5319, 0.0
        %5362 = vadd.xlane.f32.xlu0 %v5361
        %v5363 = vpop.xlane.xlu0 %5362
        %v5364 = vsel %vm4227, %v5325, 0.0
        %5365 = vadd.xlane.f32.xlu0 %v5364
        %v5366 = vpop.xlane.xlu0 %5365
        %v5367 = vsel %vm4227, %v5331, 0.0
        %5368 = vadd.xlane.f32.xlu0 %v5367
        %v5369 = vpop.xlane.xlu0 %5368
        %v5370 = vsel %vm4227, %v5337, 0.0
        %5371 = vadd.xlane.f32.xlu0 %v5370
        %v5372 = vpop.xlane.xlu0 %5371
        %v5373 = vsel %vm4227, %v5343, 0.0
        %5374 = vadd.xlane.f32.xlu0 %v5373
        %v5375 = vpop.xlane.xlu0 %5374
        %v5376 = vld [vmem:[%s419] sm:$0xff]
        %v5377 = vlaneseq
        %v5378 = vshrl.u32 %v5377, 7
        %v5379 = vsub.s32 0, %v5378
        %v5380 = vrot.slane %v3975, %v5379
        %v5381 = vlaneseq
        %v5382 = vshrl.u32 %v5381, 7
        %v5383 = vsub.s32 0, %v5382
        %v5384 = vrot.slane %v3983, %v5383
        %v5385 = vlaneseq
        %v5386 = vshrl.u32 %v5385, 7
        %v5387 = vsub.s32 0, %v5386
        %v5388 = vrot.slane %v3982, %v5387
        %v5389 = vlaneseq
        %v5390 = vshrl.u32 %v5389, 7
        %v5391 = vsub.s32 0, %v5390
        %v5392 = vrot.slane %v3984, %v5391
        %v5393 = vlaneseq
        %v5394 = vshrl.u32 %v5393, 7
        %v5395 = vsub.s32 0, %v5394
        %v5396 = vrot.slane %v3992, %v5395
        %v5397 = vlaneseq
        %v5398 = vshrl.u32 %v5397, 7
        %v5399 = vsub.s32 0, %v5398
        %v5400 = vrot.slane %v4000, %v5399
        %v5401 = vlaneseq
        %v5402 = vshrl.u32 %v5401, 7
        %v5403 = vsub.s32 0, %v5402
        %v5404 = vrot.slane %v3999, %v5403
        %v5405 = vlaneseq
        %v5406 = vshrl.u32 %v5405, 7
        %v5407 = vsub.s32 0, %v5406
        %v5408 = vrot.slane %v4001, %v5407
        %v5409 = vlaneseq
        %v5410 = vshrl.u32 %v5409, 7
        %v5411 = vsub.s32 0, %v5410
        %v5412 = vrot.slane %v4009, %v5411
        %v5413 = vlaneseq
        %v5414 = vshrl.u32 %v5413, 7
        %v5415 = vsub.s32 0, %v5414
        %v5416 = vrot.slane %v4017, %v5415
        %v5417 = vlaneseq
        %v5418 = vshrl.u32 %v5417, 7
        %v5419 = vsub.s32 0, %v5418
        %v5420 = vrot.slane %v4016, %v5419
        %v5421 = vlaneseq
        %v5422 = vshrl.u32 %v5421, 7
        %v5423 = vsub.s32 0, %v5422
        %v5424 = vrot.slane %v4018, %v5423
        %v5425 = vlaneseq
        %v5426 = vshrl.u32 %v5425, 7
        %v5427 = vsub.s32 0, %v5426
        %v5428 = vrot.slane %v4026, %v5427
        %v5429 = vlaneseq
        %v5430 = vshrl.u32 %v5429, 7
        %v5431 = vsub.s32 0, %v5430
        %v5432 = vrot.slane %v4034, %v5431
        %v5433 = vlaneseq
        %v5434 = vshrl.u32 %v5433, 7
        %v5435 = vsub.s32 0, %v5434
        %v5436 = vrot.slane %v4033, %v5435
        %v5437 = vlaneseq
        %v5438 = vshrl.u32 %v5437, 7
        %v5439 = vsub.s32 0, %v5438
        %v5440 = vrot.slane %v4035, %v5439
        %v5441 = vlaneseq
        %v5442 = vshrl.u32 %v5441, 7
        %v5443 = vsub.s32 0, %v5442
        %v5444 = vrot.slane %v4043, %v5443
        %v5445 = vlaneseq
        %v5446 = vshrl.u32 %v5445, 7
        %v5447 = vsub.s32 0, %v5446
        %v5448 = vrot.slane %v4051, %v5447
        %v5449 = vlaneseq
        %v5450 = vshrl.u32 %v5449, 7
        %v5451 = vsub.s32 0, %v5450
        %v5452 = vrot.slane %v4050, %v5451
        %v5453 = vlaneseq
        %v5454 = vshrl.u32 %v5453, 7
        %v5455 = vsub.s32 0, %v5454
        %v5456 = vrot.slane %v4052, %v5455
        %v5457 = vlaneseq
        %v5458 = vshrl.u32 %v5457, 7
        %v5459 = vsub.s32 0, %v5458
        %v5460 = vrot.slane %v4060, %v5459
        %v5461 = vlaneseq
        %v5462 = vshrl.u32 %v5461, 7
        %v5463 = vsub.s32 0, %v5462
        %v5464 = vrot.slane %v4068, %v5463
        %v5465 = vlaneseq
        %v5466 = vshrl.u32 %v5465, 7
        %v5467 = vsub.s32 0, %v5466
        %v5468 = vrot.slane %v4067, %v5467
        %v5469 = vlaneseq
        %v5470 = vshrl.u32 %v5469, 7
        %v5471 = vsub.s32 0, %v5470
        %v5472 = vrot.slane %v4069, %v5471
        %v5473 = vlaneseq
        %v5474 = vshrl.u32 %v5473, 7
        %v5475 = vsub.s32 0, %v5474
        %v5476 = vrot.slane %v4077, %v5475
        %v5477 = vlaneseq
        %v5478 = vshrl.u32 %v5477, 7
        %v5479 = vsub.s32 0, %v5478
        %v5480 = vrot.slane %v4085, %v5479
        %v5481 = vlaneseq
        %v5482 = vshrl.u32 %v5481, 7
        %v5483 = vsub.s32 0, %v5482
        %v5484 = vrot.slane %v4084, %v5483
        %v5485 = vlaneseq
        %v5486 = vshrl.u32 %v5485, 7
        %v5487 = vsub.s32 0, %v5486
        %v5488 = vrot.slane %v4086, %v5487
        %v5489 = vlaneseq
        %v5490 = vshrl.u32 %v5489, 7
        %v5491 = vsub.s32 0, %v5490
        %v5492 = vrot.slane %v4094, %v5491
        %v5493 = vlaneseq
        %v5494 = vshrl.u32 %v5493, 7
        %v5495 = vsub.s32 0, %v5494
        %v5496 = vrot.slane %v4102, %v5495
        %v5497 = vlaneseq
        %v5498 = vshrl.u32 %v5497, 7
        %v5499 = vsub.s32 0, %v5498
        %v5500 = vrot.slane %v4101, %v5499
        %v5501 = vlaneseq
        %v5502 = vshrl.u32 %v5501, 7
        %v5503 = vsub.s32 0, %v5502
        %v5504 = vrot.slane %v4103, %v5503
        %v5505 = vsel %vm4169, %v5384, %v5380
        %v5506 = vsel %vm4172, %v5388, %v5505
        %v5507 = vsel %vm4175, %v5392, %v5506
        %v5508 = vsel %vm4169, %v5400, %v5396
        %v5509 = vsel %vm4172, %v5404, %v5508
        %v5510 = vsel %vm4175, %v5408, %v5509
        %v5511 = vsel %vm4169, %v5416, %v5412
        %v5512 = vsel %vm4172, %v5420, %v5511
        %v5513 = vsel %vm4175, %v5424, %v5512
        %v5514 = vsel %vm4169, %v5432, %v5428
        %v5515 = vsel %vm4172, %v5436, %v5514
        %v5516 = vsel %vm4175, %v5440, %v5515
        %v5517 = vsel %vm4169, %v5448, %v5444
        %v5518 = vsel %vm4172, %v5452, %v5517
        %v5519 = vsel %vm4175, %v5456, %v5518
        %v5520 = vsel %vm4169, %v5464, %v5460
        %v5521 = vsel %vm4172, %v5468, %v5520
        %v5522 = vsel %vm4175, %v5472, %v5521
        %v5523 = vsel %vm4169, %v5480, %v5476
        %v5524 = vsel %vm4172, %v5484, %v5523
        %v5525 = vsel %vm4175, %v5488, %v5524
        %v5526 = vsel %vm4169, %v5496, %v5492
        %v5527 = vsel %vm4172, %v5500, %v5526
        %v5528 = vsel %vm4175, %v5504, %v5527
        %5529 = vset.pattern.permute.xlu0 2
        %5530 = vperm.xlu0 %5529, %v5507
        %v5531 = vpop.permute.xlu0 %5530
        %5532 = vset.pattern.permute.xlu0 2
        %5533 = vperm.xlu0 %5532, %v5510
        %v5534 = vpop.permute.xlu0 %5533
        %5535 = vset.pattern.permute.xlu0 2
        %5536 = vperm.xlu0 %5535, %v5513
        %v5537 = vpop.permute.xlu0 %5536
        %5538 = vset.pattern.permute.xlu0 2
        %5539 = vperm.xlu0 %5538, %v5516
        %v5540 = vpop.permute.xlu0 %5539
        %5541 = vset.pattern.permute.xlu0 2
        %5542 = vperm.xlu0 %5541, %v5519
        %v5543 = vpop.permute.xlu0 %5542
        %5544 = vset.pattern.permute.xlu0 2
        %5545 = vperm.xlu0 %5544, %v5522
        %v5546 = vpop.permute.xlu0 %5545
        %5547 = vset.pattern.permute.xlu0 2
        %5548 = vperm.xlu0 %5547, %v5525
        %v5549 = vpop.permute.xlu0 %5548
        %5550 = vset.pattern.permute.xlu0 2
        %5551 = vperm.xlu0 %5550, %v5528
        %v5552 = vpop.permute.xlu0 %5551
        %v5553 = vlaneseq
        %v5554 = vshrl.u32 %v5553, 7
        %v5555 = vsub.s32 %v4639, %v5554
        %v5556 = vrot.slane %v5531, %v5555
        %v5557 = vlaneseq
        %v5558 = vshrl.u32 %v5557, 7
        %v5559 = vsub.s32 %v4639, %v5558
        %v5560 = vrot.slane %v5534, %v5559
        %v5561 = vlaneseq
        %v5562 = vshrl.u32 %v5561, 7
        %v5563 = vsub.s32 %v4639, %v5562
        %v5564 = vrot.slane %v5537, %v5563
        %v5565 = vlaneseq
        %v5566 = vshrl.u32 %v5565, 7
        %v5567 = vsub.s32 %v4639, %v5566
        %v5568 = vrot.slane %v5540, %v5567
        %v5569 = vlaneseq
        %v5570 = vshrl.u32 %v5569, 7
        %v5571 = vsub.s32 %v4639, %v5570
        %v5572 = vrot.slane %v5543, %v5571
        %v5573 = vlaneseq
        %v5574 = vshrl.u32 %v5573, 7
        %v5575 = vsub.s32 %v4639, %v5574
        %v5576 = vrot.slane %v5546, %v5575
        %v5577 = vlaneseq
        %v5578 = vshrl.u32 %v5577, 7
        %v5579 = vsub.s32 %v4639, %v5578
        %v5580 = vrot.slane %v5549, %v5579
        %v5581 = vlaneseq
        %v5582 = vshrl.u32 %v5581, 7
        %v5583 = vsub.s32 %v4639, %v5582
        %v5584 = vrot.slane %v5552, %v5583
        %v5585 = vsel %vm4169, %v5560, %v5556
        %v5586 = vsel %vm4172, %v5564, %v5585
        %v5587 = vsel %vm4175, %v5568, %v5586
        %v5588 = vsel %vm4254, %v5572, %v5587
        %vm5589 = vcmask 1045509
        %v5590 = vsel %vm5589, %v5576, %v5588
        %vm5591 = vcmask 1046534
        %v5592 = vsel %vm5591, %v5580, %v5590
        %vm5593 = vcmask 1047559
        %v5594 = vsel %vm5593, %v5584, %v5592
        %v5596 = vadd.f32 %v5376, %v5594
        %v5605 = vlaneseq
        %v5606 = vshrl.u32 %v5605, 7
        %v5607 = vsub.s32 %v4639, %v5606
        %v5608 = vrot.slane %v4922, %v5607
        %v5609 = vlaneseq
        %v5610 = vshrl.u32 %v5609, 7
        %v5611 = vsub.s32 %v4639, %v5610
        %v5612 = vrot.slane %v4925, %v5611
        %v5613 = vlaneseq
        %v5614 = vshrl.u32 %v5613, 7
        %v5615 = vsub.s32 %v4639, %v5614
        %v5616 = vrot.slane %v4928, %v5615
        %v5617 = vlaneseq
        %v5618 = vshrl.u32 %v5617, 7
        %v5619 = vsub.s32 %v4639, %v5618
        %v5620 = vrot.slane %v4931, %v5619
        %v5621 = vlaneseq
        %v5622 = vshrl.u32 %v5621, 7
        %v5623 = vsub.s32 %v4639, %v5622
        %v5624 = vrot.slane %v4934, %v5623
        %v5625 = vlaneseq
        %v5626 = vshrl.u32 %v5625, 7
        %v5627 = vsub.s32 %v4639, %v5626
        %v5628 = vrot.slane %v4937, %v5627
        %v5629 = vlaneseq
        %v5630 = vshrl.u32 %v5629, 7
        %v5631 = vsub.s32 %v4639, %v5630
        %v5632 = vrot.slane %v4940, %v5631
        %v5633 = vlaneseq
        %v5634 = vshrl.u32 %v5633, 7
        %v5635 = vsub.s32 %v4639, %v5634
        %v5636 = vrot.slane %v4943, %v5635
        %v5637 = vsel %vm4169, %v5612, %v5608
        %v5638 = vsel %vm4172, %v5616, %v5637
        %v5639 = vsel %vm4175, %v5620, %v5638
        %v5640 = vsel %vm4254, %v5624, %v5639
        %v5641 = vsel %vm5589, %v5628, %v5640
        %v5642 = vsel %vm5591, %v5632, %v5641
        %v5643 = vsel %vm5593, %v5636, %v5642
        %v5645 = vadd.f32 %v5596, %v5643
        %v5654 = vlaneseq
        %v5655 = vshrl.u32 %v5654, 7
        %v5656 = vsub.s32 %v4639, %v5655
        %v5657 = vrot.slane %v5354, %v5656
        %v5658 = vlaneseq
        %v5659 = vshrl.u32 %v5658, 7
        %v5660 = vsub.s32 %v4639, %v5659
        %v5661 = vrot.slane %v5357, %v5660
        %v5662 = vlaneseq
        %v5663 = vshrl.u32 %v5662, 7
        %v5664 = vsub.s32 %v4639, %v5663
        %v5665 = vrot.slane %v5360, %v5664
        %v5666 = vlaneseq
        %v5667 = vshrl.u32 %v5666, 7
        %v5668 = vsub.s32 %v4639, %v5667
        %v5669 = vrot.slane %v5363, %v5668
        %v5670 = vlaneseq
        %v5671 = vshrl.u32 %v5670, 7
        %v5672 = vsub.s32 %v4639, %v5671
        %v5673 = vrot.slane %v5366, %v5672
        %v5674 = vlaneseq
        %v5675 = vshrl.u32 %v5674, 7
        %v5676 = vsub.s32 %v4639, %v5675
        %v5677 = vrot.slane %v5369, %v5676
        %v5678 = vlaneseq
        %v5679 = vshrl.u32 %v5678, 7
        %v5680 = vsub.s32 %v4639, %v5679
        %v5681 = vrot.slane %v5372, %v5680
        %v5682 = vlaneseq
        %v5683 = vshrl.u32 %v5682, 7
        %v5684 = vsub.s32 %v4639, %v5683
        %v5685 = vrot.slane %v5375, %v5684
        %v5686 = vsel %vm4169, %v5661, %v5657
        %v5687 = vsel %vm4172, %v5665, %v5686
        %v5688 = vsel %vm4175, %v5669, %v5687
        %v5689 = vsel %vm4254, %v5673, %v5688
        %v5690 = vsel %vm5589, %v5677, %v5689
        %v5691 = vsel %vm5591, %v5681, %v5690
        %v5692 = vsel %vm5593, %v5685, %v5691
        %v5694 = vadd.f32 %v5645, %v5692
        %s5695 = sld [smem:[#allocation8]]
        %v5696 = vstv %s5695
        %v5697 = vmul.f32 %v4230, %v5696
        %v5698 = vmul.f32 %v4233, %v5696
        %v5699 = vmul.f32 %v4236, %v5696
        %v5700 = vmul.f32 %v4239, %v5696
        %v5701 = vmul.f32 %v4242, %v5696
        %v5702 = vmul.f32 %v4245, %v5696
        %v5703 = vmul.f32 %v4248, %v5696
        %v5704 = vmul.f32 %v4251, %v5696
        %v5713 = vlaneseq
        %v5714 = vshrl.u32 %v5713, 7
        %v5715 = vsub.s32 %v4639, %v5714
        %v5716 = vrot.slane %v5697, %v5715
        %v5717 = vlaneseq
        %v5718 = vshrl.u32 %v5717, 7
        %v5719 = vsub.s32 %v4639, %v5718
        %v5720 = vrot.slane %v5698, %v5719
        %v5721 = vlaneseq
        %v5722 = vshrl.u32 %v5721, 7
        %v5723 = vsub.s32 %v4639, %v5722
        %v5724 = vrot.slane %v5699, %v5723
        %v5725 = vlaneseq
        %v5726 = vshrl.u32 %v5725, 7
        %v5727 = vsub.s32 %v4639, %v5726
        %v5728 = vrot.slane %v5700, %v5727
        %v5729 = vlaneseq
        %v5730 = vshrl.u32 %v5729, 7
        %v5731 = vsub.s32 %v4639, %v5730
        %v5732 = vrot.slane %v5701, %v5731
        %v5733 = vlaneseq
        %v5734 = vshrl.u32 %v5733, 7
        %v5735 = vsub.s32 %v4639, %v5734
        %v5736 = vrot.slane %v5702, %v5735
        %v5737 = vlaneseq
        %v5738 = vshrl.u32 %v5737, 7
        %v5739 = vsub.s32 %v4639, %v5738
        %v5740 = vrot.slane %v5703, %v5739
        %v5741 = vlaneseq
        %v5742 = vshrl.u32 %v5741, 7
        %v5743 = vsub.s32 %v4639, %v5742
        %v5744 = vrot.slane %v5704, %v5743
        %v5745 = vsel %vm4169, %v5720, %v5716
        %v5746 = vsel %vm4172, %v5724, %v5745
        %v5747 = vsel %vm4175, %v5728, %v5746
        %v5748 = vsel %vm4254, %v5732, %v5747
        %v5749 = vsel %vm5589, %v5736, %v5748
        %v5750 = vsel %vm5591, %v5740, %v5749
        %v5751 = vsel %vm5593, %v5744, %v5750
        %v5753 = vadd.f32 %v5694, %v5751
        %s5754 = sld [smem:[#allocation8 + $0x1]]
        %v5755 = vstv %s5754
        %v5756 = vmul.f32 %v4288, %v5755
        %v5757 = vmul.f32 %v4291, %v5755
        %v5758 = vmul.f32 %v4294, %v5755
        %v5759 = vmul.f32 %v4297, %v5755
        %v5760 = vmul.f32 %v4300, %v5755
        %v5761 = vmul.f32 %v4303, %v5755
        %v5762 = vmul.f32 %v4306, %v5755
        %v5763 = vmul.f32 %v4309, %v5755
        %v5772 = vadd.s32 %v4639, 1
        %v5773 = vlaneseq
        %v5774 = vshrl.u32 %v5773, 7
        %v5775 = vsub.s32 %v5772, %v5774
        %v5776 = vrot.slane %v5756, %v5775
        %v5777 = vlaneseq
        %v5778 = vshrl.u32 %v5777, 7
        %v5779 = vsub.s32 %v5772, %v5778
        %v5780 = vrot.slane %v5757, %v5779
        %v5781 = vlaneseq
        %v5782 = vshrl.u32 %v5781, 7
        %v5783 = vsub.s32 %v5772, %v5782
        %v5784 = vrot.slane %v5758, %v5783
        %v5785 = vlaneseq
        %v5786 = vshrl.u32 %v5785, 7
        %v5787 = vsub.s32 %v5772, %v5786
        %v5788 = vrot.slane %v5759, %v5787
        %v5789 = vlaneseq
        %v5790 = vshrl.u32 %v5789, 7
        %v5791 = vsub.s32 %v5772, %v5790
        %v5792 = vrot.slane %v5760, %v5791
        %v5793 = vlaneseq
        %v5794 = vshrl.u32 %v5793, 7
        %v5795 = vsub.s32 %v5772, %v5794
        %v5796 = vrot.slane %v5761, %v5795
        %v5797 = vlaneseq
        %v5798 = vshrl.u32 %v5797, 7
        %v5799 = vsub.s32 %v5772, %v5798
        %v5800 = vrot.slane %v5762, %v5799
        %v5801 = vlaneseq
        %v5802 = vshrl.u32 %v5801, 7
        %v5803 = vsub.s32 %v5772, %v5802
        %v5804 = vrot.slane %v5763, %v5803
        %v5805 = vsel %vm4169, %v5780, %v5776
        %v5806 = vsel %vm4172, %v5784, %v5805
        %v5807 = vsel %vm4175, %v5788, %v5806
        %v5808 = vsel %vm4254, %v5792, %v5807
        %v5809 = vsel %vm5589, %v5796, %v5808
        %v5810 = vsel %vm5591, %v5800, %v5809
        %v5811 = vsel %vm5593, %v5804, %v5810
        %v5813 = vadd.f32 %v5753, %v5811
        %s5814 = sld [smem:[#allocation8 + $0x2]]
        %v5815 = vstv %s5814
        %v5816 = vmul.f32 %v4432, %v5815
        %v5817 = vmul.f32 %v4435, %v5815
        %v5818 = vmul.f32 %v4438, %v5815
        %v5819 = vmul.f32 %v4441, %v5815
        %v5820 = vmul.f32 %v4444, %v5815
        %v5821 = vmul.f32 %v4447, %v5815
        %v5822 = vmul.f32 %v4450, %v5815
        %v5823 = vmul.f32 %v4453, %v5815
        %v5832 = vlaneseq
        %v5833 = vshrl.u32 %v5832, 7
        %v5834 = vsub.s32 %v4639, %v5833
        %v5835 = vrot.slane %v5816, %v5834
        %v5836 = vlaneseq
        %v5837 = vshrl.u32 %v5836, 7
        %v5838 = vsub.s32 %v4639, %v5837
        %v5839 = vrot.slane %v5817, %v5838
        %v5840 = vlaneseq
        %v5841 = vshrl.u32 %v5840, 7
        %v5842 = vsub.s32 %v4639, %v5841
        %v5843 = vrot.slane %v5818, %v5842
        %v5844 = vlaneseq
        %v5845 = vshrl.u32 %v5844, 7
        %v5846 = vsub.s32 %v4639, %v5845
        %v5847 = vrot.slane %v5819, %v5846
        %v5848 = vlaneseq
        %v5849 = vshrl.u32 %v5848, 7
        %v5850 = vsub.s32 %v4639, %v5849
        %v5851 = vrot.slane %v5820, %v5850
        %v5852 = vlaneseq
        %v5853 = vshrl.u32 %v5852, 7
        %v5854 = vsub.s32 %v4639, %v5853
        %v5855 = vrot.slane %v5821, %v5854
        %v5856 = vlaneseq
        %v5857 = vshrl.u32 %v5856, 7
        %v5858 = vsub.s32 %v4639, %v5857
        %v5859 = vrot.slane %v5822, %v5858
        %v5860 = vlaneseq
        %v5861 = vshrl.u32 %v5860, 7
        %v5862 = vsub.s32 %v4639, %v5861
        %v5863 = vrot.slane %v5823, %v5862
        %v5864 = vsel %vm4169, %v5839, %v5835
        %v5865 = vsel %vm4172, %v5843, %v5864
        %v5866 = vsel %vm4175, %v5847, %v5865
        %v5867 = vsel %vm4254, %v5851, %v5866
        %v5868 = vsel %vm5589, %v5855, %v5867
        %v5869 = vsel %vm5591, %v5859, %v5868
        %v5870 = vsel %vm5593, %v5863, %v5869
        %v5872 = vadd.f32 %v5813, %v5870
        %s5873 = sld [smem:[#allocation8 + $0x3]]
        %v5874 = vstv %s5873
        %v5875 = vmul.f32 %v4488, %v5874
        %v5876 = vmul.f32 %v4491, %v5874
        %v5877 = vmul.f32 %v4494, %v5874
        %v5878 = vmul.f32 %v4497, %v5874
        %v5879 = vmul.f32 %v4500, %v5874
        %v5880 = vmul.f32 %v4503, %v5874
        %v5881 = vmul.f32 %v4506, %v5874
        %v5882 = vmul.f32 %v4509, %v5874
        %v5891 = vlaneseq
        %v5892 = vshrl.u32 %v5891, 7
        %v5893 = vsub.s32 %v5772, %v5892
        %v5894 = vrot.slane %v5875, %v5893
        %v5895 = vlaneseq
        %v5896 = vshrl.u32 %v5895, 7
        %v5897 = vsub.s32 %v5772, %v5896
        %v5898 = vrot.slane %v5876, %v5897
        %v5899 = vlaneseq
        %v5900 = vshrl.u32 %v5899, 7
        %v5901 = vsub.s32 %v5772, %v5900
        %v5902 = vrot.slane %v5877, %v5901
        %v5903 = vlaneseq
        %v5904 = vshrl.u32 %v5903, 7
        %v5905 = vsub.s32 %v5772, %v5904
        %v5906 = vrot.slane %v5878, %v5905
        %v5907 = vlaneseq
        %v5908 = vshrl.u32 %v5907, 7
        %v5909 = vsub.s32 %v5772, %v5908
        %v5910 = vrot.slane %v5879, %v5909
        %v5911 = vlaneseq
        %v5912 = vshrl.u32 %v5911, 7
        %v5913 = vsub.s32 %v5772, %v5912
        %v5914 = vrot.slane %v5880, %v5913
        %v5915 = vlaneseq
        %v5916 = vshrl.u32 %v5915, 7
        %v5917 = vsub.s32 %v5772, %v5916
        %v5918 = vrot.slane %v5881, %v5917
        %v5919 = vlaneseq
        %v5920 = vshrl.u32 %v5919, 7
        %v5921 = vsub.s32 %v5772, %v5920
        %v5922 = vrot.slane %v5882, %v5921
        %v5923 = vsel %vm4169, %v5898, %v5894
        %v5924 = vsel %vm4172, %v5902, %v5923
        %v5925 = vsel %vm4175, %v5906, %v5924
        %v5926 = vsel %vm4254, %v5910, %v5925
        %v5927 = vsel %vm5589, %v5914, %v5926
        %v5928 = vsel %vm5591, %v5918, %v5927
        %v5929 = vsel %vm5593, %v5922, %v5928
        %v5931 = vadd.f32 %v5872, %v5929
        %s5932 = sld [smem:[#allocation8 + $0x4]]
        %v5933 = vstv %s5932
        %v5934 = vadd.f32 %v5931, %v5933
        %vm5935 = vcmask 31744
        %v5936 = vsel %vm5935, %v5934, -inf
        %5937 = vmax.xlane.f32.xlu0 %v5936
        %v5938 = vpop.xlane.xlu0 %5937
        %v5939 = vsub.f32 %v5934, %v5938
        %v5940 = vmul.f32 %v5939, 1.442695
        %v5941 = vpow.pop %v5940
        %v5942 = vsel %vm5935, %v5941, 0.0
        %5943 = vadd.xlane.f32.xlu0 %v5942
        %v5944 = vpop.xlane.xlu0 %5943
        %v5945 = vrcp.pop %v5944
        %v5946 = vmul.f32 %v5941, %v5945
        %v5947 = vld [vmem:[%s423] sm:$0xff]
        %v5948 = vmul.f32 %v5946, %v5947
        %5949 = vst.msk [vmem:[%s427] sm:$0xff] %vm5935, %v5948
        %p5950 = scmp.lt.s32.totalorder %s25, 7
        %s5951 = scalar_select %p5950, %s25, 7
        %s5952 = smul.addr %s5951, 8
        %s5953 = scalar_lea.vmem %s7, %s5952
        // Predicated region
        $region65: #{tpu_custom_call.1} parent=47 // pred_check
          %p5954 = pneg %p215
        $region66: #{tpu_custom_call.1} parent=47 // pred_check_branch
          %5956 = sbr.rel (%p5954) target = $region68
        $region67: #{tpu_custom_call.1} parent=47 // pred_region
          _
        $region68: #{tpu_custom_call.1} parent=47 // pred_fallthru
          _
      $region48: #{tpu_custom_call.1} parent=5 // pred_fallthru
        _
      %p5957 = scmp.le.s32.totalorder 2, %s20
      // Predicated region
      $region69: #{tpu_custom_call.1} parent=5 // pred_check
        %p5958 = pneg %p5957
      $region70: #{tpu_custom_call.1} parent=5 // pred_check_branch
        %5960 = sbr.rel (%p5958) target = $region72
      $region71: #{tpu_custom_call.1} parent=5 // pred_region
        %s5961 = ssub.s32 %s20, 2
        // Predicated region
        $region73: #{tpu_custom_call.1} parent=71 // pred_check
          %p5962 = pneg %p221
        $region74: #{tpu_custom_call.1} parent=71 // pred_check_branch
          %5964 = sbr.rel (%p5962) target = $region76
        $region75: #{tpu_custom_call.1} parent=71 // pred_region
          %p5965 = scmp.lt.s32.totalorder %s26, 7
          %s5966 = scalar_select %p5965, %s26, 7
          %s5967 = smul.addr %s5966, 8
          %s5968 = scalar_lea.vmem %s7, %s5967
        $region76: #{tpu_custom_call.1} parent=71 // pred_fallthru
          _
      $region72: #{tpu_custom_call.1} parent=5 // pred_fallthru
        _
    $region6: #{tpu_custom_call.1} parent=1 // loop_footer
      %s24 = sadd.s32 1, %s20
    $region7: #{tpu_custom_call.1} parent=1 // loop_footer_branch
      %19 = sbr.rel target = $region3
    $region8: #{tpu_custom_call.1} parent=1 // loop_exit
      _
    %5969 = vsyncpa [#allocation3], 1
    %s5970 = scalar_lea.sflag [#allocation3], 1
    %5971 = vsyncpa %s5970, 1
    %5972 = vsyncpa [#allocation6], 1
    %s5973 = scalar_lea.sflag [#allocation6], 1
    %5974 = vsyncpa %s5973, 1
    %5975 = vsyncpa [#allocation4], 1
    %s5976 = scalar_lea.sflag [#allocation4], 1
    %5977 = vsyncpa %s5976, 1

</llo_original>
